<compile_context>
chip_gen: v7x
topology: tpu7x:2x2x1
jax: 0.10.0
libtpu: 0.0.40
codegen_flags: <defaults>
</compile_context>

<pallas_src>
import jax
import jax.numpy as jnp
from jax.experimental import pallas as pl
from jax.experimental.pallas import tpu as pltpu

# Small synthetic BERT configuration (deterministic, no checkpoint load).
B, S, H = 2, 8, 32        # batch, sequence length, hidden size (emb_dim)
NH, DH = 4, 8             # attention heads, head dim
FF = 64                   # FFN intermediate size
L = 2                     # number of encoder layers
VOCAB = 30                # vocabulary size
LN_EPS = 1e-12            # BERT layer-norm eps


def _layernorm(x, g, b):
    mu = jnp.mean(x, axis=-1, keepdims=True)
    var = jnp.mean(jnp.square(x - mu), axis=-1, keepdims=True)
    return (x - mu) * jax.lax.rsqrt(var + LN_EPS) * g + b


def _gelu(x):
    # TODO(synk): HF BERT "gelu" is the exact erf form; the tanh approximation
    # is used so the transcendental goes to the EUP and lowers cleanly.
    return jax.nn.gelu(x, approximate=True)


def bert_encoder_kernel(emb_ref, mask_ref, embln_ref,
                        wqkv_ref, bqkv_ref, wo_ref, vec_ref,
                        w1_ref, b1_ref, w2_ref, out_ref):
    """All L encoder layers, statically unrolled, in one kernel invocation."""
    # BERT embedding LayerNorm on the summed (word+pos+type) embeddings.
    eln = embln_ref[...]                                   # (2, H): [gamma; beta]
    h = _layernorm(emb_ref[...], eln[0:1, :], eln[1:2, :])  # (B*S, H) f32 carry

    # Hoisted once for all layers: additive mask at head-batched score shape.
    mask_b = jnp.broadcast_to(mask_ref[...][:, None, None, :],
                              (B, NH, S, S)).reshape(B * NH, S, S)

    cls_attn = None
    for l in range(L):                                     # static unroll (L=2)
        vec = vec_ref[l]                                   # (6, H): bo,ln1g,ln1b,b2,ln2g,ln2b

        # --- fused QKV projection (1/sqrt(DH) pre-folded into Q columns) ---
        qkv = jnp.dot(h.astype(jnp.bfloat16), wqkv_ref[l],
                      preferred_element_type=jnp.float32) + bqkv_ref[l]  # (B*S, 3H)

        # Head-batched attention: fold (B, NH) into one leading batch axis and
        # use a single 3-D einsum pair (no per-head slices / lane concat).
        q = qkv[:, 0 * H:1 * H].reshape(B, S, NH, DH)
        k = qkv[:, 1 * H:2 * H].reshape(B, S, NH, DH)
        v = qkv[:, 2 * H:3 * H].reshape(B, S, NH, DH)
        q = jnp.swapaxes(q, 1, 2).reshape(B * NH, S, DH).astype(jnp.bfloat16)
        k = jnp.swapaxes(k, 1, 2).reshape(B * NH, S, DH).astype(jnp.bfloat16)
        v = jnp.swapaxes(v, 1, 2).reshape(B * NH, S, DH).astype(jnp.bfloat16)

        s = jnp.einsum('bqd,bkd->bqk', q, k,
                       preferred_element_type=jnp.float32) + mask_b  # (B*NH,S,S)
        s = s - jnp.max(s, axis=-1, keepdims=True)
        e = jnp.exp(s)
        p = e * pl.reciprocal(jnp.sum(e, axis=-1, keepdims=True), approx=True)

        ctx = jnp.einsum('bqk,bkd->bqd', p.astype(jnp.bfloat16), v,
                         preferred_element_type=jnp.float32)         # (B*NH,S,DH)
        ctx = jnp.swapaxes(ctx.reshape(B, NH, S, DH), 1, 2).reshape(B * S, H)

        # --- single output projection over concatenated heads + residual LN ---
        attn_out = jnp.dot(ctx.astype(jnp.bfloat16), wo_ref[l],
                           preferred_element_type=jnp.float32) + vec[0:1, :]
        h = _layernorm(h + attn_out, vec[1:2, :], vec[2:3, :])

        # --- feed forward ---
        f = jnp.dot(h.astype(jnp.bfloat16), w1_ref[l],
                    preferred_element_type=jnp.float32) + b1_ref[l]
        f = _gelu(f)
        f = jnp.dot(f.astype(jnp.bfloat16), w2_ref[l],
                    preferred_element_type=jnp.float32) + vec[3:4, :]
        h = _layernorm(h + f, vec[4:5, :], vec[5:6, :])

        if l == L - 1:
            # attentions[-1][:, :, 0, :].mean(1); computed only on the last
            # layer so no per-layer p tensor outlives its layer.
            cls_attn = jnp.mean(p.reshape(B, NH, S, S)[:, :, 0, :], axis=1)  # (B,S)

    # Epilogue: one packed output slab [CLS hidden | CLS attention row].
    cls = h.reshape(B, S, H)[:, 0, :]                      # (B, H), single slice
    out_ref[:, :H] = cls
    out_ref[:, H:] = cls_attn


@jax.jit
def bert_encoder_forward(params, input_ids, attention_mask, token_type_ids):
    # Embedding lookups (glue; the gathers stay in plain JAX).
    emb = (params['word_emb'][input_ids]
           + params['pos_emb'][None, :S, :]
           + params['type_emb'][token_type_ids]).astype(jnp.float32)
    emb2 = emb.reshape(B * S, H)
    mask_add = (1.0 - attention_mask.astype(jnp.float32)) * -10000.0

    # One-time parameter packing: fused QKV (1/sqrt(DH) folded into Q), the six
    # (1, H) per-layer vectors stacked into one (L, 6, H) slab, bf16 matmul
    # weights (accumulation stays f32 inside the kernel).
    scale = 1.0 / (DH ** 0.5)
    wqkv = jnp.concatenate(
        [params['wq'] * scale, params['wk'], params['wv']], axis=-1)   # (L,H,3H)
    bqkv = jnp.concatenate(
        [params['bq'] * scale, params['bk'], params['bv']], axis=-1)   # (L,1,3H)
    vec = jnp.concatenate(
        [params['bo'], params['ln1_g'], params['ln1_b'],
         params['b2'], params['ln2_g'], params['ln2_b']], axis=1)      # (L,6,H)
    embln = jnp.concatenate([params['emb_ln_g'], params['emb_ln_b']], axis=0)

    vmem = lambda: pl.BlockSpec(memory_space=pltpu.MemorySpace.VMEM)

    packed = pl.pallas_call(
        bert_encoder_kernel,
        out_shape=jax.ShapeDtypeStruct((B, H + S), jnp.float32),
        in_specs=[vmem() for _ in range(10)],   # whole arrays resident in VMEM
        out_specs=vmem(),
    )(emb2, mask_add, embln,
      wqkv.astype(jnp.bfloat16), bqkv,
      params['wo'].astype(jnp.bfloat16), vec,
      params['w1'].astype(jnp.bfloat16), params['b1'],
      params['w2'].astype(jnp.bfloat16))

    # packed[:, H:] == outputs.attentions[-1][:, :, 0, :].mean(1); it only
    # feeds aggregate_tokens(), which never alters the CLS token, so it does
    # not influence report_feat and (like forward()) is not returned.
    # TODO(synk): aggregate_tokens() is tokenizer/string dependent (wordpiece
    # merging over vocab strings) and has no Pallas equivalent.
    report_feat = packed[:, :H]                 # == all_feat[:, 0]  (B, H)
    return report_feat


def init_params(key):
    keys = jax.random.split(key, 9)

    def n(k, shape):
        return 0.02 * jax.random.normal(k, shape, jnp.float32)

    return dict(
        word_emb=n(keys[0], (VOCAB, H)),
        pos_emb=n(keys[1], (S, H)),
        type_emb=n(keys[2], (2, H)),
        emb_ln_g=jnp.ones((1, H), jnp.float32),
        emb_ln_b=jnp.zeros((1, H), jnp.float32),
        wq=n(keys[3], (L, H, H)), bq=jnp.zeros((L, 1, H), jnp.float32),
        wk=n(keys[4], (L, H, H)), bk=jnp.zeros((L, 1, H), jnp.float32),
        wv=n(keys[5], (L, H, H)), bv=jnp.zeros((L, 1, H), jnp.float32),
        wo=n(keys[6], (L, H, H)), bo=jnp.zeros((L, 1, H), jnp.float32),
        ln1_g=jnp.ones((L, 1, H), jnp.float32),
        ln1_b=jnp.zeros((L, 1, H), jnp.float32),
        w1=n(keys[7], (L, H, FF)), b1=jnp.zeros((L, 1, FF), jnp.float32),
        w2=n(keys[8], (L, FF, H)), b2=jnp.zeros((L, 1, H), jnp.float32),
        ln2_g=jnp.ones((L, 1, H), jnp.float32),
        ln2_b=jnp.zeros((L, 1, H), jnp.float32),
    )


if __name__ == "__main__":
    key = jax.random.PRNGKey(0)
    params = init_params(key)
    kid = jax.random.split(key, 2)
    input_ids = jax.random.randint(kid[0], (B, S), 5, VOCAB, dtype=jnp.int32)
    input_ids = input_ids.at[:, 0].set(2).at[:, -1].set(3)   # [CLS] ... [SEP]
    attention_mask = jnp.ones((B, S), jnp.int32)
    token_type_ids = jnp.zeros((B, S), jnp.int32)

    report_feat = bert_encoder_forward(params, input_ids, attention_mask,
                                       token_type_ids)
    report_feat = jax.block_until_ready(report_feat)
    assert report_feat.shape == (B, H)
    assert bool(jnp.all(jnp.isfinite(report_feat)))
    print("KERNEL_OK")
</pallas_src>

<mosaic_0001>
module attributes {stable_mosaic.version = 11 : i64} {
  func.func @bert_encoder_kernel(%arg0: memref<16x32xf32, #tpu.memory_space<vmem>>, %arg1: memref<2x8xf32, #tpu.memory_space<vmem>>, %arg2: memref<2x32xf32, #tpu.memory_space<vmem>>, %arg3: memref<2x32x96xbf16, #tpu.memory_space<vmem>>, %arg4: memref<2x1x96xf32, #tpu.memory_space<vmem>>, %arg5: memref<2x32x32xbf16, #tpu.memory_space<vmem>>, %arg6: memref<2x6x32xf32, #tpu.memory_space<vmem>>, %arg7: memref<2x32x64xbf16, #tpu.memory_space<vmem>>, %arg8: memref<2x1x64xf32, #tpu.memory_space<vmem>>, %arg9: memref<2x64x32xbf16, #tpu.memory_space<vmem>>, %arg10: memref<2x40xf32, #tpu.memory_space<vmem>>) attributes {dimension_semantics = [], scalar_prefetch = 0 : i64, scratch_operands = 0 : i64, tpu.core_type = #tpu.core_type<tc>} {
    %c0 = arith.constant 0 : index
    %c0_0 = arith.constant 0 : index
    %0 = vector.load %arg2[%c0, %c0_0] : memref<2x32xf32, #tpu.memory_space<vmem>>, vector<2x32xf32>
    %c0_1 = arith.constant 0 : index
    %c0_2 = arith.constant 0 : index
    %1 = vector.load %arg0[%c0_1, %c0_2] : memref<16x32xf32, #tpu.memory_space<vmem>>, vector<16x32xf32>
    %2 = vector.extract_strided_slice %0 {offsets = [0, 0], sizes = [1, 32], strides = [1, 1]} : vector<2x32xf32> to vector<1x32xf32>
    %3 = vector.extract_strided_slice %0 {offsets = [1, 0], sizes = [1, 32], strides = [1, 1]} : vector<2x32xf32> to vector<1x32xf32>
    %cst = arith.constant dense<0.000000e+00> : vector<16xf32>
    %4 = vector.multi_reduction <add>, %1, %cst [1] : vector<16x32xf32> to vector<16xf32>
    %5 = vector.shape_cast %4 : vector<16xf32> to vector<16x1xf32>
    %cst_3 = arith.constant 3.200000e+01 : f32
    %6 = vector.broadcast %cst_3 : f32 to vector<16x1xf32>
    %7 = arith.divf %5, %6 : vector<16x1xf32>
    %8 = vector.broadcast %7 : vector<16x1xf32> to vector<16x32xf32>
    %9 = arith.subf %1, %8 : vector<16x32xf32>
    %10 = arith.mulf %9, %9 : vector<16x32xf32>
    %cst_4 = arith.constant dense<0.000000e+00> : vector<16xf32>
    %11 = vector.multi_reduction <add>, %10, %cst_4 [1] : vector<16x32xf32> to vector<16xf32>
    %12 = vector.shape_cast %11 : vector<16xf32> to vector<16x1xf32>
    %cst_5 = arith.constant 3.200000e+01 : f32
    %13 = vector.broadcast %cst_5 : f32 to vector<16x1xf32>
    %14 = arith.divf %12, %13 : vector<16x1xf32>
    %15 = vector.broadcast %7 : vector<16x1xf32> to vector<16x32xf32>
    %16 = arith.subf %1, %15 : vector<16x32xf32>
    %cst_6 = arith.constant 9.99999996E-13 : f32
    %17 = vector.broadcast %cst_6 : f32 to vector<16x1xf32>
    %18 = arith.addf %14, %17 : vector<16x1xf32>
    %19 = math.rsqrt %18 : vector<16x1xf32>
    %20 = vector.broadcast %19 : vector<16x1xf32> to vector<16x32xf32>
    %21 = arith.mulf %16, %20 : vector<16x32xf32>
    %22 = vector.broadcast %2 : vector<1x32xf32> to vector<16x32xf32>
    %23 = arith.mulf %21, %22 : vector<16x32xf32>
    %24 = vector.broadcast %3 : vector<1x32xf32> to vector<16x32xf32>
    %25 = arith.addf %23, %24 : vector<16x32xf32>
    %c0_7 = arith.constant 0 : index
    %c0_8 = arith.constant 0 : index
    %26 = vector.load %arg1[%c0_7, %c0_8] : memref<2x8xf32, #tpu.memory_space<vmem>>, vector<2x8xf32>
    %27 = vector.shape_cast %26 : vector<2x8xf32> to vector<2x1x1x8xf32>
    %28 = vector.shape_cast %27 : vector<2x1x1x8xf32> to vector<2x1x1x8xf32>
    %29 = vector.broadcast %28 : vector<2x1x1x8xf32> to vector<2x4x8x8xf32>
    %30 = vector.shape_cast %29 : vector<2x4x8x8xf32> to vector<8x8x8xf32>
    %c0_9 = arith.constant 0 : index
    %c0_10 = arith.constant 0 : index
    %c0_11 = arith.constant 0 : index
    %31 = vector.load %arg6[%c0_9, %c0_10, %c0_11] : memref<2x6x32xf32, #tpu.memory_space<vmem>>, vector<1x6x32xf32>
    %32 = vector.shape_cast %31 : vector<1x6x32xf32> to vector<6x32xf32>
    %33 = arith.truncf %25 : vector<16x32xf32> to vector<16x32xbf16>
    %c0_12 = arith.constant 0 : index
    %c0_13 = arith.constant 0 : index
    %c0_14 = arith.constant 0 : index
    %34 = vector.load %arg3[%c0_12, %c0_13, %c0_14] : memref<2x32x96xbf16, #tpu.memory_space<vmem>>, vector<1x32x96xbf16>
    %35 = vector.shape_cast %34 : vector<1x32x96xbf16> to vector<32x96xbf16>
    %cst_15 = arith.constant dense<0.000000e+00> : vector<16x96xf32>
    %36 = tpu.matmul %33, %35, %cst_15 {dimension_numbers = #tpu.dot_dimension_numbers<[1], [0], [0], [1], [0, 0, 1, 1], [], []>} : vector<16x32xbf16>, vector<32x96xbf16>, vector<16x96xf32> -> vector<16x96xf32>
    %c0_16 = arith.constant 0 : index
    %c0_17 = arith.constant 0 : index
    %c0_18 = arith.constant 0 : index
    %37 = vector.load %arg4[%c0_16, %c0_17, %c0_18] : memref<2x1x96xf32, #tpu.memory_space<vmem>>, vector<1x1x96xf32>
    %38 = vector.shape_cast %37 : vector<1x1x96xf32> to vector<1x96xf32>
    %39 = vector.broadcast %38 : vector<1x96xf32> to vector<16x96xf32>
    %40 = arith.addf %36, %39 : vector<16x96xf32>
    %41 = vector.extract_strided_slice %40 {offsets = [0, 0], sizes = [16, 32], strides = [1, 1]} : vector<16x96xf32> to vector<16x32xf32>
    %42 = vector.shape_cast %41 : vector<16x32xf32> to vector<2x8x4x8xf32>
    %43 = vector.extract_strided_slice %40 {offsets = [0, 32], sizes = [16, 32], strides = [1, 1]} : vector<16x96xf32> to vector<16x32xf32>
    %44 = vector.shape_cast %43 : vector<16x32xf32> to vector<2x8x4x8xf32>
    %45 = vector.extract_strided_slice %40 {offsets = [0, 64], sizes = [16, 32], strides = [1, 1]} : vector<16x96xf32> to vector<16x32xf32>
    %46 = vector.shape_cast %45 : vector<16x32xf32> to vector<2x8x4x8xf32>
    %47 = tpu.transpose %42, [0, 2, 1, 3] : vector<2x8x4x8xf32> -> vector<2x4x8x8xf32>
    %48 = vector.shape_cast %47 : vector<2x4x8x8xf32> to vector<8x8x8xf32>
    %49 = arith.truncf %48 : vector<8x8x8xf32> to vector<8x8x8xbf16>
    %50 = tpu.transpose %44, [0, 2, 1, 3] : vector<2x8x4x8xf32> -> vector<2x4x8x8xf32>
    %51 = vector.shape_cast %50 : vector<2x4x8x8xf32> to vector<8x8x8xf32>
    %52 = arith.truncf %51 : vector<8x8x8xf32> to vector<8x8x8xbf16>
    %53 = tpu.transpose %46, [0, 2, 1, 3] : vector<2x8x4x8xf32> -> vector<2x4x8x8xf32>
    %54 = vector.shape_cast %53 : vector<2x4x8x8xf32> to vector<8x8x8xf32>
    %55 = arith.truncf %54 : vector<8x8x8xf32> to vector<8x8x8xbf16>
    "tpu.trace_start"() <{level = 10 : i32, message = "bqd,bkd->bqk"}> : () -> ()
    %cst_19 = arith.constant dense<0.000000e+00> : vector<8x8x8xf32>
    %56 = tpu.matmul %49, %52, %cst_19 {dimension_numbers = #tpu.dot_dimension_numbers<[2], [2], [1], [1], [0, 0, 0, 1, 1, 1], [0], [0]>} : vector<8x8x8xbf16>, vector<8x8x8xbf16>, vector<8x8x8xf32> -> vector<8x8x8xf32>
    "tpu.trace_stop"() : () -> ()
    %57 = arith.addf %56, %30 : vector<8x8x8xf32>
    %cst_20 = arith.constant dense<0xFF800000> : vector<8x8xf32>
    %58 = vector.multi_reduction <maximumf>, %57, %cst_20 [2] : vector<8x8x8xf32> to vector<8x8xf32>
    %59 = vector.shape_cast %58 : vector<8x8xf32> to vector<8x8x1xf32>
    %60 = vector.broadcast %59 : vector<8x8x1xf32> to vector<8x8x8xf32>
    %61 = arith.subf %57, %60 : vector<8x8x8xf32>
    %62 = math.exp %61 : vector<8x8x8xf32>
    %cst_21 = arith.constant dense<0.000000e+00> : vector<8x8xf32>
    %63 = vector.multi_reduction <add>, %62, %cst_21 [2] : vector<8x8x8xf32> to vector<8x8xf32>
    %64 = vector.shape_cast %63 : vector<8x8xf32> to vector<8x8x1xf32>
    %65 = tpu.reciprocal %64 {approx = true} : vector<8x8x1xf32> -> vector<8x8x1xf32>
    %66 = vector.broadcast %65 : vector<8x8x1xf32> to vector<8x8x8xf32>
    %67 = arith.mulf %62, %66 : vector<8x8x8xf32>
    %68 = arith.truncf %67 : vector<8x8x8xf32> to vector<8x8x8xbf16>
    "tpu.trace_start"() <{level = 10 : i32, message = "bqk,bkd->bqd"}> : () -> ()
    %cst_22 = arith.constant dense<0.000000e+00> : vector<8x8x8xf32>
    %69 = tpu.matmul %68, %55, %cst_22 {dimension_numbers = #tpu.dot_dimension_numbers<[2], [1], [1], [2], [0, 0, 0, 1, 1, 2], [0], [0]>} : vector<8x8x8xbf16>, vector<8x8x8xbf16>, vector<8x8x8xf32> -> vector<8x8x8xf32>
    "tpu.trace_stop"() : () -> ()
    %70 = vector.shape_cast %69 : vector<8x8x8xf32> to vector<2x4x8x8xf32>
    %71 = tpu.transpose %70, [0, 2, 1, 3] : vector<2x4x8x8xf32> -> vector<2x8x4x8xf32>
    %72 = vector.shape_cast %71 : vector<2x8x4x8xf32> to vector<16x32xf32>
    %73 = arith.truncf %72 : vector<16x32xf32> to vector<16x32xbf16>
    %c0_23 = arith.constant 0 : index
    %c0_24 = arith.constant 0 : index
    %c0_25 = arith.constant 0 : index
    %74 = vector.load %arg5[%c0_23, %c0_24, %c0_25] : memref<2x32x32xbf16, #tpu.memory_space<vmem>>, vector<1x32x32xbf16>
    %75 = vector.shape_cast %74 : vector<1x32x32xbf16> to vector<32x32xbf16>
    %cst_26 = arith.constant dense<0.000000e+00> : vector<16x32xf32>
    %76 = tpu.matmul %73, %75, %cst_26 {dimension_numbers = #tpu.dot_dimension_numbers<[1], [0], [0], [1], [0, 0, 1, 1], [], []>} : vector<16x32xbf16>, vector<32x32xbf16>, vector<16x32xf32> -> vector<16x32xf32>
    %77 = vector.extract_strided_slice %32 {offsets = [0, 0], sizes = [1, 32], strides = [1, 1]} : vector<6x32xf32> to vector<1x32xf32>
    %78 = vector.broadcast %77 : vector<1x32xf32> to vector<16x32xf32>
    %79 = arith.addf %76, %78 : vector<16x32xf32>
    %80 = arith.addf %25, %79 : vector<16x32xf32>
    %81 = vector.extract_strided_slice %32 {offsets = [1, 0], sizes = [1, 32], strides = [1, 1]} : vector<6x32xf32> to vector<1x32xf32>
    %82 = vector.extract_strided_slice %32 {offsets = [2, 0], sizes = [1, 32], strides = [1, 1]} : vector<6x32xf32> to vector<1x32xf32>
    %cst_27 = arith.constant dense<0.000000e+00> : vector<16xf32>
    %83 = vector.multi_reduction <add>, %80, %cst_27 [1] : vector<16x32xf32> to vector<16xf32>
    %84 = vector.shape_cast %83 : vector<16xf32> to vector<16x1xf32>
    %cst_28 = arith.constant 3.200000e+01 : f32
    %85 = vector.broadcast %cst_28 : f32 to vector<16x1xf32>
    %86 = arith.divf %84, %85 : vector<16x1xf32>
    %87 = vector.broadcast %86 : vector<16x1xf32> to vector<16x32xf32>
    %88 = arith.subf %80, %87 : vector<16x32xf32>
    %89 = arith.mulf %88, %88 : vector<16x32xf32>
    %cst_29 = arith.constant dense<0.000000e+00> : vector<16xf32>
    %90 = vector.multi_reduction <add>, %89, %cst_29 [1] : vector<16x32xf32> to vector<16xf32>
    %91 = vector.shape_cast %90 : vector<16xf32> to vector<16x1xf32>
    %cst_30 = arith.constant 3.200000e+01 : f32
    %92 = vector.broadcast %cst_30 : f32 to vector<16x1xf32>
    %93 = arith.divf %91, %92 : vector<16x1xf32>
    %94 = vector.broadcast %86 : vector<16x1xf32> to vector<16x32xf32>
    %95 = arith.subf %80, %94 : vector<16x32xf32>
    %cst_31 = arith.constant 9.99999996E-13 : f32
    %96 = vector.broadcast %cst_31 : f32 to vector<16x1xf32>
    %97 = arith.addf %93, %96 : vector<16x1xf32>
    %98 = math.rsqrt %97 : vector<16x1xf32>
    %99 = vector.broadcast %98 : vector<16x1xf32> to vector<16x32xf32>
    %100 = arith.mulf %95, %99 : vector<16x32xf32>
    %101 = vector.broadcast %81 : vector<1x32xf32> to vector<16x32xf32>
    %102 = arith.mulf %100, %101 : vector<16x32xf32>
    %103 = vector.broadcast %82 : vector<1x32xf32> to vector<16x32xf32>
    %104 = arith.addf %102, %103 : vector<16x32xf32>
    %105 = arith.truncf %104 : vector<16x32xf32> to vector<16x32xbf16>
    %c0_32 = arith.constant 0 : index
    %c0_33 = arith.constant 0 : index
    %c0_34 = arith.constant 0 : index
    %106 = vector.load %arg7[%c0_32, %c0_33, %c0_34] : memref<2x32x64xbf16, #tpu.memory_space<vmem>>, vector<1x32x64xbf16>
    %107 = vector.shape_cast %106 : vector<1x32x64xbf16> to vector<32x64xbf16>
    %cst_35 = arith.constant dense<0.000000e+00> : vector<16x64xf32>
    %108 = tpu.matmul %105, %107, %cst_35 {dimension_numbers = #tpu.dot_dimension_numbers<[1], [0], [0], [1], [0, 0, 1, 1], [], []>} : vector<16x32xbf16>, vector<32x64xbf16>, vector<16x64xf32> -> vector<16x64xf32>
    %c0_36 = arith.constant 0 : index
    %c0_37 = arith.constant 0 : index
    %c0_38 = arith.constant 0 : index
    %109 = vector.load %arg8[%c0_36, %c0_37, %c0_38] : memref<2x1x64xf32, #tpu.memory_space<vmem>>, vector<1x1x64xf32>
    %110 = vector.shape_cast %109 : vector<1x1x64xf32> to vector<1x64xf32>
    %111 = vector.broadcast %110 : vector<1x64xf32> to vector<16x64xf32>
    %112 = arith.addf %108, %111 : vector<16x64xf32>
    %113 = arith.mulf %112, %112 : vector<16x64xf32>
    %114 = arith.mulf %112, %113 : vector<16x64xf32>
    %cst_39 = arith.constant 4.471500e-02 : f32
    %115 = vector.broadcast %cst_39 : f32 to vector<16x64xf32>
    %116 = arith.mulf %115, %114 : vector<16x64xf32>
    %117 = arith.addf %112, %116 : vector<16x64xf32>
    %cst_40 = arith.constant 0.797884583 : f32
    %118 = vector.broadcast %cst_40 : f32 to vector<16x64xf32>
    %119 = arith.mulf %118, %117 : vector<16x64xf32>
    %120 = math.tanh %119 : vector<16x64xf32>
    %cst_41 = arith.constant 1.000000e+00 : f32
    %121 = vector.broadcast %cst_41 : f32 to vector<16x64xf32>
    %122 = arith.addf %121, %120 : vector<16x64xf32>
    %cst_42 = arith.constant 5.000000e-01 : f32
    %123 = vector.broadcast %cst_42 : f32 to vector<16x64xf32>
    %124 = arith.mulf %123, %122 : vector<16x64xf32>
    %125 = arith.mulf %112, %124 : vector<16x64xf32>
    %126 = arith.truncf %125 : vector<16x64xf32> to vector<16x64xbf16>
    %c0_43 = arith.constant 0 : index
    %c0_44 = arith.constant 0 : index
    %c0_45 = arith.constant 0 : index
    %127 = vector.load %arg9[%c0_43, %c0_44, %c0_45] : memref<2x64x32xbf16, #tpu.memory_space<vmem>>, vector<1x64x32xbf16>
    %128 = vector.shape_cast %127 : vector<1x64x32xbf16> to vector<64x32xbf16>
    %cst_46 = arith.constant dense<0.000000e+00> : vector<16x32xf32>
    %129 = tpu.matmul %126, %128, %cst_46 {dimension_numbers = #tpu.dot_dimension_numbers<[1], [0], [0], [1], [0, 0, 1, 1], [], []>} : vector<16x64xbf16>, vector<64x32xbf16>, vector<16x32xf32> -> vector<16x32xf32>
    %130 = vector.extract_strided_slice %32 {offsets = [3, 0], sizes = [1, 32], strides = [1, 1]} : vector<6x32xf32> to vector<1x32xf32>
    %131 = vector.broadcast %130 : vector<1x32xf32> to vector<16x32xf32>
    %132 = arith.addf %129, %131 : vector<16x32xf32>
    %133 = arith.addf %104, %132 : vector<16x32xf32>
    %134 = vector.extract_strided_slice %32 {offsets = [4, 0], sizes = [1, 32], strides = [1, 1]} : vector<6x32xf32> to vector<1x32xf32>
    %135 = vector.extract_strided_slice %32 {offsets = [5, 0], sizes = [1, 32], strides = [1, 1]} : vector<6x32xf32> to vector<1x32xf32>
    %cst_47 = arith.constant dense<0.000000e+00> : vector<16xf32>
    %136 = vector.multi_reduction <add>, %133, %cst_47 [1] : vector<16x32xf32> to vector<16xf32>
    %137 = vector.shape_cast %136 : vector<16xf32> to vector<16x1xf32>
    %cst_48 = arith.constant 3.200000e+01 : f32
    %138 = vector.broadcast %cst_48 : f32 to vector<16x1xf32>
    %139 = arith.divf %137, %138 : vector<16x1xf32>
    %140 = vector.broadcast %139 : vector<16x1xf32> to vector<16x32xf32>
    %141 = arith.subf %133, %140 : vector<16x32xf32>
    %142 = arith.mulf %141, %141 : vector<16x32xf32>
    %cst_49 = arith.constant dense<0.000000e+00> : vector<16xf32>
    %143 = vector.multi_reduction <add>, %142, %cst_49 [1] : vector<16x32xf32> to vector<16xf32>
    %144 = vector.shape_cast %143 : vector<16xf32> to vector<16x1xf32>
    %cst_50 = arith.constant 3.200000e+01 : f32
    %145 = vector.broadcast %cst_50 : f32 to vector<16x1xf32>
    %146 = arith.divf %144, %145 : vector<16x1xf32>
    %147 = vector.broadcast %139 : vector<16x1xf32> to vector<16x32xf32>
    %148 = arith.subf %133, %147 : vector<16x32xf32>
    %cst_51 = arith.constant 9.99999996E-13 : f32
    %149 = vector.broadcast %cst_51 : f32 to vector<16x1xf32>
    %150 = arith.addf %146, %149 : vector<16x1xf32>
    %151 = math.rsqrt %150 : vector<16x1xf32>
    %152 = vector.broadcast %151 : vector<16x1xf32> to vector<16x32xf32>
    %153 = arith.mulf %148, %152 : vector<16x32xf32>
    %154 = vector.broadcast %134 : vector<1x32xf32> to vector<16x32xf32>
    %155 = arith.mulf %153, %154 : vector<16x32xf32>
    %156 = vector.broadcast %135 : vector<1x32xf32> to vector<16x32xf32>
    %157 = arith.addf %155, %156 : vector<16x32xf32>
    %c1 = arith.constant 1 : index
    %c0_52 = arith.constant 0 : index
    %c0_53 = arith.constant 0 : index
    %158 = vector.load %arg6[%c1, %c0_52, %c0_53] : memref<2x6x32xf32, #tpu.memory_space<vmem>>, vector<1x6x32xf32>
    %159 = vector.shape_cast %158 : vector<1x6x32xf32> to vector<6x32xf32>
    %160 = arith.truncf %157 : vector<16x32xf32> to vector<16x32xbf16>
    %c1_54 = arith.constant 1 : index
    %c0_55 = arith.constant 0 : index
    %c0_56 = arith.constant 0 : index
    %161 = vector.load %arg3[%c1_54, %c0_55, %c0_56] : memref<2x32x96xbf16, #tpu.memory_space<vmem>>, vector<1x32x96xbf16>
    %162 = vector.shape_cast %161 : vector<1x32x96xbf16> to vector<32x96xbf16>
    %cst_57 = arith.constant dense<0.000000e+00> : vector<16x96xf32>
    %163 = tpu.matmul %160, %162, %cst_57 {dimension_numbers = #tpu.dot_dimension_numbers<[1], [0], [0], [1], [0, 0, 1, 1], [], []>} : vector<16x32xbf16>, vector<32x96xbf16>, vector<16x96xf32> -> vector<16x96xf32>
    %c1_58 = arith.constant 1 : index
    %c0_59 = arith.constant 0 : index
    %c0_60 = arith.constant 0 : index
    %164 = vector.load %arg4[%c1_58, %c0_59, %c0_60] : memref<2x1x96xf32, #tpu.memory_space<vmem>>, vector<1x1x96xf32>
    %165 = vector.shape_cast %164 : vector<1x1x96xf32> to vector<1x96xf32>
    %166 = vector.broadcast %165 : vector<1x96xf32> to vector<16x96xf32>
    %167 = arith.addf %163, %166 : vector<16x96xf32>
    %168 = vector.extract_strided_slice %167 {offsets = [0, 0], sizes = [16, 32], strides = [1, 1]} : vector<16x96xf32> to vector<16x32xf32>
    %169 = vector.shape_cast %168 : vector<16x32xf32> to vector<2x8x4x8xf32>
    %170 = vector.extract_strided_slice %167 {offsets = [0, 32], sizes = [16, 32], strides = [1, 1]} : vector<16x96xf32> to vector<16x32xf32>
    %171 = vector.shape_cast %170 : vector<16x32xf32> to vector<2x8x4x8xf32>
    %172 = vector.extract_strided_slice %167 {offsets = [0, 64], sizes = [16, 32], strides = [1, 1]} : vector<16x96xf32> to vector<16x32xf32>
    %173 = vector.shape_cast %172 : vector<16x32xf32> to vector<2x8x4x8xf32>
    %174 = tpu.transpose %169, [0, 2, 1, 3] : vector<2x8x4x8xf32> -> vector<2x4x8x8xf32>
    %175 = vector.shape_cast %174 : vector<2x4x8x8xf32> to vector<8x8x8xf32>
    %176 = arith.truncf %175 : vector<8x8x8xf32> to vector<8x8x8xbf16>
    %177 = tpu.transpose %171, [0, 2, 1, 3] : vector<2x8x4x8xf32> -> vector<2x4x8x8xf32>
    %178 = vector.shape_cast %177 : vector<2x4x8x8xf32> to vector<8x8x8xf32>
    %179 = arith.truncf %178 : vector<8x8x8xf32> to vector<8x8x8xbf16>
    %180 = tpu.transpose %173, [0, 2, 1, 3] : vector<2x8x4x8xf32> -> vector<2x4x8x8xf32>
    %181 = vector.shape_cast %180 : vector<2x4x8x8xf32> to vector<8x8x8xf32>
    %182 = arith.truncf %181 : vector<8x8x8xf32> to vector<8x8x8xbf16>
    "tpu.trace_start"() <{level = 10 : i32, message = "bqd,bkd->bqk"}> : () -> ()
    %cst_61 = arith.constant dense<0.000000e+00> : vector<8x8x8xf32>
    %183 = tpu.matmul %176, %179, %cst_61 {dimension_numbers = #tpu.dot_dimension_numbers<[2], [2], [1], [1], [0, 0, 0, 1, 1, 1], [0], [0]>} : vector<8x8x8xbf16>, vector<8x8x8xbf16>, vector<8x8x8xf32> -> vector<8x8x8xf32>
    "tpu.trace_stop"() : () -> ()
    %184 = arith.addf %183, %30 : vector<8x8x8xf32>
    %cst_62 = arith.constant dense<0xFF800000> : vector<8x8xf32>
    %185 = vector.multi_reduction <maximumf>, %184, %cst_62 [2] : vector<8x8x8xf32> to vector<8x8xf32>
    %186 = vector.shape_cast %185 : vector<8x8xf32> to vector<8x8x1xf32>
    %187 = vector.broadcast %186 : vector<8x8x1xf32> to vector<8x8x8xf32>
    %188 = arith.subf %184, %187 : vector<8x8x8xf32>
    %189 = math.exp %188 : vector<8x8x8xf32>
    %cst_63 = arith.constant dense<0.000000e+00> : vector<8x8xf32>
    %190 = vector.multi_reduction <add>, %189, %cst_63 [2] : vector<8x8x8xf32> to vector<8x8xf32>
    %191 = vector.shape_cast %190 : vector<8x8xf32> to vector<8x8x1xf32>
    %192 = tpu.reciprocal %191 {approx = true} : vector<8x8x1xf32> -> vector<8x8x1xf32>
    %193 = vector.broadcast %192 : vector<8x8x1xf32> to vector<8x8x8xf32>
    %194 = arith.mulf %189, %193 : vector<8x8x8xf32>
    %195 = arith.truncf %194 : vector<8x8x8xf32> to vector<8x8x8xbf16>
    "tpu.trace_start"() <{level = 10 : i32, message = "bqk,bkd->bqd"}> : () -> ()
    %cst_64 = arith.constant dense<0.000000e+00> : vector<8x8x8xf32>
    %196 = tpu.matmul %195, %182, %cst_64 {dimension_numbers = #tpu.dot_dimension_numbers<[2], [1], [1], [2], [0, 0, 0, 1, 1, 2], [0], [0]>} : vector<8x8x8xbf16>, vector<8x8x8xbf16>, vector<8x8x8xf32> -> vector<8x8x8xf32>
    "tpu.trace_stop"() : () -> ()
    %197 = vector.shape_cast %196 : vector<8x8x8xf32> to vector<2x4x8x8xf32>
    %198 = tpu.transpose %197, [0, 2, 1, 3] : vector<2x4x8x8xf32> -> vector<2x8x4x8xf32>
    %199 = vector.shape_cast %198 : vector<2x8x4x8xf32> to vector<16x32xf32>
    %200 = arith.truncf %199 : vector<16x32xf32> to vector<16x32xbf16>
    %c1_65 = arith.constant 1 : index
    %c0_66 = arith.constant 0 : index
    %c0_67 = arith.constant 0 : index
    %201 = vector.load %arg5[%c1_65, %c0_66, %c0_67] : memref<2x32x32xbf16, #tpu.memory_space<vmem>>, vector<1x32x32xbf16>
    %202 = vector.shape_cast %201 : vector<1x32x32xbf16> to vector<32x32xbf16>
    %cst_68 = arith.constant dense<0.000000e+00> : vector<16x32xf32>
    %203 = tpu.matmul %200, %202, %cst_68 {dimension_numbers = #tpu.dot_dimension_numbers<[1], [0], [0], [1], [0, 0, 1, 1], [], []>} : vector<16x32xbf16>, vector<32x32xbf16>, vector<16x32xf32> -> vector<16x32xf32>
    %204 = vector.extract_strided_slice %159 {offsets = [0, 0], sizes = [1, 32], strides = [1, 1]} : vector<6x32xf32> to vector<1x32xf32>
    %205 = vector.broadcast %204 : vector<1x32xf32> to vector<16x32xf32>
    %206 = arith.addf %203, %205 : vector<16x32xf32>
    %207 = arith.addf %157, %206 : vector<16x32xf32>
    %208 = vector.extract_strided_slice %159 {offsets = [1, 0], sizes = [1, 32], strides = [1, 1]} : vector<6x32xf32> to vector<1x32xf32>
    %209 = vector.extract_strided_slice %159 {offsets = [2, 0], sizes = [1, 32], strides = [1, 1]} : vector<6x32xf32> to vector<1x32xf32>
    %cst_69 = arith.constant dense<0.000000e+00> : vector<16xf32>
    %210 = vector.multi_reduction <add>, %207, %cst_69 [1] : vector<16x32xf32> to vector<16xf32>
    %211 = vector.shape_cast %210 : vector<16xf32> to vector<16x1xf32>
    %cst_70 = arith.constant 3.200000e+01 : f32
    %212 = vector.broadcast %cst_70 : f32 to vector<16x1xf32>
    %213 = arith.divf %211, %212 : vector<16x1xf32>
    %214 = vector.broadcast %213 : vector<16x1xf32> to vector<16x32xf32>
    %215 = arith.subf %207, %214 : vector<16x32xf32>
    %216 = arith.mulf %215, %215 : vector<16x32xf32>
    %cst_71 = arith.constant dense<0.000000e+00> : vector<16xf32>
    %217 = vector.multi_reduction <add>, %216, %cst_71 [1] : vector<16x32xf32> to vector<16xf32>
    %218 = vector.shape_cast %217 : vector<16xf32> to vector<16x1xf32>
    %cst_72 = arith.constant 3.200000e+01 : f32
    %219 = vector.broadcast %cst_72 : f32 to vector<16x1xf32>
    %220 = arith.divf %218, %219 : vector<16x1xf32>
    %221 = vector.broadcast %213 : vector<16x1xf32> to vector<16x32xf32>
    %222 = arith.subf %207, %221 : vector<16x32xf32>
    %cst_73 = arith.constant 9.99999996E-13 : f32
    %223 = vector.broadcast %cst_73 : f32 to vector<16x1xf32>
    %224 = arith.addf %220, %223 : vector<16x1xf32>
    %225 = math.rsqrt %224 : vector<16x1xf32>
    %226 = vector.broadcast %225 : vector<16x1xf32> to vector<16x32xf32>
    %227 = arith.mulf %222, %226 : vector<16x32xf32>
    %228 = vector.broadcast %208 : vector<1x32xf32> to vector<16x32xf32>
    %229 = arith.mulf %227, %228 : vector<16x32xf32>
    %230 = vector.broadcast %209 : vector<1x32xf32> to vector<16x32xf32>
    %231 = arith.addf %229, %230 : vector<16x32xf32>
    %232 = arith.truncf %231 : vector<16x32xf32> to vector<16x32xbf16>
    %c1_74 = arith.constant 1 : index
    %c0_75 = arith.constant 0 : index
    %c0_76 = arith.constant 0 : index
    %233 = vector.load %arg7[%c1_74, %c0_75, %c0_76] : memref<2x32x64xbf16, #tpu.memory_space<vmem>>, vector<1x32x64xbf16>
    %234 = vector.shape_cast %233 : vector<1x32x64xbf16> to vector<32x64xbf16>
    %cst_77 = arith.constant dense<0.000000e+00> : vector<16x64xf32>
    %235 = tpu.matmul %232, %234, %cst_77 {dimension_numbers = #tpu.dot_dimension_numbers<[1], [0], [0], [1], [0, 0, 1, 1], [], []>} : vector<16x32xbf16>, vector<32x64xbf16>, vector<16x64xf32> -> vector<16x64xf32>
    %c1_78 = arith.constant 1 : index
    %c0_79 = arith.constant 0 : index
    %c0_80 = arith.constant 0 : index
    %236 = vector.load %arg8[%c1_78, %c0_79, %c0_80] : memref<2x1x64xf32, #tpu.memory_space<vmem>>, vector<1x1x64xf32>
    %237 = vector.shape_cast %236 : vector<1x1x64xf32> to vector<1x64xf32>
    %238 = vector.broadcast %237 : vector<1x64xf32> to vector<16x64xf32>
    %239 = arith.addf %235, %238 : vector<16x64xf32>
    %240 = arith.mulf %239, %239 : vector<16x64xf32>
    %241 = arith.mulf %239, %240 : vector<16x64xf32>
    %cst_81 = arith.constant 4.471500e-02 : f32
    %242 = vector.broadcast %cst_81 : f32 to vector<16x64xf32>
    %243 = arith.mulf %242, %241 : vector<16x64xf32>
    %244 = arith.addf %239, %243 : vector<16x64xf32>
    %cst_82 = arith.constant 0.797884583 : f32
    %245 = vector.broadcast %cst_82 : f32 to vector<16x64xf32>
    %246 = arith.mulf %245, %244 : vector<16x64xf32>
    %247 = math.tanh %246 : vector<16x64xf32>
    %cst_83 = arith.constant 1.000000e+00 : f32
    %248 = vector.broadcast %cst_83 : f32 to vector<16x64xf32>
    %249 = arith.addf %248, %247 : vector<16x64xf32>
    %cst_84 = arith.constant 5.000000e-01 : f32
    %250 = vector.broadcast %cst_84 : f32 to vector<16x64xf32>
    %251 = arith.mulf %250, %249 : vector<16x64xf32>
    %252 = arith.mulf %239, %251 : vector<16x64xf32>
    %253 = arith.truncf %252 : vector<16x64xf32> to vector<16x64xbf16>
    %c1_85 = arith.constant 1 : index
    %c0_86 = arith.constant 0 : index
    %c0_87 = arith.constant 0 : index
    %254 = vector.load %arg9[%c1_85, %c0_86, %c0_87] : memref<2x64x32xbf16, #tpu.memory_space<vmem>>, vector<1x64x32xbf16>
    %255 = vector.shape_cast %254 : vector<1x64x32xbf16> to vector<64x32xbf16>
    %cst_88 = arith.constant dense<0.000000e+00> : vector<16x32xf32>
    %256 = tpu.matmul %253, %255, %cst_88 {dimension_numbers = #tpu.dot_dimension_numbers<[1], [0], [0], [1], [0, 0, 1, 1], [], []>} : vector<16x64xbf16>, vector<64x32xbf16>, vector<16x32xf32> -> vector<16x32xf32>
    %257 = vector.extract_strided_slice %159 {offsets = [3, 0], sizes = [1, 32], strides = [1, 1]} : vector<6x32xf32> to vector<1x32xf32>
    %258 = vector.broadcast %257 : vector<1x32xf32> to vector<16x32xf32>
    %259 = arith.addf %256, %258 : vector<16x32xf32>
    %260 = arith.addf %231, %259 : vector<16x32xf32>
    %261 = vector.extract_strided_slice %159 {offsets = [4, 0], sizes = [1, 32], strides = [1, 1]} : vector<6x32xf32> to vector<1x32xf32>
    %262 = vector.extract_strided_slice %159 {offsets = [5, 0], sizes = [1, 32], strides = [1, 1]} : vector<6x32xf32> to vector<1x32xf32>
    %cst_89 = arith.constant dense<0.000000e+00> : vector<16xf32>
    %263 = vector.multi_reduction <add>, %260, %cst_89 [1] : vector<16x32xf32> to vector<16xf32>
    %264 = vector.shape_cast %263 : vector<16xf32> to vector<16x1xf32>
    %cst_90 = arith.constant 3.200000e+01 : f32
    %265 = vector.broadcast %cst_90 : f32 to vector<16x1xf32>
    %266 = arith.divf %264, %265 : vector<16x1xf32>
    %267 = vector.broadcast %266 : vector<16x1xf32> to vector<16x32xf32>
    %268 = arith.subf %260, %267 : vector<16x32xf32>
    %269 = arith.mulf %268, %268 : vector<16x32xf32>
    %cst_91 = arith.constant dense<0.000000e+00> : vector<16xf32>
    %270 = vector.multi_reduction <add>, %269, %cst_91 [1] : vector<16x32xf32> to vector<16xf32>
    %271 = vector.shape_cast %270 : vector<16xf32> to vector<16x1xf32>
    %cst_92 = arith.constant 3.200000e+01 : f32
    %272 = vector.broadcast %cst_92 : f32 to vector<16x1xf32>
    %273 = arith.divf %271, %272 : vector<16x1xf32>
    %274 = vector.broadcast %266 : vector<16x1xf32> to vector<16x32xf32>
    %275 = arith.subf %260, %274 : vector<16x32xf32>
    %cst_93 = arith.constant 9.99999996E-13 : f32
    %276 = vector.broadcast %cst_93 : f32 to vector<16x1xf32>
    %277 = arith.addf %273, %276 : vector<16x1xf32>
    %278 = math.rsqrt %277 : vector<16x1xf32>
    %279 = vector.broadcast %278 : vector<16x1xf32> to vector<16x32xf32>
    %280 = arith.mulf %275, %279 : vector<16x32xf32>
    %281 = vector.broadcast %261 : vector<1x32xf32> to vector<16x32xf32>
    %282 = arith.mulf %280, %281 : vector<16x32xf32>
    %283 = vector.broadcast %262 : vector<1x32xf32> to vector<16x32xf32>
    %284 = arith.addf %282, %283 : vector<16x32xf32>
    %285 = vector.shape_cast %194 : vector<8x8x8xf32> to vector<2x4x8x8xf32>
    %286 = vector.extract_strided_slice %285 {offsets = [0, 0, 0, 0], sizes = [2, 4, 1, 8], strides = [1, 1, 1, 1]} : vector<2x4x8x8xf32> to vector<2x4x1x8xf32>
    %287 = vector.shape_cast %286 : vector<2x4x1x8xf32> to vector<2x4x8xf32>
    %cst_94 = arith.constant dense<0.000000e+00> : vector<2x8xf32>
    %288 = vector.multi_reduction <add>, %287, %cst_94 [1] : vector<2x4x8xf32> to vector<2x8xf32>
    %cst_95 = arith.constant 4.000000e+00 : f32
    %289 = vector.broadcast %cst_95 : f32 to vector<2x8xf32>
    %290 = arith.divf %288, %289 : vector<2x8xf32>
    %291 = vector.shape_cast %284 : vector<16x32xf32> to vector<2x8x32xf32>
    %292 = vector.extract_strided_slice %291 {offsets = [0, 0, 0], sizes = [2, 1, 32], strides = [1, 1, 1]} : vector<2x8x32xf32> to vector<2x1x32xf32>
    %293 = vector.shape_cast %292 : vector<2x1x32xf32> to vector<2x32xf32>
    %c0_96 = arith.constant 0 : index
    %c0_97 = arith.constant 0 : index
    %294 = vector.load %arg10[%c0_96, %c0_97] : memref<2x40xf32, #tpu.memory_space<vmem>>, vector<2x32xf32>
    tpu.vector_store %arg10[%c0_96, %c0_97], %293 {strides = array<i32>} : memref<2x40xf32, #tpu.memory_space<vmem>>, vector<2x32xf32>,
    %c0_98 = arith.constant 0 : index
    %c32 = arith.constant 32 : index
    %295 = vector.load %arg10[%c0_98, %c32] : memref<2x40xf32, #tpu.memory_space<vmem>>, vector<2x8xf32>
    tpu.vector_store %arg10[%c0_98, %c32], %290 {strides = array<i32>} : memref<2x40xf32, #tpu.memory_space<vmem>>, vector<2x8xf32>,
    return
  }
}

</mosaic_0001>

<llo_original>
// kernel: bert_encoder_forward.1
$region0: #{bert_encoder_forward.1}
  #allocation0 [shape = 'u32[]', space=smem, size = 0x4, offset = 0x4, fixed_abs, tag = 'smem constant byte address 0x4 - core index']
  #allocation1 [shape = 'u32[144,128]{1,0:T(1,128)}', space=vmem, size = 0x12000, scoped, tag = 'internal scratch']
  %s0 = inlined_call_operand.vmem [shape: f32[16,32], index: 0, kind: input, shape index: {}]
  %s1 = inlined_call_operand.vmem [shape: f32[2,8], index: 1, kind: input, shape index: {}]
  %s2 = inlined_call_operand.vmem [shape: f32[2,32], index: 2, kind: input, shape index: {}]
  %s3 = inlined_call_operand.vmem [shape: bf16[2,32,96], index: 3, kind: input, shape index: {}]
  %s4 = inlined_call_operand.vmem [shape: f32[2,1,96], index: 4, kind: input, shape index: {}]
  %s5 = inlined_call_operand.vmem [shape: bf16[2,32,32], index: 5, kind: input, shape index: {}]
  %s6 = inlined_call_operand.vmem [shape: f32[2,6,32], index: 6, kind: input, shape index: {}]
  %s7 = inlined_call_operand.vmem [shape: bf16[2,32,64], index: 7, kind: input, shape index: {}]
  %s8 = inlined_call_operand.vmem [shape: f32[2,1,64], index: 8, kind: input, shape index: {}]
  %s9 = inlined_call_operand.vmem [shape: bf16[2,64,32], index: 9, kind: input, shape index: {}]
  %s10 = inlined_call_operand.hbm [shape: f32[2,40], index: 10, kind: output, shape index: {}]
  %s11 = sld [smem:[#allocation0]]
  $region50: #{bert_encoder_forward.1} parent=0
    _
  %s13 = ssub.s32 1, %s11
  %s14 = scalar_select 0, %s13, %s11
  $region1: #{bert_encoder_forward.1} parent=0
    #allocation2 [shape = 'u8[1024]{0}', space=vmem, size = 0x400, scoped, tag = 'output window, operand 0, single buffered']
    #allocation3 [shape = 's32[1]{0}', space=sflag, size = 0x4, scoped, tag = 'scoped memory for bert_encoder_forward.1']
    %15 = vsyncpa [#allocation3], 0
    // Predicated region
    $region2: #{bert_encoder_forward.1} parent=1 // pred_check
      _
    $region3: #{bert_encoder_forward.1} parent=1 // pred_check_branch
      %17 = sbr.rel (0) target = $region5
    $region4: #{bert_encoder_forward.1} parent=1 // pred_region
      _
    $region5: #{bert_encoder_forward.1} parent=1 // pred_fallthru
      _
    // Predicated region
    $region6: #{bert_encoder_forward.1} parent=1 // pred_check
      _
    $region7: #{bert_encoder_forward.1} parent=1 // pred_check_branch
      %19 = sbr.rel (0) target = $region9
    $region8: #{bert_encoder_forward.1} parent=1 // pred_region
      _
    $region9: #{bert_encoder_forward.1} parent=1 // pred_fallthru
      _
    // Predicated region
    $region10: #{bert_encoder_forward.1} parent=1 // pred_check
      _
    $region11: #{bert_encoder_forward.1} parent=1 // pred_check_branch
      %21 = sbr.rel (0) target = $region13
    $region12: #{bert_encoder_forward.1} parent=1 // pred_region
      _
    $region13: #{bert_encoder_forward.1} parent=1 // pred_fallthru
      _
    // Predicated region
    $region14: #{bert_encoder_forward.1} parent=1 // pred_check
      _
    $region15: #{bert_encoder_forward.1} parent=1 // pred_check_branch
      %23 = sbr.rel (0) target = $region17
    $region16: #{bert_encoder_forward.1} parent=1 // pred_region
      _
    $region17: #{bert_encoder_forward.1} parent=1 // pred_fallthru
      _
    // Predicated region
    $region18: #{bert_encoder_forward.1} parent=1 // pred_check
      _
    $region19: #{bert_encoder_forward.1} parent=1 // pred_check_branch
      %25 = sbr.rel (0) target = $region21
    $region20: #{bert_encoder_forward.1} parent=1 // pred_region
      _
    $region21: #{bert_encoder_forward.1} parent=1 // pred_fallthru
      _
    // Predicated region
    $region22: #{bert_encoder_forward.1} parent=1 // pred_check
      _
    $region23: #{bert_encoder_forward.1} parent=1 // pred_check_branch
      %27 = sbr.rel (0) target = $region25
    $region24: #{bert_encoder_forward.1} parent=1 // pred_region
      _
    $region25: #{bert_encoder_forward.1} parent=1 // pred_fallthru
      _
    // Predicated region
    $region26: #{bert_encoder_forward.1} parent=1 // pred_check
      _
    $region27: #{bert_encoder_forward.1} parent=1 // pred_check_branch
      %29 = sbr.rel (0) target = $region29
    $region28: #{bert_encoder_forward.1} parent=1 // pred_region
      _
    $region29: #{bert_encoder_forward.1} parent=1 // pred_fallthru
      _
    // Predicated region
    $region30: #{bert_encoder_forward.1} parent=1 // pred_check
      _
    $region31: #{bert_encoder_forward.1} parent=1 // pred_check_branch
      %31 = sbr.rel (0) target = $region33
    $region32: #{bert_encoder_forward.1} parent=1 // pred_region
      _
    $region33: #{bert_encoder_forward.1} parent=1 // pred_fallthru
      _
    // Predicated region
    $region34: #{bert_encoder_forward.1} parent=1 // pred_check
      _
    $region35: #{bert_encoder_forward.1} parent=1 // pred_check_branch
      %33 = sbr.rel (0) target = $region37
    $region36: #{bert_encoder_forward.1} parent=1 // pred_region
      _
    $region37: #{bert_encoder_forward.1} parent=1 // pred_fallthru
      _
    // Predicated region
    $region38: #{bert_encoder_forward.1} parent=1 // pred_check
      _
    $region39: #{bert_encoder_forward.1} parent=1 // pred_check_branch
      %35 = sbr.rel (0) target = $region41
    $region40: #{bert_encoder_forward.1} parent=1 // pred_region
      _
    $region41: #{bert_encoder_forward.1} parent=1 // pred_fallthru
      _
    %v37 = vld [vmem:[%s2] sm:$0x3]
    %v38 = vld [vmem:[%s0] sm:$0xff]
    %v39 = vld [vmem:[%s0 + $0x8] sm:$0xff]
    %vm40 = vcmask 261120
    %v41 = vsel %vm40, %v38, 0.0
    %42 = vadd.xlane.f32.xlu0 %v41
    %v43 = vpop.xlane.xlu0 %42
    %v44 = vsel %vm40, %v39, 0.0
    %45 = vadd.xlane.f32.xlu0 %v44
    %v46 = vpop.xlane.xlu0 %45
    %v47 = vrcp.pop 32.0
    %v48 = vmul.f32 %v43, %v47
    %v49 = vmul.f32 %v46, %v47
    %v50 = vsub.f32 %v38, %v48
    %v51 = vsub.f32 %v39, %v49
    %v52 = vmul.f32 %v50, %v50
    %v53 = vmul.f32 %v51, %v51
    %v54 = vsel %vm40, %v52, 0.0
    %55 = vadd.xlane.f32.xlu0 %v54
    %v56 = vpop.xlane.xlu0 %55
    %v57 = vsel %vm40, %v53, 0.0
    %58 = vadd.xlane.f32.xlu0 %v57
    %v59 = vpop.xlane.xlu0 %58
    %v60 = vmul.f32 %v56, %v47
    %v61 = vmul.f32 %v59, %v47
    %v62 = vadd.f32 %v60, 1e-12
    %v63 = vadd.f32 %v61, 1e-12
    %v64 = vrsqrt.pop %v62
    %v65 = vrsqrt.pop %v63
    %v66 = vmul.f32 %v50, %v64
    %v67 = vmul.f32 %v51, %v65
    %v68 = vlaneseq
    %v69 = vshrl.u32 %v68, 7
    %v70 = vsub.s32 0, %v69
    %v71 = vrot.slane %v37, %v70
    %v72 = vmul.f32 %v66, %v71
    %v73 = vmul.f32 %v67, %v71
    %v74 = vlaneseq
    %v75 = vshrl.u32 %v74, 7
    %v76 = vsub.s32 1, %v75
    %v77 = vrot.slane %v37, %v76
    %v78 = vadd.f32 %v72, %v77
    %v79 = vadd.f32 %v73, %v77
    %v80 = vld [vmem:[%s1] sm:$0x3]
    %v83 = vunpack.c.l.s4 1966171168
    %v84 = vunpack.c.0.s8 %v83
    %v85 = vlaneseq
    %v86 = vshrl.u32 %v85, 7
    %v87 = vsub.s32 %v84, %v86
    %v88 = vrot.slane %v80, %v87
    %v89 = vcombine.high %v88, %v88
    %v91 = vunpack.c.l.s4 1966171168
    %v92 = vunpack.c.0.s8 %v91
    %v93 = vlaneseq
    %v94 = vshrl.u32 %v93, 7
    %v95 = vsub.s32 %v92, %v94
    %v96 = vrot.slane %v88, %v95
    %v98 = vunpack.c.l.s4 1966171168
    %v99 = vunpack.c.0.s8 %v98
    %v100 = vlaneseq
    %v101 = vshrl.u32 %v100, 7
    %v102 = vsub.s32 %v99, %v101
    %v103 = vrot.slane %v89, %v102
    %v104 = vlaneseq
    %v105 = vshrl.u32 %v104, 7
    %v106 = vsub.s32 0, %v105
    %v107 = vrot.slane %v96, %v106
    %v108 = vlaneseq
    %v109 = vshrl.u32 %v108, 7
    %v110 = vsub.s32 0, %v109
    %v111 = vrot.slane %v103, %v110
    %v114 = vld [vmem:[%s6] sm:$0x3f]
    %v115 = vpack.c.bf16 %v79, %v78
    %v116 = vld [vmem:[%s3] sm:$0xf]
    %v117 = vld [vmem:[%s3 + $0x4] sm:$0xf]
    %v118 = vld [vmem:[%s3 + $0x8] sm:$0xf]
    %v119 = vld [vmem:[%s3 + $0xc] sm:$0xf]
    %v120 = vld [vmem:[%s4] sm:$0x1]
    %v122 = vlaneseq
    %v123 = vshrl.u32 %v122, 7
    %v124 = vsub.s32 0, %v123
    %v125 = vrot.slane %v120, %v124
    %v131 = vunpack.c.l.b16 %v116
    %v132 = vunpack.c.l.b16 %v117
    %v133 = vunpack.c.l.b16 %v118
    %v134 = vunpack.c.l.b16 %v119
    %v135 = vpack.c.b16 %v132, %v131
    %v136 = vpack.c.b16 %v134, %v133
    %v140 = vsel %vm40, %v115, 0
    %142 = vmatprep.subr.bf16.mxu0 0
    %143 = vmatpush1.bf16.msra.mxu0 %v135
    %144 = vmatprep.subr.bf16.mxu0 0
    %145 = vmatpush1.bf16.msra.mxu0 %v136
    %146 = vmatprep.subr.bf16.mxu0 0
    %147 = vmatpush1.bf16.msra.mxu0 0
    %148 = vmatprep.subr.bf16.mxu0 0
    %149 = vmatpush1.bf16.msra.mxu0 0
    %150 = vmatprep.subr.bf16.mxu0 0
    %151 = vmatpush1.bf16.msra.mxu0 0
    %152 = vmatprep.subr.bf16.mxu0 0
    %153 = vmatpush1.bf16.msra.mxu0 0
    %154 = vmatprep.subr.bf16.mxu0 0
    %155 = vmatpush1.bf16.msra.mxu0 0
    %156 = vmatprep.subr.bf16.mxu0 0
    %157 = vmatpush1.bf16.msra.mxu0 0
    %158 = vmatprep.subr.bf16.mxu0 0
    %159 = vmatpush1.bf16.msra.mxu0 0
    %160 = vmatprep.subr.bf16.mxu0 0
    %161 = vmatpush1.bf16.msra.mxu0 0
    %162 = vmatprep.subr.bf16.mxu0 0
    %163 = vmatpush1.bf16.msra.mxu0 0
    %164 = vmatprep.subr.bf16.mxu0 0
    %165 = vmatpush1.bf16.msra.mxu0 0
    %166 = vmatprep.subr.bf16.mxu0 0
    %167 = vmatpush1.bf16.msra.mxu0 0
    %168 = vmatprep.subr.bf16.mxu0 0
    %169 = vmatpush1.bf16.msra.mxu0 0
    %170 = vmatprep.subr.bf16.mxu0 0
    %171 = vmatpush1.bf16.msra.mxu0 0
    %172 = vmatprep.subr.bf16.mxu0 0
    %173 = vmatpush1.bf16.msra.mxu0 0
    %174 = vmatprep.mubr.bf16.mxu0 0
    %175 = vmatmul.mubr.bf16.gmra.mrb[0].mxu0 %v140
    %v176 = vpop.f32.mrb[0].mxu0
    %v177 = vadd.f32 %v125, %v176
    %v178 = vpop.f32.mrb[0].mxu0
    %v179 = vpop.f32.mrb[0].mxu0
    %v180 = vadd.f32 %v125, %v179
    %v181 = vpop.f32.mrb[0].mxu0
    %182 = vdwg.mxu0
    %185 = vrot.lane.b32.xlu0 %v177, 120
    %v186 = vpop.permute.xlu0 %185
    %187 = vrot.lane.b32.xlu0 %v180, 120
    %v188 = vpop.permute.xlu0 %187
    %191 = vrot.lane.b32.xlu0 %v177, 112
    %v192 = vpop.permute.xlu0 %191
    %193 = vrot.lane.b32.xlu0 %v180, 112
    %v194 = vpop.permute.xlu0 %193
    %197 = vrot.lane.b32.xlu0 %v177, 104
    %v198 = vpop.permute.xlu0 %197
    %199 = vrot.lane.b32.xlu0 %v180, 104
    %v200 = vpop.permute.xlu0 %199
    %v203 = vcombine.low %v177, %v192
    %v204 = vcombine.high %v177, %v192
    %v206 = vunpack.c.l.s4 1983009808
    %v207 = vunpack.c.0.s8 %v206
    %v208 = vlaneseq
    %v209 = vshrl.u32 %v208, 7
    %v210 = vsub.s32 %v207, %v209
    %v211 = vrot.slane %v203, %v210
    %v213 = vunpack.c.l.s4 1983009808
    %v214 = vunpack.c.0.s8 %v213
    %v215 = vlaneseq
    %v216 = vshrl.u32 %v215, 7
    %v217 = vsub.s32 %v214, %v216
    %v218 = vrot.slane %v204, %v217
    %v219 = vcombine.low %v186, %v198
    %v220 = vcombine.high %v186, %v198
    %v222 = vunpack.c.l.s4 1983009808
    %v223 = vunpack.c.0.s8 %v222
    %v224 = vlaneseq
    %v225 = vshrl.u32 %v224, 7
    %v226 = vsub.s32 %v223, %v225
    %v227 = vrot.slane %v219, %v226
    %v229 = vunpack.c.l.s4 1983009808
    %v230 = vunpack.c.0.s8 %v229
    %v231 = vlaneseq
    %v232 = vshrl.u32 %v231, 7
    %v233 = vsub.s32 %v230, %v232
    %v234 = vrot.slane %v220, %v233
    %v235 = vcombine.low %v211, %v227
    %v236 = vcombine.high %v211, %v227
    %v238 = vunpack.c.l.s4 1934713408
    %v239 = vunpack.c.0.s8 %v238
    %v240 = vlaneseq
    %v241 = vshrl.u32 %v240, 7
    %v242 = vsub.s32 %v239, %v241
    %v243 = vrot.slane %v235, %v242
    %v245 = vunpack.c.l.s4 1934713408
    %v246 = vunpack.c.0.s8 %v245
    %v247 = vlaneseq
    %v248 = vshrl.u32 %v247, 7
    %v249 = vsub.s32 %v246, %v248
    %v250 = vrot.slane %v236, %v249
    %v251 = vcombine.low %v218, %v234
    %v252 = vcombine.high %v218, %v234
    %v254 = vunpack.c.l.s4 1934713408
    %v255 = vunpack.c.0.s8 %v254
    %v256 = vlaneseq
    %v257 = vshrl.u32 %v256, 7
    %v258 = vsub.s32 %v255, %v257
    %v259 = vrot.slane %v251, %v258
    %v261 = vunpack.c.l.s4 1934713408
    %v262 = vunpack.c.0.s8 %v261
    %v263 = vlaneseq
    %v264 = vshrl.u32 %v263, 7
    %v265 = vsub.s32 %v262, %v264
    %v266 = vrot.slane %v252, %v265
    %v267 = vcombine.high %v243, 0.0
    %v268 = vcombine.high %v250, 0.0
    %v269 = vcombine.high %v259, 0.0
    %v270 = vcombine.high %v266, 0.0
    %v271 = vcombine.low %v180, %v194
    %v272 = vcombine.high %v180, %v194
    %v274 = vunpack.c.l.s4 1983009808
    %v275 = vunpack.c.0.s8 %v274
    %v276 = vlaneseq
    %v277 = vshrl.u32 %v276, 7
    %v278 = vsub.s32 %v275, %v277
    %v279 = vrot.slane %v271, %v278
    %v281 = vunpack.c.l.s4 1983009808
    %v282 = vunpack.c.0.s8 %v281
    %v283 = vlaneseq
    %v284 = vshrl.u32 %v283, 7
    %v285 = vsub.s32 %v282, %v284
    %v286 = vrot.slane %v272, %v285
    %v287 = vcombine.low %v188, %v200
    %v288 = vcombine.high %v188, %v200
    %v290 = vunpack.c.l.s4 1983009808
    %v291 = vunpack.c.0.s8 %v290
    %v292 = vlaneseq
    %v293 = vshrl.u32 %v292, 7
    %v294 = vsub.s32 %v291, %v293
    %v295 = vrot.slane %v287, %v294
    %v297 = vunpack.c.l.s4 1983009808
    %v298 = vunpack.c.0.s8 %v297
    %v299 = vlaneseq
    %v300 = vshrl.u32 %v299, 7
    %v301 = vsub.s32 %v298, %v300
    %v302 = vrot.slane %v288, %v301
    %v303 = vcombine.low %v279, %v295
    %v304 = vcombine.high %v279, %v295
    %v306 = vunpack.c.l.s4 1934713408
    %v307 = vunpack.c.0.s8 %v306
    %v308 = vlaneseq
    %v309 = vshrl.u32 %v308, 7
    %v310 = vsub.s32 %v307, %v309
    %v311 = vrot.slane %v303, %v310
    %v313 = vunpack.c.l.s4 1934713408
    %v314 = vunpack.c.0.s8 %v313
    %v315 = vlaneseq
    %v316 = vshrl.u32 %v315, 7
    %v317 = vsub.s32 %v314, %v316
    %v318 = vrot.slane %v304, %v317
    %v319 = vcombine.low %v286, %v302
    %v320 = vcombine.high %v286, %v302
    %v322 = vunpack.c.l.s4 1934713408
    %v323 = vunpack.c.0.s8 %v322
    %v324 = vlaneseq
    %v325 = vshrl.u32 %v324, 7
    %v326 = vsub.s32 %v323, %v325
    %v327 = vrot.slane %v319, %v326
    %v329 = vunpack.c.l.s4 1934713408
    %v330 = vunpack.c.0.s8 %v329
    %v331 = vlaneseq
    %v332 = vshrl.u32 %v331, 7
    %v333 = vsub.s32 %v330, %v332
    %v334 = vrot.slane %v320, %v333
    %v335 = vcombine.high %v311, 0.0
    %v336 = vcombine.high %v318, 0.0
    %v337 = vcombine.high %v327, 0.0
    %v338 = vcombine.high %v334, 0.0
    %339 = vrot.lane.b32.xlu0 %v177, 96
    %v340 = vpop.permute.xlu0 %339
    %341 = vrot.lane.b32.xlu0 %v180, 96
    %v342 = vpop.permute.xlu0 %341
    %343 = vrot.lane.b32.xlu0 %v186, 96
    %v344 = vpop.permute.xlu0 %343
    %345 = vrot.lane.b32.xlu0 %v188, 96
    %v346 = vpop.permute.xlu0 %345
    %347 = vrot.lane.b32.xlu0 %v192, 96
    %v348 = vpop.permute.xlu0 %347
    %349 = vrot.lane.b32.xlu0 %v194, 96
    %v350 = vpop.permute.xlu0 %349
    %351 = vrot.lane.b32.xlu0 %v198, 96
    %v352 = vpop.permute.xlu0 %351
    %353 = vrot.lane.b32.xlu0 %v200, 96
    %v354 = vpop.permute.xlu0 %353
    %v363 = vcombine.low %v340, %v348
    %v364 = vcombine.high %v340, %v348
    %v366 = vunpack.c.l.s4 1983009808
    %v367 = vunpack.c.0.s8 %v366
    %v368 = vlaneseq
    %v369 = vshrl.u32 %v368, 7
    %v370 = vsub.s32 %v367, %v369
    %v371 = vrot.slane %v363, %v370
    %v373 = vunpack.c.l.s4 1983009808
    %v374 = vunpack.c.0.s8 %v373
    %v375 = vlaneseq
    %v376 = vshrl.u32 %v375, 7
    %v377 = vsub.s32 %v374, %v376
    %v378 = vrot.slane %v364, %v377
    %v379 = vcombine.low %v344, %v352
    %v380 = vcombine.high %v344, %v352
    %v382 = vunpack.c.l.s4 1983009808
    %v383 = vunpack.c.0.s8 %v382
    %v384 = vlaneseq
    %v385 = vshrl.u32 %v384, 7
    %v386 = vsub.s32 %v383, %v385
    %v387 = vrot.slane %v379, %v386
    %v389 = vunpack.c.l.s4 1983009808
    %v390 = vunpack.c.0.s8 %v389
    %v391 = vlaneseq
    %v392 = vshrl.u32 %v391, 7
    %v393 = vsub.s32 %v390, %v392
    %v394 = vrot.slane %v380, %v393
    %v395 = vcombine.low %v371, %v387
    %v396 = vcombine.high %v371, %v387
    %v398 = vunpack.c.l.s4 1934713408
    %v399 = vunpack.c.0.s8 %v398
    %v400 = vlaneseq
    %v401 = vshrl.u32 %v400, 7
    %v402 = vsub.s32 %v399, %v401
    %v403 = vrot.slane %v395, %v402
    %v405 = vunpack.c.l.s4 1934713408
    %v406 = vunpack.c.0.s8 %v405
    %v407 = vlaneseq
    %v408 = vshrl.u32 %v407, 7
    %v409 = vsub.s32 %v406, %v408
    %v410 = vrot.slane %v396, %v409
    %v411 = vcombine.low %v378, %v394
    %v412 = vcombine.high %v378, %v394
    %v414 = vunpack.c.l.s4 1934713408
    %v415 = vunpack.c.0.s8 %v414
    %v416 = vlaneseq
    %v417 = vshrl.u32 %v416, 7
    %v418 = vsub.s32 %v415, %v417
    %v419 = vrot.slane %v411, %v418
    %v421 = vunpack.c.l.s4 1934713408
    %v422 = vunpack.c.0.s8 %v421
    %v423 = vlaneseq
    %v424 = vshrl.u32 %v423, 7
    %v425 = vsub.s32 %v422, %v424
    %v426 = vrot.slane %v412, %v425
    %v427 = vcombine.high %v403, 0.0
    %v428 = vcombine.high %v410, 0.0
    %v429 = vcombine.high %v419, 0.0
    %v430 = vcombine.high %v426, 0.0
    %v431 = vcombine.low %v342, %v350
    %v432 = vcombine.high %v342, %v350
    %v434 = vunpack.c.l.s4 1983009808
    %v435 = vunpack.c.0.s8 %v434
    %v436 = vlaneseq
    %v437 = vshrl.u32 %v436, 7
    %v438 = vsub.s32 %v435, %v437
    %v439 = vrot.slane %v431, %v438
    %v441 = vunpack.c.l.s4 1983009808
    %v442 = vunpack.c.0.s8 %v441
    %v443 = vlaneseq
    %v444 = vshrl.u32 %v443, 7
    %v445 = vsub.s32 %v442, %v444
    %v446 = vrot.slane %v432, %v445
    %v447 = vcombine.low %v346, %v354
    %v448 = vcombine.high %v346, %v354
    %v450 = vunpack.c.l.s4 1983009808
    %v451 = vunpack.c.0.s8 %v450
    %v452 = vlaneseq
    %v453 = vshrl.u32 %v452, 7
    %v454 = vsub.s32 %v451, %v453
    %v455 = vrot.slane %v447, %v454
    %v457 = vunpack.c.l.s4 1983009808
    %v458 = vunpack.c.0.s8 %v457
    %v459 = vlaneseq
    %v460 = vshrl.u32 %v459, 7
    %v461 = vsub.s32 %v458, %v460
    %v462 = vrot.slane %v448, %v461
    %v463 = vcombine.low %v439, %v455
    %v464 = vcombine.high %v439, %v455
    %v466 = vunpack.c.l.s4 1934713408
    %v467 = vunpack.c.0.s8 %v466
    %v468 = vlaneseq
    %v469 = vshrl.u32 %v468, 7
    %v470 = vsub.s32 %v467, %v469
    %v471 = vrot.slane %v463, %v470
    %v473 = vunpack.c.l.s4 1934713408
    %v474 = vunpack.c.0.s8 %v473
    %v475 = vlaneseq
    %v476 = vshrl.u32 %v475, 7
    %v477 = vsub.s32 %v474, %v476
    %v478 = vrot.slane %v464, %v477
    %v479 = vcombine.low %v446, %v462
    %v480 = vcombine.high %v446, %v462
    %v482 = vunpack.c.l.s4 1934713408
    %v483 = vunpack.c.0.s8 %v482
    %v484 = vlaneseq
    %v485 = vshrl.u32 %v484, 7
    %v486 = vsub.s32 %v483, %v485
    %v487 = vrot.slane %v479, %v486
    %v489 = vunpack.c.l.s4 1934713408
    %v490 = vunpack.c.0.s8 %v489
    %v491 = vlaneseq
    %v492 = vshrl.u32 %v491, 7
    %v493 = vsub.s32 %v490, %v492
    %v494 = vrot.slane %v480, %v493
    %v495 = vcombine.high %v471, 0.0
    %v496 = vcombine.high %v478, 0.0
    %v497 = vcombine.high %v487, 0.0
    %v498 = vcombine.high %v494, 0.0
    %499 = vrot.lane.b32.xlu0 %v177, 64
    %v500 = vpop.permute.xlu0 %499
    %501 = vrot.lane.b32.xlu0 %v180, 64
    %v502 = vpop.permute.xlu0 %501
    %503 = vrot.lane.b32.xlu0 %v186, 64
    %v504 = vpop.permute.xlu0 %503
    %505 = vrot.lane.b32.xlu0 %v188, 64
    %v506 = vpop.permute.xlu0 %505
    %507 = vrot.lane.b32.xlu0 %v192, 64
    %v508 = vpop.permute.xlu0 %507
    %509 = vrot.lane.b32.xlu0 %v194, 64
    %v510 = vpop.permute.xlu0 %509
    %511 = vrot.lane.b32.xlu0 %v198, 64
    %v512 = vpop.permute.xlu0 %511
    %513 = vrot.lane.b32.xlu0 %v200, 64
    %v514 = vpop.permute.xlu0 %513
    %v523 = vcombine.low %v500, %v508
    %v524 = vcombine.high %v500, %v508
    %v526 = vunpack.c.l.s4 1983009808
    %v527 = vunpack.c.0.s8 %v526
    %v528 = vlaneseq
    %v529 = vshrl.u32 %v528, 7
    %v530 = vsub.s32 %v527, %v529
    %v531 = vrot.slane %v523, %v530
    %v533 = vunpack.c.l.s4 1983009808
    %v534 = vunpack.c.0.s8 %v533
    %v535 = vlaneseq
    %v536 = vshrl.u32 %v535, 7
    %v537 = vsub.s32 %v534, %v536
    %v538 = vrot.slane %v524, %v537
    %v539 = vcombine.low %v504, %v512
    %v540 = vcombine.high %v504, %v512
    %v542 = vunpack.c.l.s4 1983009808
    %v543 = vunpack.c.0.s8 %v542
    %v544 = vlaneseq
    %v545 = vshrl.u32 %v544, 7
    %v546 = vsub.s32 %v543, %v545
    %v547 = vrot.slane %v539, %v546
    %v549 = vunpack.c.l.s4 1983009808
    %v550 = vunpack.c.0.s8 %v549
    %v551 = vlaneseq
    %v552 = vshrl.u32 %v551, 7
    %v553 = vsub.s32 %v550, %v552
    %v554 = vrot.slane %v540, %v553
    %v555 = vcombine.low %v531, %v547
    %v556 = vcombine.high %v531, %v547
    %v558 = vunpack.c.l.s4 1934713408
    %v559 = vunpack.c.0.s8 %v558
    %v560 = vlaneseq
    %v561 = vshrl.u32 %v560, 7
    %v562 = vsub.s32 %v559, %v561
    %v563 = vrot.slane %v555, %v562
    %v565 = vunpack.c.l.s4 1934713408
    %v566 = vunpack.c.0.s8 %v565
    %v567 = vlaneseq
    %v568 = vshrl.u32 %v567, 7
    %v569 = vsub.s32 %v566, %v568
    %v570 = vrot.slane %v556, %v569
    %v571 = vcombine.low %v538, %v554
    %v572 = vcombine.high %v538, %v554
    %v574 = vunpack.c.l.s4 1934713408
    %v575 = vunpack.c.0.s8 %v574
    %v576 = vlaneseq
    %v577 = vshrl.u32 %v576, 7
    %v578 = vsub.s32 %v575, %v577
    %v579 = vrot.slane %v571, %v578
    %v581 = vunpack.c.l.s4 1934713408
    %v582 = vunpack.c.0.s8 %v581
    %v583 = vlaneseq
    %v584 = vshrl.u32 %v583, 7
    %v585 = vsub.s32 %v582, %v584
    %v586 = vrot.slane %v572, %v585
    %v587 = vcombine.high %v563, 0.0
    %v588 = vcombine.high %v570, 0.0
    %v589 = vcombine.high %v579, 0.0
    %v590 = vcombine.high %v586, 0.0
    %v591 = vcombine.low %v502, %v510
    %v592 = vcombine.high %v502, %v510
    %v594 = vunpack.c.l.s4 1983009808
    %v595 = vunpack.c.0.s8 %v594
    %v596 = vlaneseq
    %v597 = vshrl.u32 %v596, 7
    %v598 = vsub.s32 %v595, %v597
    %v599 = vrot.slane %v591, %v598
    %v601 = vunpack.c.l.s4 1983009808
    %v602 = vunpack.c.0.s8 %v601
    %v603 = vlaneseq
    %v604 = vshrl.u32 %v603, 7
    %v605 = vsub.s32 %v602, %v604
    %v606 = vrot.slane %v592, %v605
    %v607 = vcombine.low %v506, %v514
    %v608 = vcombine.high %v506, %v514
    %v610 = vunpack.c.l.s4 1983009808
    %v611 = vunpack.c.0.s8 %v610
    %v612 = vlaneseq
    %v613 = vshrl.u32 %v612, 7
    %v614 = vsub.s32 %v611, %v613
    %v615 = vrot.slane %v607, %v614
    %v617 = vunpack.c.l.s4 1983009808
    %v618 = vunpack.c.0.s8 %v617
    %v619 = vlaneseq
    %v620 = vshrl.u32 %v619, 7
    %v621 = vsub.s32 %v618, %v620
    %v622 = vrot.slane %v608, %v621
    %v623 = vcombine.low %v599, %v615
    %v624 = vcombine.high %v599, %v615
    %v626 = vunpack.c.l.s4 1934713408
    %v627 = vunpack.c.0.s8 %v626
    %v628 = vlaneseq
    %v629 = vshrl.u32 %v628, 7
    %v630 = vsub.s32 %v627, %v629
    %v631 = vrot.slane %v623, %v630
    %v633 = vunpack.c.l.s4 1934713408
    %v634 = vunpack.c.0.s8 %v633
    %v635 = vlaneseq
    %v636 = vshrl.u32 %v635, 7
    %v637 = vsub.s32 %v634, %v636
    %v638 = vrot.slane %v624, %v637
    %v639 = vcombine.low %v606, %v622
    %v640 = vcombine.high %v606, %v622
    %v642 = vunpack.c.l.s4 1934713408
    %v643 = vunpack.c.0.s8 %v642
    %v644 = vlaneseq
    %v645 = vshrl.u32 %v644, 7
    %v646 = vsub.s32 %v643, %v645
    %v647 = vrot.slane %v639, %v646
    %v649 = vunpack.c.l.s4 1934713408
    %v650 = vunpack.c.0.s8 %v649
    %v651 = vlaneseq
    %v652 = vshrl.u32 %v651, 7
    %v653 = vsub.s32 %v650, %v652
    %v654 = vrot.slane %v640, %v653
    %v655 = vcombine.high %v631, 0.0
    %v656 = vcombine.high %v638, 0.0
    %v657 = vcombine.high %v647, 0.0
    %v658 = vcombine.high %v654, 0.0
    %v659 = vcombine.low %v243, %v250
    %v661 = vunpack.c.l.s4 1983009808
    %v662 = vunpack.c.0.s8 %v661
    %v663 = vlaneseq
    %v664 = vshrl.u32 %v663, 7
    %v665 = vsub.s32 %v662, %v664
    %v666 = vrot.slane %v659, %v665
    %v667 = vcombine.low %v267, %v268
    %v669 = vunpack.c.l.s4 1983009808
    %v670 = vunpack.c.0.s8 %v669
    %v671 = vlaneseq
    %v672 = vshrl.u32 %v671, 7
    %v673 = vsub.s32 %v670, %v672
    %v674 = vrot.slane %v667, %v673
    %v675 = vcombine.low %v259, %v266
    %v677 = vunpack.c.l.s4 1983009808
    %v678 = vunpack.c.0.s8 %v677
    %v679 = vlaneseq
    %v680 = vshrl.u32 %v679, 7
    %v681 = vsub.s32 %v678, %v680
    %v682 = vrot.slane %v675, %v681
    %v683 = vcombine.low %v269, %v270
    %v685 = vunpack.c.l.s4 1983009808
    %v686 = vunpack.c.0.s8 %v685
    %v687 = vlaneseq
    %v688 = vshrl.u32 %v687, 7
    %v689 = vsub.s32 %v686, %v688
    %v690 = vrot.slane %v683, %v689
    %v691 = vcombine.low %v666, %v674
    %v692 = vcombine.high %v666, %v674
    %v694 = vunpack.c.l.s4 1934713408
    %v695 = vunpack.c.0.s8 %v694
    %v696 = vlaneseq
    %v697 = vshrl.u32 %v696, 7
    %v698 = vsub.s32 %v695, %v697
    %v699 = vrot.slane %v691, %v698
    %v701 = vunpack.c.l.s4 1934713408
    %v702 = vunpack.c.0.s8 %v701
    %v703 = vlaneseq
    %v704 = vshrl.u32 %v703, 7
    %v705 = vsub.s32 %v702, %v704
    %v706 = vrot.slane %v692, %v705
    %v707 = vcombine.low %v682, %v690
    %v708 = vcombine.high %v682, %v690
    %v710 = vunpack.c.l.s4 1934713408
    %v711 = vunpack.c.0.s8 %v710
    %v712 = vlaneseq
    %v713 = vshrl.u32 %v712, 7
    %v714 = vsub.s32 %v711, %v713
    %v715 = vrot.slane %v707, %v714
    %v717 = vunpack.c.l.s4 1934713408
    %v718 = vunpack.c.0.s8 %v717
    %v719 = vlaneseq
    %v720 = vshrl.u32 %v719, 7
    %v721 = vsub.s32 %v718, %v720
    %v722 = vrot.slane %v708, %v721
    %v723 = vcombine.low %v699, %v715
    %v724 = vcombine.high %v699, %v715
    %v725 = vcombine.low %v706, %v722
    %v726 = vcombine.high %v706, %v722
    %v727 = vcombine.low %v311, %v318
    %v729 = vunpack.c.l.s4 1983009808
    %v730 = vunpack.c.0.s8 %v729
    %v731 = vlaneseq
    %v732 = vshrl.u32 %v731, 7
    %v733 = vsub.s32 %v730, %v732
    %v734 = vrot.slane %v727, %v733
    %v735 = vcombine.low %v335, %v336
    %v737 = vunpack.c.l.s4 1983009808
    %v738 = vunpack.c.0.s8 %v737
    %v739 = vlaneseq
    %v740 = vshrl.u32 %v739, 7
    %v741 = vsub.s32 %v738, %v740
    %v742 = vrot.slane %v735, %v741
    %v743 = vcombine.low %v327, %v334
    %v745 = vunpack.c.l.s4 1983009808
    %v746 = vunpack.c.0.s8 %v745
    %v747 = vlaneseq
    %v748 = vshrl.u32 %v747, 7
    %v749 = vsub.s32 %v746, %v748
    %v750 = vrot.slane %v743, %v749
    %v751 = vcombine.low %v337, %v338
    %v753 = vunpack.c.l.s4 1983009808
    %v754 = vunpack.c.0.s8 %v753
    %v755 = vlaneseq
    %v756 = vshrl.u32 %v755, 7
    %v757 = vsub.s32 %v754, %v756
    %v758 = vrot.slane %v751, %v757
    %v759 = vcombine.low %v734, %v742
    %v760 = vcombine.high %v734, %v742
    %v762 = vunpack.c.l.s4 1934713408
    %v763 = vunpack.c.0.s8 %v762
    %v764 = vlaneseq
    %v765 = vshrl.u32 %v764, 7
    %v766 = vsub.s32 %v763, %v765
    %v767 = vrot.slane %v759, %v766
    %v769 = vunpack.c.l.s4 1934713408
    %v770 = vunpack.c.0.s8 %v769
    %v771 = vlaneseq
    %v772 = vshrl.u32 %v771, 7
    %v773 = vsub.s32 %v770, %v772
    %v774 = vrot.slane %v760, %v773
    %v775 = vcombine.low %v750, %v758
    %v776 = vcombine.high %v750, %v758
    %v778 = vunpack.c.l.s4 1934713408
    %v779 = vunpack.c.0.s8 %v778
    %v780 = vlaneseq
    %v781 = vshrl.u32 %v780, 7
    %v782 = vsub.s32 %v779, %v781
    %v783 = vrot.slane %v775, %v782
    %v785 = vunpack.c.l.s4 1934713408
    %v786 = vunpack.c.0.s8 %v785
    %v787 = vlaneseq
    %v788 = vshrl.u32 %v787, 7
    %v789 = vsub.s32 %v786, %v788
    %v790 = vrot.slane %v776, %v789
    %v791 = vcombine.low %v767, %v783
    %v792 = vcombine.high %v767, %v783
    %v793 = vcombine.low %v774, %v790
    %v794 = vcombine.high %v774, %v790
    %v795 = vpack.c.bf16 %v723, %v723
    %v796 = vpack.c.bf16 %v724, %v724
    %v797 = vpack.c.bf16 %v725, %v725
    %v798 = vpack.c.bf16 %v726, %v726
    %v799 = vpack.c.bf16 %v791, %v791
    %v800 = vpack.c.bf16 %v792, %v792
    %v801 = vpack.c.bf16 %v793, %v793
    %v802 = vpack.c.bf16 %v794, %v794
    %v803 = vcombine.low %v403, %v410
    %v805 = vunpack.c.l.s4 1983009808
    %v806 = vunpack.c.0.s8 %v805
    %v807 = vlaneseq
    %v808 = vshrl.u32 %v807, 7
    %v809 = vsub.s32 %v806, %v808
    %v810 = vrot.slane %v803, %v809
    %v811 = vcombine.low %v427, %v428
    %v813 = vunpack.c.l.s4 1983009808
    %v814 = vunpack.c.0.s8 %v813
    %v815 = vlaneseq
    %v816 = vshrl.u32 %v815, 7
    %v817 = vsub.s32 %v814, %v816
    %v818 = vrot.slane %v811, %v817
    %v819 = vcombine.low %v419, %v426
    %v821 = vunpack.c.l.s4 1983009808
    %v822 = vunpack.c.0.s8 %v821
    %v823 = vlaneseq
    %v824 = vshrl.u32 %v823, 7
    %v825 = vsub.s32 %v822, %v824
    %v826 = vrot.slane %v819, %v825
    %v827 = vcombine.low %v429, %v430
    %v829 = vunpack.c.l.s4 1983009808
    %v830 = vunpack.c.0.s8 %v829
    %v831 = vlaneseq
    %v832 = vshrl.u32 %v831, 7
    %v833 = vsub.s32 %v830, %v832
    %v834 = vrot.slane %v827, %v833
    %v835 = vcombine.low %v810, %v818
    %v836 = vcombine.high %v810, %v818
    %v838 = vunpack.c.l.s4 1934713408
    %v839 = vunpack.c.0.s8 %v838
    %v840 = vlaneseq
    %v841 = vshrl.u32 %v840, 7
    %v842 = vsub.s32 %v839, %v841
    %v843 = vrot.slane %v835, %v842
    %v845 = vunpack.c.l.s4 1934713408
    %v846 = vunpack.c.0.s8 %v845
    %v847 = vlaneseq
    %v848 = vshrl.u32 %v847, 7
    %v849 = vsub.s32 %v846, %v848
    %v850 = vrot.slane %v836, %v849
    %v851 = vcombine.low %v826, %v834
    %v852 = vcombine.high %v826, %v834
    %v854 = vunpack.c.l.s4 1934713408
    %v855 = vunpack.c.0.s8 %v854
    %v856 = vlaneseq
    %v857 = vshrl.u32 %v856, 7
    %v858 = vsub.s32 %v855, %v857
    %v859 = vrot.slane %v851, %v858
    %v861 = vunpack.c.l.s4 1934713408
    %v862 = vunpack.c.0.s8 %v861
    %v863 = vlaneseq
    %v864 = vshrl.u32 %v863, 7
    %v865 = vsub.s32 %v862, %v864
    %v866 = vrot.slane %v852, %v865
    %v867 = vcombine.low %v843, %v859
    %v868 = vcombine.high %v843, %v859
    %v869 = vcombine.low %v850, %v866
    %v870 = vcombine.high %v850, %v866
    %v871 = vcombine.low %v471, %v478
    %v873 = vunpack.c.l.s4 1983009808
    %v874 = vunpack.c.0.s8 %v873
    %v875 = vlaneseq
    %v876 = vshrl.u32 %v875, 7
    %v877 = vsub.s32 %v874, %v876
    %v878 = vrot.slane %v871, %v877
    %v879 = vcombine.low %v495, %v496
    %v881 = vunpack.c.l.s4 1983009808
    %v882 = vunpack.c.0.s8 %v881
    %v883 = vlaneseq
    %v884 = vshrl.u32 %v883, 7
    %v885 = vsub.s32 %v882, %v884
    %v886 = vrot.slane %v879, %v885
    %v887 = vcombine.low %v487, %v494
    %v889 = vunpack.c.l.s4 1983009808
    %v890 = vunpack.c.0.s8 %v889
    %v891 = vlaneseq
    %v892 = vshrl.u32 %v891, 7
    %v893 = vsub.s32 %v890, %v892
    %v894 = vrot.slane %v887, %v893
    %v895 = vcombine.low %v497, %v498
    %v897 = vunpack.c.l.s4 1983009808
    %v898 = vunpack.c.0.s8 %v897
    %v899 = vlaneseq
    %v900 = vshrl.u32 %v899, 7
    %v901 = vsub.s32 %v898, %v900
    %v902 = vrot.slane %v895, %v901
    %v903 = vcombine.low %v878, %v886
    %v904 = vcombine.high %v878, %v886
    %v906 = vunpack.c.l.s4 1934713408
    %v907 = vunpack.c.0.s8 %v906
    %v908 = vlaneseq
    %v909 = vshrl.u32 %v908, 7
    %v910 = vsub.s32 %v907, %v909
    %v911 = vrot.slane %v903, %v910
    %v913 = vunpack.c.l.s4 1934713408
    %v914 = vunpack.c.0.s8 %v913
    %v915 = vlaneseq
    %v916 = vshrl.u32 %v915, 7
    %v917 = vsub.s32 %v914, %v916
    %v918 = vrot.slane %v904, %v917
    %v919 = vcombine.low %v894, %v902
    %v920 = vcombine.high %v894, %v902
    %v922 = vunpack.c.l.s4 1934713408
    %v923 = vunpack.c.0.s8 %v922
    %v924 = vlaneseq
    %v925 = vshrl.u32 %v924, 7
    %v926 = vsub.s32 %v923, %v925
    %v927 = vrot.slane %v919, %v926
    %v929 = vunpack.c.l.s4 1934713408
    %v930 = vunpack.c.0.s8 %v929
    %v931 = vlaneseq
    %v932 = vshrl.u32 %v931, 7
    %v933 = vsub.s32 %v930, %v932
    %v934 = vrot.slane %v920, %v933
    %v935 = vcombine.low %v911, %v927
    %v936 = vcombine.high %v911, %v927
    %v937 = vcombine.low %v918, %v934
    %v938 = vcombine.high %v918, %v934
    %v939 = vpack.c.bf16 %v867, %v867
    %v940 = vpack.c.bf16 %v868, %v868
    %v941 = vpack.c.bf16 %v869, %v869
    %v942 = vpack.c.bf16 %v870, %v870
    %v943 = vpack.c.bf16 %v935, %v935
    %v944 = vpack.c.bf16 %v936, %v936
    %v945 = vpack.c.bf16 %v937, %v937
    %v946 = vpack.c.bf16 %v938, %v938
    %v947 = vcombine.low %v563, %v570
    %v949 = vunpack.c.l.s4 1983009808
    %v950 = vunpack.c.0.s8 %v949
    %v951 = vlaneseq
    %v952 = vshrl.u32 %v951, 7
    %v953 = vsub.s32 %v950, %v952
    %v954 = vrot.slane %v947, %v953
    %v955 = vcombine.low %v587, %v588
    %v957 = vunpack.c.l.s4 1983009808
    %v958 = vunpack.c.0.s8 %v957
    %v959 = vlaneseq
    %v960 = vshrl.u32 %v959, 7
    %v961 = vsub.s32 %v958, %v960
    %v962 = vrot.slane %v955, %v961
    %v963 = vcombine.low %v579, %v586
    %v965 = vunpack.c.l.s4 1983009808
    %v966 = vunpack.c.0.s8 %v965
    %v967 = vlaneseq
    %v968 = vshrl.u32 %v967, 7
    %v969 = vsub.s32 %v966, %v968
    %v970 = vrot.slane %v963, %v969
    %v971 = vcombine.low %v589, %v590
    %v973 = vunpack.c.l.s4 1983009808
    %v974 = vunpack.c.0.s8 %v973
    %v975 = vlaneseq
    %v976 = vshrl.u32 %v975, 7
    %v977 = vsub.s32 %v974, %v976
    %v978 = vrot.slane %v971, %v977
    %v979 = vcombine.low %v954, %v962
    %v980 = vcombine.high %v954, %v962
    %v982 = vunpack.c.l.s4 1934713408
    %v983 = vunpack.c.0.s8 %v982
    %v984 = vlaneseq
    %v985 = vshrl.u32 %v984, 7
    %v986 = vsub.s32 %v983, %v985
    %v987 = vrot.slane %v979, %v986
    %v989 = vunpack.c.l.s4 1934713408
    %v990 = vunpack.c.0.s8 %v989
    %v991 = vlaneseq
    %v992 = vshrl.u32 %v991, 7
    %v993 = vsub.s32 %v990, %v992
    %v994 = vrot.slane %v980, %v993
    %v995 = vcombine.low %v970, %v978
    %v996 = vcombine.high %v970, %v978
    %v998 = vunpack.c.l.s4 1934713408
    %v999 = vunpack.c.0.s8 %v998
    %v1000 = vlaneseq
    %v1001 = vshrl.u32 %v1000, 7
    %v1002 = vsub.s32 %v999, %v1001
    %v1003 = vrot.slane %v995, %v1002
    %v1005 = vunpack.c.l.s4 1934713408
    %v1006 = vunpack.c.0.s8 %v1005
    %v1007 = vlaneseq
    %v1008 = vshrl.u32 %v1007, 7
    %v1009 = vsub.s32 %v1006, %v1008
    %v1010 = vrot.slane %v996, %v1009
    %v1011 = vcombine.low %v987, %v1003
    %v1012 = vcombine.high %v987, %v1003
    %v1013 = vcombine.low %v994, %v1010
    %v1014 = vcombine.high %v994, %v1010
    %v1015 = vcombine.low %v631, %v638
    %v1017 = vunpack.c.l.s4 1983009808
    %v1018 = vunpack.c.0.s8 %v1017
    %v1019 = vlaneseq
    %v1020 = vshrl.u32 %v1019, 7
    %v1021 = vsub.s32 %v1018, %v1020
    %v1022 = vrot.slane %v1015, %v1021
    %v1023 = vcombine.low %v655, %v656
    %v1025 = vunpack.c.l.s4 1983009808
    %v1026 = vunpack.c.0.s8 %v1025
    %v1027 = vlaneseq
    %v1028 = vshrl.u32 %v1027, 7
    %v1029 = vsub.s32 %v1026, %v1028
    %v1030 = vrot.slane %v1023, %v1029
    %v1031 = vcombine.low %v647, %v654
    %v1033 = vunpack.c.l.s4 1983009808
    %v1034 = vunpack.c.0.s8 %v1033
    %v1035 = vlaneseq
    %v1036 = vshrl.u32 %v1035, 7
    %v1037 = vsub.s32 %v1034, %v1036
    %v1038 = vrot.slane %v1031, %v1037
    %v1039 = vcombine.low %v657, %v658
    %v1041 = vunpack.c.l.s4 1983009808
    %v1042 = vunpack.c.0.s8 %v1041
    %v1043 = vlaneseq
    %v1044 = vshrl.u32 %v1043, 7
    %v1045 = vsub.s32 %v1042, %v1044
    %v1046 = vrot.slane %v1039, %v1045
    %v1047 = vcombine.low %v1022, %v1030
    %v1048 = vcombine.high %v1022, %v1030
    %v1050 = vunpack.c.l.s4 1934713408
    %v1051 = vunpack.c.0.s8 %v1050
    %v1052 = vlaneseq
    %v1053 = vshrl.u32 %v1052, 7
    %v1054 = vsub.s32 %v1051, %v1053
    %v1055 = vrot.slane %v1047, %v1054
    %v1057 = vunpack.c.l.s4 1934713408
    %v1058 = vunpack.c.0.s8 %v1057
    %v1059 = vlaneseq
    %v1060 = vshrl.u32 %v1059, 7
    %v1061 = vsub.s32 %v1058, %v1060
    %v1062 = vrot.slane %v1048, %v1061
    %v1063 = vcombine.low %v1038, %v1046
    %v1064 = vcombine.high %v1038, %v1046
    %v1066 = vunpack.c.l.s4 1934713408
    %v1067 = vunpack.c.0.s8 %v1066
    %v1068 = vlaneseq
    %v1069 = vshrl.u32 %v1068, 7
    %v1070 = vsub.s32 %v1067, %v1069
    %v1071 = vrot.slane %v1063, %v1070
    %v1073 = vunpack.c.l.s4 1934713408
    %v1074 = vunpack.c.0.s8 %v1073
    %v1075 = vlaneseq
    %v1076 = vshrl.u32 %v1075, 7
    %v1077 = vsub.s32 %v1074, %v1076
    %v1078 = vrot.slane %v1064, %v1077
    %v1079 = vcombine.low %v1055, %v1071
    %v1080 = vcombine.high %v1055, %v1071
    %v1081 = vcombine.low %v1062, %v1078
    %v1082 = vcombine.high %v1062, %v1078
    %v1083 = vpack.c.bf16 %v1011, %v1011
    %v1084 = vpack.c.bf16 %v1012, %v1012
    %v1085 = vpack.c.bf16 %v1013, %v1013
    %v1086 = vpack.c.bf16 %v1014, %v1014
    %v1087 = vpack.c.bf16 %v1079, %v1079
    %v1088 = vpack.c.bf16 %v1080, %v1080
    %v1089 = vpack.c.bf16 %v1081, %v1081
    %v1090 = vpack.c.bf16 %v1082, %v1082
    %vm1091 = vcmask 64512
    %v1093 = vsel %vm1091, %v795, 0
    %v1096 = vsel %vm1091, %v939, 0
    %1098 = vmatprep.subr.bf16.mxu0 0
    %1099 = vmatpush1.bf16.xpose.msra.mxu0 %v1096
    %1100 = vmatprep.subr.bf16.mxu0 0
    %1101 = vmatpush1.bf16.xpose.msra.mxu0 0
    %1102 = vmatprep.subr.bf16.mxu0 0
    %1103 = vmatpush1.bf16.xpose.msra.mxu0 0
    %1104 = vmatprep.subr.bf16.mxu0 0
    %1105 = vmatpush1.bf16.xpose.msra.mxu0 0
    %1106 = vmatprep.subr.bf16.mxu0 0
    %1107 = vmatpush1.bf16.xpose.msra.mxu0 0
    %1108 = vmatprep.subr.bf16.mxu0 0
    %1109 = vmatpush1.bf16.xpose.msra.mxu0 0
    %1110 = vmatprep.subr.bf16.mxu0 0
    %1111 = vmatpush1.bf16.xpose.msra.mxu0 0
    %1112 = vmatprep.subr.bf16.mxu0 0
    %1113 = vmatpush1.bf16.xpose.msra.mxu0 0
    %1114 = vmatprep.subr.bf16.mxu0 0
    %1115 = vmatpush1.bf16.xpose.msra.mxu0 0
    %1116 = vmatprep.subr.bf16.mxu0 0
    %1117 = vmatpush1.bf16.xpose.msra.mxu0 0
    %1118 = vmatprep.subr.bf16.mxu0 0
    %1119 = vmatpush1.bf16.xpose.msra.mxu0 0
    %1120 = vmatprep.subr.bf16.mxu0 0
    %1121 = vmatpush1.bf16.xpose.msra.mxu0 0
    %1122 = vmatprep.subr.bf16.mxu0 0
    %1123 = vmatpush1.bf16.xpose.msra.mxu0 0
    %1124 = vmatprep.subr.bf16.mxu0 0
    %1125 = vmatpush1.bf16.xpose.msra.mxu0 0
    %1126 = vmatprep.subr.bf16.mxu0 0
    %1127 = vmatpush1.bf16.xpose.msra.mxu0 0
    %1128 = vmatprep.subr.bf16.mxu0 0
    %1129 = vmatpush1.bf16.xpose.msra.mxu0 0
    %1130 = vmatprep.mubr.bf16.mxu0 0
    %1131 = vmatmul.mubr.bf16.gmra.mrb[0].mxu0 %v1093
    %v1132 = vpop.f32.mrb[0].mxu0
    %v1133 = vadd.f32 %v107, %v1132
    %v1134 = vpop.f32.mrb[0].mxu0
    %v1135 = vpop.f32.mrb[0].mxu0
    %v1136 = vpop.f32.mrb[0].mxu0
    %1137 = vdwg.mxu0
    %v1139 = vsel %vm1091, %v796, 0
    %v1142 = vsel %vm1091, %v940, 0
    %1144 = vmatprep.subr.bf16.mxu0 0
    %1145 = vmatpush1.bf16.xpose.msra.mxu0 %v1142
    %1146 = vmatprep.subr.bf16.mxu0 0
    %1147 = vmatpush1.bf16.xpose.msra.mxu0 0
    %1148 = vmatprep.subr.bf16.mxu0 0
    %1149 = vmatpush1.bf16.xpose.msra.mxu0 0
    %1150 = vmatprep.subr.bf16.mxu0 0
    %1151 = vmatpush1.bf16.xpose.msra.mxu0 0
    %1152 = vmatprep.subr.bf16.mxu0 0
    %1153 = vmatpush1.bf16.xpose.msra.mxu0 0
    %1154 = vmatprep.subr.bf16.mxu0 0
    %1155 = vmatpush1.bf16.xpose.msra.mxu0 0
    %1156 = vmatprep.subr.bf16.mxu0 0
    %1157 = vmatpush1.bf16.xpose.msra.mxu0 0
    %1158 = vmatprep.subr.bf16.mxu0 0
    %1159 = vmatpush1.bf16.xpose.msra.mxu0 0
    %1160 = vmatprep.subr.bf16.mxu0 0
    %1161 = vmatpush1.bf16.xpose.msra.mxu0 0
    %1162 = vmatprep.subr.bf16.mxu0 0
    %1163 = vmatpush1.bf16.xpose.msra.mxu0 0
    %1164 = vmatprep.subr.bf16.mxu0 0
    %1165 = vmatpush1.bf16.xpose.msra.mxu0 0
    %1166 = vmatprep.subr.bf16.mxu0 0
    %1167 = vmatpush1.bf16.xpose.msra.mxu0 0
    %1168 = vmatprep.subr.bf16.mxu0 0
    %1169 = vmatpush1.bf16.xpose.msra.mxu0 0
    %1170 = vmatprep.subr.bf16.mxu0 0
    %1171 = vmatpush1.bf16.xpose.msra.mxu0 0
    %1172 = vmatprep.subr.bf16.mxu0 0
    %1173 = vmatpush1.bf16.xpose.msra.mxu0 0
    %1174 = vmatprep.subr.bf16.mxu0 0
    %1175 = vmatpush1.bf16.xpose.msra.mxu0 0
    %1176 = vmatprep.mubr.bf16.mxu0 0
    %1177 = vmatmul.mubr.bf16.gmra.mrb[0].mxu0 %v1139
    %v1178 = vpop.f32.mrb[0].mxu0
    %v1179 = vadd.f32 %v107, %v1178
    %v1180 = vpop.f32.mrb[0].mxu0
    %v1181 = vpop.f32.mrb[0].mxu0
    %v1182 = vpop.f32.mrb[0].mxu0
    %1183 = vdwg.mxu0
    %v1185 = vsel %vm1091, %v797, 0
    %v1188 = vsel %vm1091, %v941, 0
    %1190 = vmatprep.subr.bf16.mxu0 0
    %1191 = vmatpush1.bf16.xpose.msra.mxu0 %v1188
    %1192 = vmatprep.subr.bf16.mxu0 0
    %1193 = vmatpush1.bf16.xpose.msra.mxu0 0
    %1194 = vmatprep.subr.bf16.mxu0 0
    %1195 = vmatpush1.bf16.xpose.msra.mxu0 0
    %1196 = vmatprep.subr.bf16.mxu0 0
    %1197 = vmatpush1.bf16.xpose.msra.mxu0 0
    %1198 = vmatprep.subr.bf16.mxu0 0
    %1199 = vmatpush1.bf16.xpose.msra.mxu0 0
    %1200 = vmatprep.subr.bf16.mxu0 0
    %1201 = vmatpush1.bf16.xpose.msra.mxu0 0
    %1202 = vmatprep.subr.bf16.mxu0 0
    %1203 = vmatpush1.bf16.xpose.msra.mxu0 0
    %1204 = vmatprep.subr.bf16.mxu0 0
    %1205 = vmatpush1.bf16.xpose.msra.mxu0 0
    %1206 = vmatprep.subr.bf16.mxu0 0
    %1207 = vmatpush1.bf16.xpose.msra.mxu0 0
    %1208 = vmatprep.subr.bf16.mxu0 0
    %1209 = vmatpush1.bf16.xpose.msra.mxu0 0
    %1210 = vmatprep.subr.bf16.mxu0 0
    %1211 = vmatpush1.bf16.xpose.msra.mxu0 0
    %1212 = vmatprep.subr.bf16.mxu0 0
    %1213 = vmatpush1.bf16.xpose.msra.mxu0 0
    %1214 = vmatprep.subr.bf16.mxu0 0
    %1215 = vmatpush1.bf16.xpose.msra.mxu0 0
    %1216 = vmatprep.subr.bf16.mxu0 0
    %1217 = vmatpush1.bf16.xpose.msra.mxu0 0
    %1218 = vmatprep.subr.bf16.mxu0 0
    %1219 = vmatpush1.bf16.xpose.msra.mxu0 0
    %1220 = vmatprep.subr.bf16.mxu0 0
    %1221 = vmatpush1.bf16.xpose.msra.mxu0 0
    %1222 = vmatprep.mubr.bf16.mxu0 0
    %1223 = vmatmul.mubr.bf16.gmra.mrb[0].mxu0 %v1185
    %v1224 = vpop.f32.mrb[0].mxu0
    %v1225 = vadd.f32 %v107, %v1224
    %v1226 = vpop.f32.mrb[0].mxu0
    %v1227 = vpop.f32.mrb[0].mxu0
    %v1228 = vpop.f32.mrb[0].mxu0
    %1229 = vdwg.mxu0
    %v1231 = vsel %vm1091, %v798, 0
    %v1234 = vsel %vm1091, %v942, 0
    %1236 = vmatprep.subr.bf16.mxu0 0
    %1237 = vmatpush1.bf16.xpose.msra.mxu0 %v1234
    %1238 = vmatprep.subr.bf16.mxu0 0
    %1239 = vmatpush1.bf16.xpose.msra.mxu0 0
    %1240 = vmatprep.subr.bf16.mxu0 0
    %1241 = vmatpush1.bf16.xpose.msra.mxu0 0
    %1242 = vmatprep.subr.bf16.mxu0 0
    %1243 = vmatpush1.bf16.xpose.msra.mxu0 0
    %1244 = vmatprep.subr.bf16.mxu0 0
    %1245 = vmatpush1.bf16.xpose.msra.mxu0 0
    %1246 = vmatprep.subr.bf16.mxu0 0
    %1247 = vmatpush1.bf16.xpose.msra.mxu0 0
    %1248 = vmatprep.subr.bf16.mxu0 0
    %1249 = vmatpush1.bf16.xpose.msra.mxu0 0
    %1250 = vmatprep.subr.bf16.mxu0 0
    %1251 = vmatpush1.bf16.xpose.msra.mxu0 0
    %1252 = vmatprep.subr.bf16.mxu0 0
    %1253 = vmatpush1.bf16.xpose.msra.mxu0 0
    %1254 = vmatprep.subr.bf16.mxu0 0
    %1255 = vmatpush1.bf16.xpose.msra.mxu0 0
    %1256 = vmatprep.subr.bf16.mxu0 0
    %1257 = vmatpush1.bf16.xpose.msra.mxu0 0
    %1258 = vmatprep.subr.bf16.mxu0 0
    %1259 = vmatpush1.bf16.xpose.msra.mxu0 0
    %1260 = vmatprep.subr.bf16.mxu0 0
    %1261 = vmatpush1.bf16.xpose.msra.mxu0 0
    %1262 = vmatprep.subr.bf16.mxu0 0
    %1263 = vmatpush1.bf16.xpose.msra.mxu0 0
    %1264 = vmatprep.subr.bf16.mxu0 0
    %1265 = vmatpush1.bf16.xpose.msra.mxu0 0
    %1266 = vmatprep.subr.bf16.mxu0 0
    %1267 = vmatpush1.bf16.xpose.msra.mxu0 0
    %1268 = vmatprep.mubr.bf16.mxu0 0
    %1269 = vmatmul.mubr.bf16.gmra.mrb[0].mxu0 %v1231
    %v1270 = vpop.f32.mrb[0].mxu0
    %v1271 = vadd.f32 %v107, %v1270
    %v1272 = vpop.f32.mrb[0].mxu0
    %v1273 = vpop.f32.mrb[0].mxu0
    %v1274 = vpop.f32.mrb[0].mxu0
    %1275 = vdwg.mxu0
    %v1277 = vsel %vm1091, %v799, 0
    %v1280 = vsel %vm1091, %v943, 0
    %1282 = vmatprep.subr.bf16.mxu0 0
    %1283 = vmatpush1.bf16.xpose.msra.mxu0 %v1280
    %1284 = vmatprep.subr.bf16.mxu0 0
    %1285 = vmatpush1.bf16.xpose.msra.mxu0 0
    %1286 = vmatprep.subr.bf16.mxu0 0
    %1287 = vmatpush1.bf16.xpose.msra.mxu0 0
    %1288 = vmatprep.subr.bf16.mxu0 0
    %1289 = vmatpush1.bf16.xpose.msra.mxu0 0
    %1290 = vmatprep.subr.bf16.mxu0 0
    %1291 = vmatpush1.bf16.xpose.msra.mxu0 0
    %1292 = vmatprep.subr.bf16.mxu0 0
    %1293 = vmatpush1.bf16.xpose.msra.mxu0 0
    %1294 = vmatprep.subr.bf16.mxu0 0
    %1295 = vmatpush1.bf16.xpose.msra.mxu0 0
    %1296 = vmatprep.subr.bf16.mxu0 0
    %1297 = vmatpush1.bf16.xpose.msra.mxu0 0
    %1298 = vmatprep.subr.bf16.mxu0 0
    %1299 = vmatpush1.bf16.xpose.msra.mxu0 0
    %1300 = vmatprep.subr.bf16.mxu0 0
    %1301 = vmatpush1.bf16.xpose.msra.mxu0 0
    %1302 = vmatprep.subr.bf16.mxu0 0
    %1303 = vmatpush1.bf16.xpose.msra.mxu0 0
    %1304 = vmatprep.subr.bf16.mxu0 0
    %1305 = vmatpush1.bf16.xpose.msra.mxu0 0
    %1306 = vmatprep.subr.bf16.mxu0 0
    %1307 = vmatpush1.bf16.xpose.msra.mxu0 0
    %1308 = vmatprep.subr.bf16.mxu0 0
    %1309 = vmatpush1.bf16.xpose.msra.mxu0 0
    %1310 = vmatprep.subr.bf16.mxu0 0
    %1311 = vmatpush1.bf16.xpose.msra.mxu0 0
    %1312 = vmatprep.subr.bf16.mxu0 0
    %1313 = vmatpush1.bf16.xpose.msra.mxu0 0
    %1314 = vmatprep.mubr.bf16.mxu0 0
    %1315 = vmatmul.mubr.bf16.gmra.mrb[0].mxu0 %v1277
    %v1316 = vpop.f32.mrb[0].mxu0
    %v1317 = vadd.f32 %v111, %v1316
    %v1318 = vpop.f32.mrb[0].mxu0
    %v1319 = vpop.f32.mrb[0].mxu0
    %v1320 = vpop.f32.mrb[0].mxu0
    %1321 = vdwg.mxu0
    %v1323 = vsel %vm1091, %v800, 0
    %v1326 = vsel %vm1091, %v944, 0
    %1328 = vmatprep.subr.bf16.mxu0 0
    %1329 = vmatpush1.bf16.xpose.msra.mxu0 %v1326
    %1330 = vmatprep.subr.bf16.mxu0 0
    %1331 = vmatpush1.bf16.xpose.msra.mxu0 0
    %1332 = vmatprep.subr.bf16.mxu0 0
    %1333 = vmatpush1.bf16.xpose.msra.mxu0 0
    %1334 = vmatprep.subr.bf16.mxu0 0
    %1335 = vmatpush1.bf16.xpose.msra.mxu0 0
    %1336 = vmatprep.subr.bf16.mxu0 0
    %1337 = vmatpush1.bf16.xpose.msra.mxu0 0
    %1338 = vmatprep.subr.bf16.mxu0 0
    %1339 = vmatpush1.bf16.xpose.msra.mxu0 0
    %1340 = vmatprep.subr.bf16.mxu0 0
    %1341 = vmatpush1.bf16.xpose.msra.mxu0 0
    %1342 = vmatprep.subr.bf16.mxu0 0
    %1343 = vmatpush1.bf16.xpose.msra.mxu0 0
    %1344 = vmatprep.subr.bf16.mxu0 0
    %1345 = vmatpush1.bf16.xpose.msra.mxu0 0
    %1346 = vmatprep.subr.bf16.mxu0 0
    %1347 = vmatpush1.bf16.xpose.msra.mxu0 0
    %1348 = vmatprep.subr.bf16.mxu0 0
    %1349 = vmatpush1.bf16.xpose.msra.mxu0 0
    %1350 = vmatprep.subr.bf16.mxu0 0
    %1351 = vmatpush1.bf16.xpose.msra.mxu0 0
    %1352 = vmatprep.subr.bf16.mxu0 0
    %1353 = vmatpush1.bf16.xpose.msra.mxu0 0
    %1354 = vmatprep.subr.bf16.mxu0 0
    %1355 = vmatpush1.bf16.xpose.msra.mxu0 0
    %1356 = vmatprep.subr.bf16.mxu0 0
    %1357 = vmatpush1.bf16.xpose.msra.mxu0 0
    %1358 = vmatprep.subr.bf16.mxu0 0
    %1359 = vmatpush1.bf16.xpose.msra.mxu0 0
    %1360 = vmatprep.mubr.bf16.mxu0 0
    %1361 = vmatmul.mubr.bf16.gmra.mrb[0].mxu0 %v1323
    %v1362 = vpop.f32.mrb[0].mxu0
    %v1363 = vadd.f32 %v111, %v1362
    %v1364 = vpop.f32.mrb[0].mxu0
    %v1365 = vpop.f32.mrb[0].mxu0
    %v1366 = vpop.f32.mrb[0].mxu0
    %1367 = vdwg.mxu0
    %v1369 = vsel %vm1091, %v801, 0
    %v1372 = vsel %vm1091, %v945, 0
    %1374 = vmatprep.subr.bf16.mxu0 0
    %1375 = vmatpush1.bf16.xpose.msra.mxu0 %v1372
    %1376 = vmatprep.subr.bf16.mxu0 0
    %1377 = vmatpush1.bf16.xpose.msra.mxu0 0
    %1378 = vmatprep.subr.bf16.mxu0 0
    %1379 = vmatpush1.bf16.xpose.msra.mxu0 0
    %1380 = vmatprep.subr.bf16.mxu0 0
    %1381 = vmatpush1.bf16.xpose.msra.mxu0 0
    %1382 = vmatprep.subr.bf16.mxu0 0
    %1383 = vmatpush1.bf16.xpose.msra.mxu0 0
    %1384 = vmatprep.subr.bf16.mxu0 0
    %1385 = vmatpush1.bf16.xpose.msra.mxu0 0
    %1386 = vmatprep.subr.bf16.mxu0 0
    %1387 = vmatpush1.bf16.xpose.msra.mxu0 0
    %1388 = vmatprep.subr.bf16.mxu0 0
    %1389 = vmatpush1.bf16.xpose.msra.mxu0 0
    %1390 = vmatprep.subr.bf16.mxu0 0
    %1391 = vmatpush1.bf16.xpose.msra.mxu0 0
    %1392 = vmatprep.subr.bf16.mxu0 0
    %1393 = vmatpush1.bf16.xpose.msra.mxu0 0
    %1394 = vmatprep.subr.bf16.mxu0 0
    %1395 = vmatpush1.bf16.xpose.msra.mxu0 0
    %1396 = vmatprep.subr.bf16.mxu0 0
    %1397 = vmatpush1.bf16.xpose.msra.mxu0 0
    %1398 = vmatprep.subr.bf16.mxu0 0
    %1399 = vmatpush1.bf16.xpose.msra.mxu0 0
    %1400 = vmatprep.subr.bf16.mxu0 0
    %1401 = vmatpush1.bf16.xpose.msra.mxu0 0
    %1402 = vmatprep.subr.bf16.mxu0 0
    %1403 = vmatpush1.bf16.xpose.msra.mxu0 0
    %1404 = vmatprep.subr.bf16.mxu0 0
    %1405 = vmatpush1.bf16.xpose.msra.mxu0 0
    %1406 = vmatprep.mubr.bf16.mxu0 0
    %1407 = vmatmul.mubr.bf16.gmra.mrb[0].mxu0 %v1369
    %v1408 = vpop.f32.mrb[0].mxu0
    %v1409 = vadd.f32 %v111, %v1408
    %v1410 = vpop.f32.mrb[0].mxu0
    %v1411 = vpop.f32.mrb[0].mxu0
    %v1412 = vpop.f32.mrb[0].mxu0
    %1413 = vdwg.mxu0
    %v1415 = vsel %vm1091, %v802, 0
    %v1418 = vsel %vm1091, %v946, 0
    %1420 = vmatprep.subr.bf16.mxu0 0
    %1421 = vmatpush1.bf16.xpose.msra.mxu0 %v1418
    %1422 = vmatprep.subr.bf16.mxu0 0
    %1423 = vmatpush1.bf16.xpose.msra.mxu0 0
    %1424 = vmatprep.subr.bf16.mxu0 0
    %1425 = vmatpush1.bf16.xpose.msra.mxu0 0
    %1426 = vmatprep.subr.bf16.mxu0 0
    %1427 = vmatpush1.bf16.xpose.msra.mxu0 0
    %1428 = vmatprep.subr.bf16.mxu0 0
    %1429 = vmatpush1.bf16.xpose.msra.mxu0 0
    %1430 = vmatprep.subr.bf16.mxu0 0
    %1431 = vmatpush1.bf16.xpose.msra.mxu0 0
    %1432 = vmatprep.subr.bf16.mxu0 0
    %1433 = vmatpush1.bf16.xpose.msra.mxu0 0
    %1434 = vmatprep.subr.bf16.mxu0 0
    %1435 = vmatpush1.bf16.xpose.msra.mxu0 0
    %1436 = vmatprep.subr.bf16.mxu0 0
    %1437 = vmatpush1.bf16.xpose.msra.mxu0 0
    %1438 = vmatprep.subr.bf16.mxu0 0
    %1439 = vmatpush1.bf16.xpose.msra.mxu0 0
    %1440 = vmatprep.subr.bf16.mxu0 0
    %1441 = vmatpush1.bf16.xpose.msra.mxu0 0
    %1442 = vmatprep.subr.bf16.mxu0 0
    %1443 = vmatpush1.bf16.xpose.msra.mxu0 0
    %1444 = vmatprep.subr.bf16.mxu0 0
    %1445 = vmatpush1.bf16.xpose.msra.mxu0 0
    %1446 = vmatprep.subr.bf16.mxu0 0
    %1447 = vmatpush1.bf16.xpose.msra.mxu0 0
    %1448 = vmatprep.subr.bf16.mxu0 0
    %1449 = vmatpush1.bf16.xpose.msra.mxu0 0
    %1450 = vmatprep.subr.bf16.mxu0 0
    %1451 = vmatpush1.bf16.xpose.msra.mxu0 0
    %1452 = vmatprep.mubr.bf16.mxu0 0
    %1453 = vmatmul.mubr.bf16.gmra.mrb[0].mxu0 %v1415
    %v1454 = vpop.f32.mrb[0].mxu0
    %v1455 = vadd.f32 %v111, %v1454
    %v1456 = vpop.f32.mrb[0].mxu0
    %v1457 = vpop.f32.mrb[0].mxu0
    %v1458 = vpop.f32.mrb[0].mxu0
    %1459 = vdwg.mxu0
    %v1460 = vsel %vm1091, %v1133, -inf
    %1461 = vmax.xlane.f32.xlu0 %v1460
    %v1462 = vpop.xlane.xlu0 %1461
    %v1463 = vsel %vm1091, %v1179, -inf
    %1464 = vmax.xlane.f32.xlu0 %v1463
    %v1465 = vpop.xlane.xlu0 %1464
    %v1466 = vsel %vm1091, %v1225, -inf
    %1467 = vmax.xlane.f32.xlu0 %v1466
    %v1468 = vpop.xlane.xlu0 %1467
    %v1469 = vsel %vm1091, %v1271, -inf
    %1470 = vmax.xlane.f32.xlu0 %v1469
    %v1471 = vpop.xlane.xlu0 %1470
    %v1472 = vsel %vm1091, %v1317, -inf
    %1473 = vmax.xlane.f32.xlu0 %v1472
    %v1474 = vpop.xlane.xlu0 %1473
    %v1475 = vsel %vm1091, %v1363, -inf
    %1476 = vmax.xlane.f32.xlu0 %v1475
    %v1477 = vpop.xlane.xlu0 %1476
    %v1478 = vsel %vm1091, %v1409, -inf
    %1479 = vmax.xlane.f32.xlu0 %v1478
    %v1480 = vpop.xlane.xlu0 %1479
    %v1481 = vsel %vm1091, %v1455, -inf
    %1482 = vmax.xlane.f32.xlu0 %v1481
    %v1483 = vpop.xlane.xlu0 %1482
    %v1484 = vsub.f32 %v1133, %v1462
    %v1485 = vsub.f32 %v1179, %v1465
    %v1486 = vsub.f32 %v1225, %v1468
    %v1487 = vsub.f32 %v1271, %v1471
    %v1488 = vsub.f32 %v1317, %v1474
    %v1489 = vsub.f32 %v1363, %v1477
    %v1490 = vsub.f32 %v1409, %v1480
    %v1491 = vsub.f32 %v1455, %v1483
    %v1492 = vmul.f32 %v1484, 1.442695
    %v1493 = vpow.pop %v1492
    %v1494 = vmul.f32 %v1485, 1.442695
    %v1495 = vpow.pop %v1494
    %v1496 = vmul.f32 %v1486, 1.442695
    %v1497 = vpow.pop %v1496
    %v1498 = vmul.f32 %v1487, 1.442695
    %v1499 = vpow.pop %v1498
    %v1500 = vmul.f32 %v1488, 1.442695
    %v1501 = vpow.pop %v1500
    %v1502 = vmul.f32 %v1489, 1.442695
    %v1503 = vpow.pop %v1502
    %v1504 = vmul.f32 %v1490, 1.442695
    %v1505 = vpow.pop %v1504
    %v1506 = vmul.f32 %v1491, 1.442695
    %v1507 = vpow.pop %v1506
    %v1508 = vsel %vm1091, %v1493, 0.0
    %1509 = vadd.xlane.f32.xlu0 %v1508
    %v1510 = vpop.xlane.xlu0 %1509
    %v1511 = vsel %vm1091, %v1495, 0.0
    %1512 = vadd.xlane.f32.xlu0 %v1511
    %v1513 = vpop.xlane.xlu0 %1512
    %v1514 = vsel %vm1091, %v1497, 0.0
    %1515 = vadd.xlane.f32.xlu0 %v1514
    %v1516 = vpop.xlane.xlu0 %1515
    %v1517 = vsel %vm1091, %v1499, 0.0
    %1518 = vadd.xlane.f32.xlu0 %v1517
    %v1519 = vpop.xlane.xlu0 %1518
    %v1520 = vsel %vm1091, %v1501, 0.0
    %1521 = vadd.xlane.f32.xlu0 %v1520
    %v1522 = vpop.xlane.xlu0 %1521
    %v1523 = vsel %vm1091, %v1503, 0.0
    %1524 = vadd.xlane.f32.xlu0 %v1523
    %v1525 = vpop.xlane.xlu0 %1524
    %v1526 = vsel %vm1091, %v1505, 0.0
    %1527 = vadd.xlane.f32.xlu0 %v1526
    %v1528 = vpop.xlane.xlu0 %1527
    %v1529 = vsel %vm1091, %v1507, 0.0
    %1530 = vadd.xlane.f32.xlu0 %v1529
    %v1531 = vpop.xlane.xlu0 %1530
    %v1532 = vrcp.pop %v1510
    %v1533 = vrcp.pop %v1513
    %v1534 = vrcp.pop %v1516
    %v1535 = vrcp.pop %v1519
    %v1536 = vrcp.pop %v1522
    %v1537 = vrcp.pop %v1525
    %v1538 = vrcp.pop %v1528
    %v1539 = vrcp.pop %v1531
    %v1540 = vmul.f32 %v1493, %v1532
    %v1541 = vmul.f32 %v1495, %v1533
    %v1542 = vmul.f32 %v1497, %v1534
    %v1543 = vmul.f32 %v1499, %v1535
    %v1544 = vmul.f32 %v1501, %v1536
    %v1545 = vmul.f32 %v1503, %v1537
    %v1546 = vmul.f32 %v1505, %v1538
    %v1547 = vmul.f32 %v1507, %v1539
    %v1548 = vpack.c.bf16 %v1540, %v1540
    %v1549 = vpack.c.bf16 %v1541, %v1541
    %v1550 = vpack.c.bf16 %v1542, %v1542
    %v1551 = vpack.c.bf16 %v1543, %v1543
    %v1552 = vpack.c.bf16 %v1544, %v1544
    %v1553 = vpack.c.bf16 %v1545, %v1545
    %v1554 = vpack.c.bf16 %v1546, %v1546
    %v1555 = vpack.c.bf16 %v1547, %v1547
    %v1557 = vsel %vm1091, %v1548, 0
    %vm1559 = vcmask 1043456
    %v1561 = vsel %vm1559, %v1083, 0
    %1563 = vmatprep.subr.bf16.mxu0 0
    %1564 = vmatpush1.bf16.msra.mxu0 %v1561
    %1565 = vmatprep.subr.bf16.mxu0 0
    %1566 = vmatpush1.bf16.msra.mxu0 0
    %1567 = vmatprep.subr.bf16.mxu0 0
    %1568 = vmatpush1.bf16.msra.mxu0 0
    %1569 = vmatprep.subr.bf16.mxu0 0
    %1570 = vmatpush1.bf16.msra.mxu0 0
    %1571 = vmatprep.subr.bf16.mxu0 0
    %1572 = vmatpush1.bf16.msra.mxu0 0
    %1573 = vmatprep.subr.bf16.mxu0 0
    %1574 = vmatpush1.bf16.msra.mxu0 0
    %1575 = vmatprep.subr.bf16.mxu0 0
    %1576 = vmatpush1.bf16.msra.mxu0 0
    %1577 = vmatprep.subr.bf16.mxu0 0
    %1578 = vmatpush1.bf16.msra.mxu0 0
    %1579 = vmatprep.subr.bf16.mxu0 0
    %1580 = vmatpush1.bf16.msra.mxu0 0
    %1581 = vmatprep.subr.bf16.mxu0 0
    %1582 = vmatpush1.bf16.msra.mxu0 0
    %1583 = vmatprep.subr.bf16.mxu0 0
    %1584 = vmatpush1.bf16.msra.mxu0 0
    %1585 = vmatprep.subr.bf16.mxu0 0
    %1586 = vmatpush1.bf16.msra.mxu0 0
    %1587 = vmatprep.subr.bf16.mxu0 0
    %1588 = vmatpush1.bf16.msra.mxu0 0
    %1589 = vmatprep.subr.bf16.mxu0 0
    %1590 = vmatpush1.bf16.msra.mxu0 0
    %1591 = vmatprep.subr.bf16.mxu0 0
    %1592 = vmatpush1.bf16.msra.mxu0 0
    %1593 = vmatprep.subr.bf16.mxu0 0
    %1594 = vmatpush1.bf16.msra.mxu0 0
    %1595 = vmatprep.mubr.bf16.mxu0 0
    %1596 = vmatmul.mubr.bf16.gmra.mrb[0].mxu0 %v1557
    %v1597 = vpop.f32.mrb[0].mxu0
    %v1598 = vadd.f32 0.0, %v1597
    %v1599 = vpop.f32.mrb[0].mxu0
    %v1600 = vpop.f32.mrb[0].mxu0
    %v1601 = vpop.f32.mrb[0].mxu0
    %1602 = vdwg.mxu0
    %v1604 = vsel %vm1091, %v1549, 0
    %v1607 = vsel %vm1559, %v1084, 0
    %1609 = vmatprep.subr.bf16.mxu0 0
    %1610 = vmatpush1.bf16.msra.mxu0 %v1607
    %1611 = vmatprep.subr.bf16.mxu0 0
    %1612 = vmatpush1.bf16.msra.mxu0 0
    %1613 = vmatprep.subr.bf16.mxu0 0
    %1614 = vmatpush1.bf16.msra.mxu0 0
    %1615 = vmatprep.subr.bf16.mxu0 0
    %1616 = vmatpush1.bf16.msra.mxu0 0
    %1617 = vmatprep.subr.bf16.mxu0 0
    %1618 = vmatpush1.bf16.msra.mxu0 0
    %1619 = vmatprep.subr.bf16.mxu0 0
    %1620 = vmatpush1.bf16.msra.mxu0 0
    %1621 = vmatprep.subr.bf16.mxu0 0
    %1622 = vmatpush1.bf16.msra.mxu0 0
    %1623 = vmatprep.subr.bf16.mxu0 0
    %1624 = vmatpush1.bf16.msra.mxu0 0
    %1625 = vmatprep.subr.bf16.mxu0 0
    %1626 = vmatpush1.bf16.msra.mxu0 0
    %1627 = vmatprep.subr.bf16.mxu0 0
    %1628 = vmatpush1.bf16.msra.mxu0 0
    %1629 = vmatprep.subr.bf16.mxu0 0
    %1630 = vmatpush1.bf16.msra.mxu0 0
    %1631 = vmatprep.subr.bf16.mxu0 0
    %1632 = vmatpush1.bf16.msra.mxu0 0
    %1633 = vmatprep.subr.bf16.mxu0 0
    %1634 = vmatpush1.bf16.msra.mxu0 0
    %1635 = vmatprep.subr.bf16.mxu0 0
    %1636 = vmatpush1.bf16.msra.mxu0 0
    %1637 = vmatprep.subr.bf16.mxu0 0
    %1638 = vmatpush1.bf16.msra.mxu0 0
    %1639 = vmatprep.subr.bf16.mxu0 0
    %1640 = vmatpush1.bf16.msra.mxu0 0
    %1641 = vmatprep.mubr.bf16.mxu0 0
    %1642 = vmatmul.mubr.bf16.gmra.mrb[0].mxu0 %v1604
    %v1643 = vpop.f32.mrb[0].mxu0
    %v1644 = vadd.f32 0.0, %v1643
    %v1645 = vpop.f32.mrb[0].mxu0
    %v1646 = vpop.f32.mrb[0].mxu0
    %v1647 = vpop.f32.mrb[0].mxu0
    %1648 = vdwg.mxu0
    %v1650 = vsel %vm1091, %v1550, 0
    %v1653 = vsel %vm1559, %v1085, 0
    %1655 = vmatprep.subr.bf16.mxu0 0
    %1656 = vmatpush1.bf16.msra.mxu0 %v1653
    %1657 = vmatprep.subr.bf16.mxu0 0
    %1658 = vmatpush1.bf16.msra.mxu0 0
    %1659 = vmatprep.subr.bf16.mxu0 0
    %1660 = vmatpush1.bf16.msra.mxu0 0
    %1661 = vmatprep.subr.bf16.mxu0 0
    %1662 = vmatpush1.bf16.msra.mxu0 0
    %1663 = vmatprep.subr.bf16.mxu0 0
    %1664 = vmatpush1.bf16.msra.mxu0 0
    %1665 = vmatprep.subr.bf16.mxu0 0
    %1666 = vmatpush1.bf16.msra.mxu0 0
    %1667 = vmatprep.subr.bf16.mxu0 0
    %1668 = vmatpush1.bf16.msra.mxu0 0
    %1669 = vmatprep.subr.bf16.mxu0 0
    %1670 = vmatpush1.bf16.msra.mxu0 0
    %1671 = vmatprep.subr.bf16.mxu0 0
    %1672 = vmatpush1.bf16.msra.mxu0 0
    %1673 = vmatprep.subr.bf16.mxu0 0
    %1674 = vmatpush1.bf16.msra.mxu0 0
    %1675 = vmatprep.subr.bf16.mxu0 0
    %1676 = vmatpush1.bf16.msra.mxu0 0
    %1677 = vmatprep.subr.bf16.mxu0 0
    %1678 = vmatpush1.bf16.msra.mxu0 0
    %1679 = vmatprep.subr.bf16.mxu0 0
    %1680 = vmatpush1.bf16.msra.mxu0 0
    %1681 = vmatprep.subr.bf16.mxu0 0
    %1682 = vmatpush1.bf16.msra.mxu0 0
    %1683 = vmatprep.subr.bf16.mxu0 0
    %1684 = vmatpush1.bf16.msra.mxu0 0
    %1685 = vmatprep.subr.bf16.mxu0 0
    %1686 = vmatpush1.bf16.msra.mxu0 0
    %1687 = vmatprep.mubr.bf16.mxu0 0
    %1688 = vmatmul.mubr.bf16.gmra.mrb[0].mxu0 %v1650
    %v1689 = vpop.f32.mrb[0].mxu0
    %v1690 = vadd.f32 0.0, %v1689
    %v1691 = vpop.f32.mrb[0].mxu0
    %v1692 = vpop.f32.mrb[0].mxu0
    %v1693 = vpop.f32.mrb[0].mxu0
    %1694 = vdwg.mxu0
    %v1696 = vsel %vm1091, %v1551, 0
    %v1699 = vsel %vm1559, %v1086, 0
    %1701 = vmatprep.subr.bf16.mxu0 0
    %1702 = vmatpush1.bf16.msra.mxu0 %v1699
    %1703 = vmatprep.subr.bf16.mxu0 0
    %1704 = vmatpush1.bf16.msra.mxu0 0
    %1705 = vmatprep.subr.bf16.mxu0 0
    %1706 = vmatpush1.bf16.msra.mxu0 0
    %1707 = vmatprep.subr.bf16.mxu0 0
    %1708 = vmatpush1.bf16.msra.mxu0 0
    %1709 = vmatprep.subr.bf16.mxu0 0
    %1710 = vmatpush1.bf16.msra.mxu0 0
    %1711 = vmatprep.subr.bf16.mxu0 0
    %1712 = vmatpush1.bf16.msra.mxu0 0
    %1713 = vmatprep.subr.bf16.mxu0 0
    %1714 = vmatpush1.bf16.msra.mxu0 0
    %1715 = vmatprep.subr.bf16.mxu0 0
    %1716 = vmatpush1.bf16.msra.mxu0 0
    %1717 = vmatprep.subr.bf16.mxu0 0
    %1718 = vmatpush1.bf16.msra.mxu0 0
    %1719 = vmatprep.subr.bf16.mxu0 0
    %1720 = vmatpush1.bf16.msra.mxu0 0
    %1721 = vmatprep.subr.bf16.mxu0 0
    %1722 = vmatpush1.bf16.msra.mxu0 0
    %1723 = vmatprep.subr.bf16.mxu0 0
    %1724 = vmatpush1.bf16.msra.mxu0 0
    %1725 = vmatprep.subr.bf16.mxu0 0
    %1726 = vmatpush1.bf16.msra.mxu0 0
    %1727 = vmatprep.subr.bf16.mxu0 0
    %1728 = vmatpush1.bf16.msra.mxu0 0
    %1729 = vmatprep.subr.bf16.mxu0 0
    %1730 = vmatpush1.bf16.msra.mxu0 0
    %1731 = vmatprep.subr.bf16.mxu0 0
    %1732 = vmatpush1.bf16.msra.mxu0 0
    %1733 = vmatprep.mubr.bf16.mxu0 0
    %1734 = vmatmul.mubr.bf16.gmra.mrb[0].mxu0 %v1696
    %v1735 = vpop.f32.mrb[0].mxu0
    %v1736 = vadd.f32 0.0, %v1735
    %v1737 = vpop.f32.mrb[0].mxu0
    %v1738 = vpop.f32.mrb[0].mxu0
    %v1739 = vpop.f32.mrb[0].mxu0
    %1740 = vdwg.mxu0
    %v1742 = vsel %vm1091, %v1552, 0
    %v1745 = vsel %vm1559, %v1087, 0
    %1747 = vmatprep.subr.bf16.mxu0 0
    %1748 = vmatpush1.bf16.msra.mxu0 %v1745
    %1749 = vmatprep.subr.bf16.mxu0 0
    %1750 = vmatpush1.bf16.msra.mxu0 0
    %1751 = vmatprep.subr.bf16.mxu0 0
    %1752 = vmatpush1.bf16.msra.mxu0 0
    %1753 = vmatprep.subr.bf16.mxu0 0
    %1754 = vmatpush1.bf16.msra.mxu0 0
    %1755 = vmatprep.subr.bf16.mxu0 0
    %1756 = vmatpush1.bf16.msra.mxu0 0
    %1757 = vmatprep.subr.bf16.mxu0 0
    %1758 = vmatpush1.bf16.msra.mxu0 0
    %1759 = vmatprep.subr.bf16.mxu0 0
    %1760 = vmatpush1.bf16.msra.mxu0 0
    %1761 = vmatprep.subr.bf16.mxu0 0
    %1762 = vmatpush1.bf16.msra.mxu0 0
    %1763 = vmatprep.subr.bf16.mxu0 0
    %1764 = vmatpush1.bf16.msra.mxu0 0
    %1765 = vmatprep.subr.bf16.mxu0 0
    %1766 = vmatpush1.bf16.msra.mxu0 0
    %1767 = vmatprep.subr.bf16.mxu0 0
    %1768 = vmatpush1.bf16.msra.mxu0 0
    %1769 = vmatprep.subr.bf16.mxu0 0
    %1770 = vmatpush1.bf16.msra.mxu0 0
    %1771 = vmatprep.subr.bf16.mxu0 0
    %1772 = vmatpush1.bf16.msra.mxu0 0
    %1773 = vmatprep.subr.bf16.mxu0 0
    %1774 = vmatpush1.bf16.msra.mxu0 0
    %1775 = vmatprep.subr.bf16.mxu0 0
    %1776 = vmatpush1.bf16.msra.mxu0 0
    %1777 = vmatprep.subr.bf16.mxu0 0
    %1778 = vmatpush1.bf16.msra.mxu0 0
    %1779 = vmatprep.mubr.bf16.mxu0 0
    %1780 = vmatmul.mubr.bf16.gmra.mrb[0].mxu0 %v1742
    %v1781 = vpop.f32.mrb[0].mxu0
    %v1782 = vadd.f32 0.0, %v1781
    %v1783 = vpop.f32.mrb[0].mxu0
    %v1784 = vpop.f32.mrb[0].mxu0
    %v1785 = vpop.f32.mrb[0].mxu0
    %1786 = vdwg.mxu0
    %v1788 = vsel %vm1091, %v1553, 0
    %v1791 = vsel %vm1559, %v1088, 0
    %1793 = vmatprep.subr.bf16.mxu0 0
    %1794 = vmatpush1.bf16.msra.mxu0 %v1791
    %1795 = vmatprep.subr.bf16.mxu0 0
    %1796 = vmatpush1.bf16.msra.mxu0 0
    %1797 = vmatprep.subr.bf16.mxu0 0
    %1798 = vmatpush1.bf16.msra.mxu0 0
    %1799 = vmatprep.subr.bf16.mxu0 0
    %1800 = vmatpush1.bf16.msra.mxu0 0
    %1801 = vmatprep.subr.bf16.mxu0 0
    %1802 = vmatpush1.bf16.msra.mxu0 0
    %1803 = vmatprep.subr.bf16.mxu0 0
    %1804 = vmatpush1.bf16.msra.mxu0 0
    %1805 = vmatprep.subr.bf16.mxu0 0
    %1806 = vmatpush1.bf16.msra.mxu0 0
    %1807 = vmatprep.subr.bf16.mxu0 0
    %1808 = vmatpush1.bf16.msra.mxu0 0
    %1809 = vmatprep.subr.bf16.mxu0 0
    %1810 = vmatpush1.bf16.msra.mxu0 0
    %1811 = vmatprep.subr.bf16.mxu0 0
    %1812 = vmatpush1.bf16.msra.mxu0 0
    %1813 = vmatprep.subr.bf16.mxu0 0
    %1814 = vmatpush1.bf16.msra.mxu0 0
    %1815 = vmatprep.subr.bf16.mxu0 0
    %1816 = vmatpush1.bf16.msra.mxu0 0
    %1817 = vmatprep.subr.bf16.mxu0 0
    %1818 = vmatpush1.bf16.msra.mxu0 0
    %1819 = vmatprep.subr.bf16.mxu0 0
    %1820 = vmatpush1.bf16.msra.mxu0 0
    %1821 = vmatprep.subr.bf16.mxu0 0
    %1822 = vmatpush1.bf16.msra.mxu0 0
    %1823 = vmatprep.subr.bf16.mxu0 0
    %1824 = vmatpush1.bf16.msra.mxu0 0
    %1825 = vmatprep.mubr.bf16.mxu0 0
    %1826 = vmatmul.mubr.bf16.gmra.mrb[0].mxu0 %v1788
    %v1827 = vpop.f32.mrb[0].mxu0
    %v1828 = vadd.f32 0.0, %v1827
    %v1829 = vpop.f32.mrb[0].mxu0
    %v1830 = vpop.f32.mrb[0].mxu0
    %v1831 = vpop.f32.mrb[0].mxu0
    %1832 = vdwg.mxu0
    %v1834 = vsel %vm1091, %v1554, 0
    %v1837 = vsel %vm1559, %v1089, 0
    %1839 = vmatprep.subr.bf16.mxu0 0
    %1840 = vmatpush1.bf16.msra.mxu0 %v1837
    %1841 = vmatprep.subr.bf16.mxu0 0
    %1842 = vmatpush1.bf16.msra.mxu0 0
    %1843 = vmatprep.subr.bf16.mxu0 0
    %1844 = vmatpush1.bf16.msra.mxu0 0
    %1845 = vmatprep.subr.bf16.mxu0 0
    %1846 = vmatpush1.bf16.msra.mxu0 0
    %1847 = vmatprep.subr.bf16.mxu0 0
    %1848 = vmatpush1.bf16.msra.mxu0 0
    %1849 = vmatprep.subr.bf16.mxu0 0
    %1850 = vmatpush1.bf16.msra.mxu0 0
    %1851 = vmatprep.subr.bf16.mxu0 0
    %1852 = vmatpush1.bf16.msra.mxu0 0
    %1853 = vmatprep.subr.bf16.mxu0 0
    %1854 = vmatpush1.bf16.msra.mxu0 0
    %1855 = vmatprep.subr.bf16.mxu0 0
    %1856 = vmatpush1.bf16.msra.mxu0 0
    %1857 = vmatprep.subr.bf16.mxu0 0
    %1858 = vmatpush1.bf16.msra.mxu0 0
    %1859 = vmatprep.subr.bf16.mxu0 0
    %1860 = vmatpush1.bf16.msra.mxu0 0
    %1861 = vmatprep.subr.bf16.mxu0 0
    %1862 = vmatpush1.bf16.msra.mxu0 0
    %1863 = vmatprep.subr.bf16.mxu0 0
    %1864 = vmatpush1.bf16.msra.mxu0 0
    %1865 = vmatprep.subr.bf16.mxu0 0
    %1866 = vmatpush1.bf16.msra.mxu0 0
    %1867 = vmatprep.subr.bf16.mxu0 0
    %1868 = vmatpush1.bf16.msra.mxu0 0
    %1869 = vmatprep.subr.bf16.mxu0 0
    %1870 = vmatpush1.bf16.msra.mxu0 0
    %1871 = vmatprep.mubr.bf16.mxu0 0
    %1872 = vmatmul.mubr.bf16.gmra.mrb[0].mxu0 %v1834
    %v1873 = vpop.f32.mrb[0].mxu0
    %v1874 = vadd.f32 0.0, %v1873
    %v1875 = vpop.f32.mrb[0].mxu0
    %v1876 = vpop.f32.mrb[0].mxu0
    %v1877 = vpop.f32.mrb[0].mxu0
    %1878 = vdwg.mxu0
    %v1880 = vsel %vm1091, %v1555, 0
    %v1883 = vsel %vm1559, %v1090, 0
    %1885 = vmatprep.subr.bf16.mxu0 0
    %1886 = vmatpush1.bf16.msra.mxu0 %v1883
    %1887 = vmatprep.subr.bf16.mxu0 0
    %1888 = vmatpush1.bf16.msra.mxu0 0
    %1889 = vmatprep.subr.bf16.mxu0 0
    %1890 = vmatpush1.bf16.msra.mxu0 0
    %1891 = vmatprep.subr.bf16.mxu0 0
    %1892 = vmatpush1.bf16.msra.mxu0 0
    %1893 = vmatprep.subr.bf16.mxu0 0
    %1894 = vmatpush1.bf16.msra.mxu0 0
    %1895 = vmatprep.subr.bf16.mxu0 0
    %1896 = vmatpush1.bf16.msra.mxu0 0
    %1897 = vmatprep.subr.bf16.mxu0 0
    %1898 = vmatpush1.bf16.msra.mxu0 0
    %1899 = vmatprep.subr.bf16.mxu0 0
    %1900 = vmatpush1.bf16.msra.mxu0 0
    %1901 = vmatprep.subr.bf16.mxu0 0
    %1902 = vmatpush1.bf16.msra.mxu0 0
    %1903 = vmatprep.subr.bf16.mxu0 0
    %1904 = vmatpush1.bf16.msra.mxu0 0
    %1905 = vmatprep.subr.bf16.mxu0 0
    %1906 = vmatpush1.bf16.msra.mxu0 0
    %1907 = vmatprep.subr.bf16.mxu0 0
    %1908 = vmatpush1.bf16.msra.mxu0 0
    %1909 = vmatprep.subr.bf16.mxu0 0
    %1910 = vmatpush1.bf16.msra.mxu0 0
    %1911 = vmatprep.subr.bf16.mxu0 0
    %1912 = vmatpush1.bf16.msra.mxu0 0
    %1913 = vmatprep.subr.bf16.mxu0 0
    %1914 = vmatpush1.bf16.msra.mxu0 0
    %1915 = vmatprep.subr.bf16.mxu0 0
    %1916 = vmatpush1.bf16.msra.mxu0 0
    %1917 = vmatprep.mubr.bf16.mxu0 0
    %1918 = vmatmul.mubr.bf16.gmra.mrb[0].mxu0 %v1880
    %v1919 = vpop.f32.mrb[0].mxu0
    %v1920 = vadd.f32 0.0, %v1919
    %v1921 = vpop.f32.mrb[0].mxu0
    %v1922 = vpop.f32.mrb[0].mxu0
    %v1923 = vpop.f32.mrb[0].mxu0
    %1924 = vdwg.mxu0
    %v1925 = vcombine.low %v1598, %v1690
    %v1926 = vcombine.high %v1598, %v1690
    %v1928 = vunpack.c.l.s4 1983009808
    %v1929 = vunpack.c.0.s8 %v1928
    %v1930 = vlaneseq
    %v1931 = vshrl.u32 %v1930, 7
    %v1932 = vsub.s32 %v1929, %v1931
    %v1933 = vrot.slane %v1925, %v1932
    %v1935 = vunpack.c.l.s4 1983009808
    %v1936 = vunpack.c.0.s8 %v1935
    %v1937 = vlaneseq
    %v1938 = vshrl.u32 %v1937, 7
    %v1939 = vsub.s32 %v1936, %v1938
    %v1940 = vrot.slane %v1926, %v1939
    %v1941 = vcombine.low %v1644, %v1736
    %v1942 = vcombine.high %v1644, %v1736
    %v1944 = vunpack.c.l.s4 1983009808
    %v1945 = vunpack.c.0.s8 %v1944
    %v1946 = vlaneseq
    %v1947 = vshrl.u32 %v1946, 7
    %v1948 = vsub.s32 %v1945, %v1947
    %v1949 = vrot.slane %v1941, %v1948
    %v1951 = vunpack.c.l.s4 1983009808
    %v1952 = vunpack.c.0.s8 %v1951
    %v1953 = vlaneseq
    %v1954 = vshrl.u32 %v1953, 7
    %v1955 = vsub.s32 %v1952, %v1954
    %v1956 = vrot.slane %v1942, %v1955
    %v1957 = vcombine.low %v1933, %v1949
    %v1958 = vcombine.high %v1933, %v1949
    %v1960 = vunpack.c.l.s4 1934713408
    %v1961 = vunpack.c.0.s8 %v1960
    %v1962 = vlaneseq
    %v1963 = vshrl.u32 %v1962, 7
    %v1964 = vsub.s32 %v1961, %v1963
    %v1965 = vrot.slane %v1957, %v1964
    %v1967 = vunpack.c.l.s4 1934713408
    %v1968 = vunpack.c.0.s8 %v1967
    %v1969 = vlaneseq
    %v1970 = vshrl.u32 %v1969, 7
    %v1971 = vsub.s32 %v1968, %v1970
    %v1972 = vrot.slane %v1958, %v1971
    %v1973 = vcombine.low %v1940, %v1956
    %v1974 = vcombine.high %v1940, %v1956
    %v1976 = vunpack.c.l.s4 1934713408
    %v1977 = vunpack.c.0.s8 %v1976
    %v1978 = vlaneseq
    %v1979 = vshrl.u32 %v1978, 7
    %v1980 = vsub.s32 %v1977, %v1979
    %v1981 = vrot.slane %v1973, %v1980
    %v1983 = vunpack.c.l.s4 1934713408
    %v1984 = vunpack.c.0.s8 %v1983
    %v1985 = vlaneseq
    %v1986 = vshrl.u32 %v1985, 7
    %v1987 = vsub.s32 %v1984, %v1986
    %v1988 = vrot.slane %v1974, %v1987
    %v1989 = vcombine.high %v1965, 0.0
    %v1990 = vcombine.high %v1972, 0.0
    %v1991 = vcombine.high %v1981, 0.0
    %v1992 = vcombine.high %v1988, 0.0
    %v1993 = vcombine.low %v1782, %v1874
    %v1994 = vcombine.high %v1782, %v1874
    %v1996 = vunpack.c.l.s4 1983009808
    %v1997 = vunpack.c.0.s8 %v1996
    %v1998 = vlaneseq
    %v1999 = vshrl.u32 %v1998, 7
    %v2000 = vsub.s32 %v1997, %v1999
    %v2001 = vrot.slane %v1993, %v2000
    %v2003 = vunpack.c.l.s4 1983009808
    %v2004 = vunpack.c.0.s8 %v2003
    %v2005 = vlaneseq
    %v2006 = vshrl.u32 %v2005, 7
    %v2007 = vsub.s32 %v2004, %v2006
    %v2008 = vrot.slane %v1994, %v2007
    %v2009 = vcombine.low %v1828, %v1920
    %v2010 = vcombine.high %v1828, %v1920
    %v2012 = vunpack.c.l.s4 1983009808
    %v2013 = vunpack.c.0.s8 %v2012
    %v2014 = vlaneseq
    %v2015 = vshrl.u32 %v2014, 7
    %v2016 = vsub.s32 %v2013, %v2015
    %v2017 = vrot.slane %v2009, %v2016
    %v2019 = vunpack.c.l.s4 1983009808
    %v2020 = vunpack.c.0.s8 %v2019
    %v2021 = vlaneseq
    %v2022 = vshrl.u32 %v2021, 7
    %v2023 = vsub.s32 %v2020, %v2022
    %v2024 = vrot.slane %v2010, %v2023
    %v2025 = vcombine.low %v2001, %v2017
    %v2026 = vcombine.high %v2001, %v2017
    %v2028 = vunpack.c.l.s4 1934713408
    %v2029 = vunpack.c.0.s8 %v2028
    %v2030 = vlaneseq
    %v2031 = vshrl.u32 %v2030, 7
    %v2032 = vsub.s32 %v2029, %v2031
    %v2033 = vrot.slane %v2025, %v2032
    %v2035 = vunpack.c.l.s4 1934713408
    %v2036 = vunpack.c.0.s8 %v2035
    %v2037 = vlaneseq
    %v2038 = vshrl.u32 %v2037, 7
    %v2039 = vsub.s32 %v2036, %v2038
    %v2040 = vrot.slane %v2026, %v2039
    %v2041 = vcombine.low %v2008, %v2024
    %v2042 = vcombine.high %v2008, %v2024
    %v2044 = vunpack.c.l.s4 1934713408
    %v2045 = vunpack.c.0.s8 %v2044
    %v2046 = vlaneseq
    %v2047 = vshrl.u32 %v2046, 7
    %v2048 = vsub.s32 %v2045, %v2047
    %v2049 = vrot.slane %v2041, %v2048
    %v2051 = vunpack.c.l.s4 1934713408
    %v2052 = vunpack.c.0.s8 %v2051
    %v2053 = vlaneseq
    %v2054 = vshrl.u32 %v2053, 7
    %v2055 = vsub.s32 %v2052, %v2054
    %v2056 = vrot.slane %v2042, %v2055
    %v2057 = vcombine.high %v2033, 0.0
    %v2058 = vcombine.high %v2040, 0.0
    %v2059 = vcombine.high %v2049, 0.0
    %v2060 = vcombine.high %v2056, 0.0
    %v2061 = vcombine.low %v1965, %v1972
    %v2063 = vunpack.c.l.s4 1983009808
    %v2064 = vunpack.c.0.s8 %v2063
    %v2065 = vlaneseq
    %v2066 = vshrl.u32 %v2065, 7
    %v2067 = vsub.s32 %v2064, %v2066
    %v2068 = vrot.slane %v2061, %v2067
    %v2069 = vcombine.low %v1989, %v1990
    %v2071 = vunpack.c.l.s4 1983009808
    %v2072 = vunpack.c.0.s8 %v2071
    %v2073 = vlaneseq
    %v2074 = vshrl.u32 %v2073, 7
    %v2075 = vsub.s32 %v2072, %v2074
    %v2076 = vrot.slane %v2069, %v2075
    %v2077 = vcombine.low %v1981, %v1988
    %v2079 = vunpack.c.l.s4 1983009808
    %v2080 = vunpack.c.0.s8 %v2079
    %v2081 = vlaneseq
    %v2082 = vshrl.u32 %v2081, 7
    %v2083 = vsub.s32 %v2080, %v2082
    %v2084 = vrot.slane %v2077, %v2083
    %v2085 = vcombine.low %v1991, %v1992
    %v2087 = vunpack.c.l.s4 1983009808
    %v2088 = vunpack.c.0.s8 %v2087
    %v2089 = vlaneseq
    %v2090 = vshrl.u32 %v2089, 7
    %v2091 = vsub.s32 %v2088, %v2090
    %v2092 = vrot.slane %v2085, %v2091
    %v2093 = vcombine.low %v2068, %v2076
    %v2094 = vcombine.high %v2068, %v2076
    %v2096 = vunpack.c.l.s4 1934713408
    %v2097 = vunpack.c.0.s8 %v2096
    %v2098 = vlaneseq
    %v2099 = vshrl.u32 %v2098, 7
    %v2100 = vsub.s32 %v2097, %v2099
    %v2101 = vrot.slane %v2093, %v2100
    %v2103 = vunpack.c.l.s4 1934713408
    %v2104 = vunpack.c.0.s8 %v2103
    %v2105 = vlaneseq
    %v2106 = vshrl.u32 %v2105, 7
    %v2107 = vsub.s32 %v2104, %v2106
    %v2108 = vrot.slane %v2094, %v2107
    %v2109 = vcombine.low %v2084, %v2092
    %v2110 = vcombine.high %v2084, %v2092
    %v2112 = vunpack.c.l.s4 1934713408
    %v2113 = vunpack.c.0.s8 %v2112
    %v2114 = vlaneseq
    %v2115 = vshrl.u32 %v2114, 7
    %v2116 = vsub.s32 %v2113, %v2115
    %v2117 = vrot.slane %v2109, %v2116
    %v2119 = vunpack.c.l.s4 1934713408
    %v2120 = vunpack.c.0.s8 %v2119
    %v2121 = vlaneseq
    %v2122 = vshrl.u32 %v2121, 7
    %v2123 = vsub.s32 %v2120, %v2122
    %v2124 = vrot.slane %v2110, %v2123
    %v2125 = vcombine.low %v2101, %v2117
    %v2126 = vcombine.high %v2101, %v2117
    %v2127 = vcombine.low %v2108, %v2124
    %v2128 = vcombine.high %v2108, %v2124
    %v2129 = vcombine.low %v2033, %v2040
    %v2131 = vunpack.c.l.s4 1983009808
    %v2132 = vunpack.c.0.s8 %v2131
    %v2133 = vlaneseq
    %v2134 = vshrl.u32 %v2133, 7
    %v2135 = vsub.s32 %v2132, %v2134
    %v2136 = vrot.slane %v2129, %v2135
    %v2137 = vcombine.low %v2057, %v2058
    %v2139 = vunpack.c.l.s4 1983009808
    %v2140 = vunpack.c.0.s8 %v2139
    %v2141 = vlaneseq
    %v2142 = vshrl.u32 %v2141, 7
    %v2143 = vsub.s32 %v2140, %v2142
    %v2144 = vrot.slane %v2137, %v2143
    %v2145 = vcombine.low %v2049, %v2056
    %v2147 = vunpack.c.l.s4 1983009808
    %v2148 = vunpack.c.0.s8 %v2147
    %v2149 = vlaneseq
    %v2150 = vshrl.u32 %v2149, 7
    %v2151 = vsub.s32 %v2148, %v2150
    %v2152 = vrot.slane %v2145, %v2151
    %v2153 = vcombine.low %v2059, %v2060
    %v2155 = vunpack.c.l.s4 1983009808
    %v2156 = vunpack.c.0.s8 %v2155
    %v2157 = vlaneseq
    %v2158 = vshrl.u32 %v2157, 7
    %v2159 = vsub.s32 %v2156, %v2158
    %v2160 = vrot.slane %v2153, %v2159
    %v2161 = vcombine.low %v2136, %v2144
    %v2162 = vcombine.high %v2136, %v2144
    %v2164 = vunpack.c.l.s4 1934713408
    %v2165 = vunpack.c.0.s8 %v2164
    %v2166 = vlaneseq
    %v2167 = vshrl.u32 %v2166, 7
    %v2168 = vsub.s32 %v2165, %v2167
    %v2169 = vrot.slane %v2161, %v2168
    %v2171 = vunpack.c.l.s4 1934713408
    %v2172 = vunpack.c.0.s8 %v2171
    %v2173 = vlaneseq
    %v2174 = vshrl.u32 %v2173, 7
    %v2175 = vsub.s32 %v2172, %v2174
    %v2176 = vrot.slane %v2162, %v2175
    %v2177 = vcombine.low %v2152, %v2160
    %v2178 = vcombine.high %v2152, %v2160
    %v2180 = vunpack.c.l.s4 1934713408
    %v2181 = vunpack.c.0.s8 %v2180
    %v2182 = vlaneseq
    %v2183 = vshrl.u32 %v2182, 7
    %v2184 = vsub.s32 %v2181, %v2183
    %v2185 = vrot.slane %v2177, %v2184
    %v2187 = vunpack.c.l.s4 1934713408
    %v2188 = vunpack.c.0.s8 %v2187
    %v2189 = vlaneseq
    %v2190 = vshrl.u32 %v2189, 7
    %v2191 = vsub.s32 %v2188, %v2190
    %v2192 = vrot.slane %v2178, %v2191
    %v2193 = vcombine.low %v2169, %v2185
    %v2194 = vcombine.high %v2169, %v2185
    %v2195 = vcombine.low %v2176, %v2192
    %v2196 = vcombine.high %v2176, %v2192
    %2199 = vrot.lane.b32.xlu0 %v2126, 8
    %v2200 = vpop.permute.xlu0 %2199
    %2201 = vrot.lane.b32.xlu0 %v2194, 8
    %v2202 = vpop.permute.xlu0 %2201
    %2207 = vrot.lane.b32.xlu0 %v2127, 16
    %v2208 = vpop.permute.xlu0 %2207
    %2209 = vrot.lane.b32.xlu0 %v2195, 16
    %v2210 = vpop.permute.xlu0 %2209
    %2215 = vrot.lane.b32.xlu0 %v2128, 24
    %v2216 = vpop.permute.xlu0 %2215
    %2217 = vrot.lane.b32.xlu0 %v2196, 24
    %v2218 = vpop.permute.xlu0 %2217
    %v2221 = vsel %vm1091, %v2125, %v2200
    %v2222 = vsel %vm1091, %v2193, %v2202
    %vm2223 = vcmask 130048
    %v2224 = vsel %vm2223, %v2221, %v2208
    %v2225 = vsel %vm2223, %v2222, %v2210
    %vm2226 = vcmask 195584
    %v2227 = vsel %vm2226, %v2224, %v2216
    %v2228 = vsel %vm2226, %v2225, %v2218
    %v2229 = vpack.c.bf16 %v2228, %v2227
    %v2230 = vld [vmem:[%s5] sm:$0xf]
    %v2231 = vld [vmem:[%s5 + $0x4] sm:$0xf]
    %v2232 = vld [vmem:[%s5 + $0x8] sm:$0xf]
    %v2233 = vld [vmem:[%s5 + $0xc] sm:$0xf]
    %v2234 = vlaneseq
    %v2235 = vshrl.u32 %v2234, 7
    %v2236 = vsub.s32 0, %v2235
    %v2237 = vrot.slane %v114, %v2236
    %v2242 = vunpack.c.l.b16 %v2230
    %v2243 = vunpack.c.l.b16 %v2231
    %v2244 = vunpack.c.l.b16 %v2232
    %v2245 = vunpack.c.l.b16 %v2233
    %v2246 = vpack.c.b16 %v2243, %v2242
    %v2247 = vpack.c.b16 %v2245, %v2244
    %v2251 = vsel %vm40, %v2229, 0
    %2253 = vmatprep.subr.bf16.mxu0 0
    %2254 = vmatpush1.bf16.msra.mxu0 %v2246
    %2255 = vmatprep.subr.bf16.mxu0 0
    %2256 = vmatpush1.bf16.msra.mxu0 %v2247
    %2257 = vmatprep.subr.bf16.mxu0 0
    %2258 = vmatpush1.bf16.msra.mxu0 0
    %2259 = vmatprep.subr.bf16.mxu0 0
    %2260 = vmatpush1.bf16.msra.mxu0 0
    %2261 = vmatprep.subr.bf16.mxu0 0
    %2262 = vmatpush1.bf16.msra.mxu0 0
    %2263 = vmatprep.subr.bf16.mxu0 0
    %2264 = vmatpush1.bf16.msra.mxu0 0
    %2265 = vmatprep.subr.bf16.mxu0 0
    %2266 = vmatpush1.bf16.msra.mxu0 0
    %2267 = vmatprep.subr.bf16.mxu0 0
    %2268 = vmatpush1.bf16.msra.mxu0 0
    %2269 = vmatprep.subr.bf16.mxu0 0
    %2270 = vmatpush1.bf16.msra.mxu0 0
    %2271 = vmatprep.subr.bf16.mxu0 0
    %2272 = vmatpush1.bf16.msra.mxu0 0
    %2273 = vmatprep.subr.bf16.mxu0 0
    %2274 = vmatpush1.bf16.msra.mxu0 0
    %2275 = vmatprep.subr.bf16.mxu0 0
    %2276 = vmatpush1.bf16.msra.mxu0 0
    %2277 = vmatprep.subr.bf16.mxu0 0
    %2278 = vmatpush1.bf16.msra.mxu0 0
    %2279 = vmatprep.subr.bf16.mxu0 0
    %2280 = vmatpush1.bf16.msra.mxu0 0
    %2281 = vmatprep.subr.bf16.mxu0 0
    %2282 = vmatpush1.bf16.msra.mxu0 0
    %2283 = vmatprep.subr.bf16.mxu0 0
    %2284 = vmatpush1.bf16.msra.mxu0 0
    %2285 = vmatprep.mubr.bf16.mxu0 0
    %2286 = vmatmul.mubr.bf16.gmra.mrb[0].mxu0 %v2251
    %v2287 = vpop.f32.mrb[0].mxu0
    %v2288 = vadd.f32 %v2237, %v2287
    %v2289 = vpop.f32.mrb[0].mxu0
    %v2290 = vpop.f32.mrb[0].mxu0
    %v2291 = vadd.f32 %v2237, %v2290
    %v2292 = vpop.f32.mrb[0].mxu0
    %2293 = vdwg.mxu0
    %v2294 = vadd.f32 %v78, %v2288
    %v2295 = vadd.f32 %v79, %v2291
    %v2296 = vsel %vm40, %v2294, 0.0
    %2297 = vadd.xlane.f32.xlu0 %v2296
    %v2298 = vpop.xlane.xlu0 %2297
    %v2299 = vsel %vm40, %v2295, 0.0
    %2300 = vadd.xlane.f32.xlu0 %v2299
    %v2301 = vpop.xlane.xlu0 %2300
    %v2302 = vmul.f32 %v2298, %v47
    %v2303 = vmul.f32 %v2301, %v47
    %v2304 = vsub.f32 %v2294, %v2302
    %v2305 = vsub.f32 %v2295, %v2303
    %v2306 = vmul.f32 %v2304, %v2304
    %v2307 = vmul.f32 %v2305, %v2305
    %v2308 = vsel %vm40, %v2306, 0.0
    %2309 = vadd.xlane.f32.xlu0 %v2308
    %v2310 = vpop.xlane.xlu0 %2309
    %v2311 = vsel %vm40, %v2307, 0.0
    %2312 = vadd.xlane.f32.xlu0 %v2311
    %v2313 = vpop.xlane.xlu0 %2312
    %v2314 = vmul.f32 %v2310, %v47
    %v2315 = vmul.f32 %v2313, %v47
    %v2316 = vadd.f32 %v2314, 1e-12
    %v2317 = vadd.f32 %v2315, 1e-12
    %v2318 = vrsqrt.pop %v2316
    %v2319 = vrsqrt.pop %v2317
    %v2320 = vmul.f32 %v2304, %v2318
    %v2321 = vmul.f32 %v2305, %v2319
    %v2322 = vlaneseq
    %v2323 = vshrl.u32 %v2322, 7
    %v2324 = vsub.s32 1, %v2323
    %v2325 = vrot.slane %v114, %v2324
    %v2326 = vmul.f32 %v2320, %v2325
    %v2327 = vmul.f32 %v2321, %v2325
    %v2328 = vlaneseq
    %v2329 = vshrl.u32 %v2328, 7
    %v2330 = vsub.s32 2, %v2329
    %v2331 = vrot.slane %v114, %v2330
    %v2332 = vadd.f32 %v2326, %v2331
    %v2333 = vadd.f32 %v2327, %v2331
    %v2334 = vpack.c.bf16 %v2333, %v2332
    %v2335 = vld [vmem:[%s7] sm:$0xf]
    %v2336 = vld [vmem:[%s7 + $0x4] sm:$0xf]
    %v2337 = vld [vmem:[%s7 + $0x8] sm:$0xf]
    %v2338 = vld [vmem:[%s7 + $0xc] sm:$0xf]
    %v2339 = vld [vmem:[%s8] sm:$0x1]
    %v2341 = vlaneseq
    %v2342 = vshrl.u32 %v2341, 7
    %v2343 = vsub.s32 0, %v2342
    %v2344 = vrot.slane %v2339, %v2343
    %v2350 = vunpack.c.l.b16 %v2335
    %v2351 = vunpack.c.l.b16 %v2336
    %v2352 = vunpack.c.l.b16 %v2337
    %v2353 = vunpack.c.l.b16 %v2338
    %v2354 = vpack.c.b16 %v2351, %v2350
    %v2355 = vpack.c.b16 %v2353, %v2352
    %v2359 = vsel %vm40, %v2334, 0
    %2361 = vmatprep.subr.bf16.mxu0 0
    %2362 = vmatpush1.bf16.msra.mxu0 %v2354
    %2363 = vmatprep.subr.bf16.mxu0 0
    %2364 = vmatpush1.bf16.msra.mxu0 %v2355
    %2365 = vmatprep.subr.bf16.mxu0 0
    %2366 = vmatpush1.bf16.msra.mxu0 0
    %2367 = vmatprep.subr.bf16.mxu0 0
    %2368 = vmatpush1.bf16.msra.mxu0 0
    %2369 = vmatprep.subr.bf16.mxu0 0
    %2370 = vmatpush1.bf16.msra.mxu0 0
    %2371 = vmatprep.subr.bf16.mxu0 0
    %2372 = vmatpush1.bf16.msra.mxu0 0
    %2373 = vmatprep.subr.bf16.mxu0 0
    %2374 = vmatpush1.bf16.msra.mxu0 0
    %2375 = vmatprep.subr.bf16.mxu0 0
    %2376 = vmatpush1.bf16.msra.mxu0 0
    %2377 = vmatprep.subr.bf16.mxu0 0
    %2378 = vmatpush1.bf16.msra.mxu0 0
    %2379 = vmatprep.subr.bf16.mxu0 0
    %2380 = vmatpush1.bf16.msra.mxu0 0
    %2381 = vmatprep.subr.bf16.mxu0 0
    %2382 = vmatpush1.bf16.msra.mxu0 0
    %2383 = vmatprep.subr.bf16.mxu0 0
    %2384 = vmatpush1.bf16.msra.mxu0 0
    %2385 = vmatprep.subr.bf16.mxu0 0
    %2386 = vmatpush1.bf16.msra.mxu0 0
    %2387 = vmatprep.subr.bf16.mxu0 0
    %2388 = vmatpush1.bf16.msra.mxu0 0
    %2389 = vmatprep.subr.bf16.mxu0 0
    %2390 = vmatpush1.bf16.msra.mxu0 0
    %2391 = vmatprep.subr.bf16.mxu0 0
    %2392 = vmatpush1.bf16.msra.mxu0 0
    %2393 = vmatprep.mubr.bf16.mxu0 0
    %2394 = vmatmul.mubr.bf16.gmra.mrb[0].mxu0 %v2359
    %v2395 = vpop.f32.mrb[0].mxu0
    %v2396 = vadd.f32 %v2344, %v2395
    %v2397 = vpop.f32.mrb[0].mxu0
    %v2398 = vpop.f32.mrb[0].mxu0
    %v2399 = vadd.f32 %v2344, %v2398
    %v2400 = vpop.f32.mrb[0].mxu0
    %2401 = vdwg.mxu0
    %v2402 = vmul.f32 %v2396, %v2396
    %v2403 = vmul.f32 %v2399, %v2399
    %v2404 = vmul.f32 %v2396, %v2402
    %v2405 = vmul.f32 %v2399, %v2403
    %v2406 = vmul.f32 %v2404, 0.044715
    %v2407 = vmul.f32 %v2405, 0.044715
    %v2408 = vadd.f32 %v2396, %v2406
    %v2409 = vadd.f32 %v2399, %v2407
    %v2410 = vmul.f32 %v2408, 0.7978846
    %v2411 = vmul.f32 %v2409, 0.7978846
    %v2412 = vtanh.pop %v2410
    %v2413 = vtanh.pop %v2411
    %v2414 = vadd.f32 %v2412, 1.0
    %v2415 = vadd.f32 %v2413, 1.0
    %v2416 = vmul.f32 %v2414, 0.5
    %v2417 = vmul.f32 %v2415, 0.5
    %v2418 = vmul.f32 %v2396, %v2416
    %v2419 = vmul.f32 %v2399, %v2417
    %v2420 = vpack.c.bf16 %v2419, %v2418
    %v2421 = vld [vmem:[%s9] sm:$0xf]
    %v2422 = vld [vmem:[%s9 + $0x4] sm:$0xf]
    %v2423 = vld [vmem:[%s9 + $0x8] sm:$0xf]
    %v2424 = vld [vmem:[%s9 + $0xc] sm:$0xf]
    %v2425 = vld [vmem:[%s9 + $0x10] sm:$0xf]
    %v2426 = vld [vmem:[%s9 + $0x14] sm:$0xf]
    %v2427 = vld [vmem:[%s9 + $0x18] sm:$0xf]
    %v2428 = vld [vmem:[%s9 + $0x1c] sm:$0xf]
    %v2429 = vlaneseq
    %v2430 = vshrl.u32 %v2429, 7
    %v2431 = vsub.s32 3, %v2430
    %v2432 = vrot.slane %v114, %v2431
    %v2441 = vunpack.c.l.b16 %v2421
    %v2442 = vunpack.c.l.b16 %v2422
    %v2443 = vunpack.c.l.b16 %v2423
    %v2444 = vunpack.c.l.b16 %v2424
    %v2445 = vunpack.c.l.b16 %v2425
    %v2446 = vunpack.c.l.b16 %v2426
    %v2447 = vunpack.c.l.b16 %v2427
    %v2448 = vunpack.c.l.b16 %v2428
    %v2449 = vpack.c.b16 %v2442, %v2441
    %v2450 = vpack.c.b16 %v2444, %v2443
    %v2451 = vpack.c.b16 %v2446, %v2445
    %v2452 = vpack.c.b16 %v2448, %v2447
    %vm2457 = vcmask 523264
    %v2459 = vsel %vm2457, %v2420, 0
    %2461 = vmatprep.subr.bf16.mxu0 0
    %2462 = vmatpush1.bf16.msra.mxu0 %v2449
    %2463 = vmatprep.subr.bf16.mxu0 0
    %2464 = vmatpush1.bf16.msra.mxu0 %v2450
    %2465 = vmatprep.subr.bf16.mxu0 0
    %2466 = vmatpush1.bf16.msra.mxu0 %v2451
    %2467 = vmatprep.subr.bf16.mxu0 0
    %2468 = vmatpush1.bf16.msra.mxu0 %v2452
    %2469 = vmatprep.subr.bf16.mxu0 0
    %2470 = vmatpush1.bf16.msra.mxu0 0
    %2471 = vmatprep.subr.bf16.mxu0 0
    %2472 = vmatpush1.bf16.msra.mxu0 0
    %2473 = vmatprep.subr.bf16.mxu0 0
    %2474 = vmatpush1.bf16.msra.mxu0 0
    %2475 = vmatprep.subr.bf16.mxu0 0
    %2476 = vmatpush1.bf16.msra.mxu0 0
    %2477 = vmatprep.subr.bf16.mxu0 0
    %2478 = vmatpush1.bf16.msra.mxu0 0
    %2479 = vmatprep.subr.bf16.mxu0 0
    %2480 = vmatpush1.bf16.msra.mxu0 0
    %2481 = vmatprep.subr.bf16.mxu0 0
    %2482 = vmatpush1.bf16.msra.mxu0 0
    %2483 = vmatprep.subr.bf16.mxu0 0
    %2484 = vmatpush1.bf16.msra.mxu0 0
    %2485 = vmatprep.subr.bf16.mxu0 0
    %2486 = vmatpush1.bf16.msra.mxu0 0
    %2487 = vmatprep.subr.bf16.mxu0 0
    %2488 = vmatpush1.bf16.msra.mxu0 0
    %2489 = vmatprep.subr.bf16.mxu0 0
    %2490 = vmatpush1.bf16.msra.mxu0 0
    %2491 = vmatprep.subr.bf16.mxu0 0
    %2492 = vmatpush1.bf16.msra.mxu0 0
    %2493 = vmatprep.mubr.bf16.mxu0 0
    %2494 = vmatmul.mubr.bf16.gmra.mrb[0].mxu0 %v2459
    %v2495 = vpop.f32.mrb[0].mxu0
    %v2496 = vadd.f32 %v2432, %v2495
    %v2497 = vpop.f32.mrb[0].mxu0
    %v2498 = vpop.f32.mrb[0].mxu0
    %v2499 = vadd.f32 %v2432, %v2498
    %v2500 = vpop.f32.mrb[0].mxu0
    %2501 = vdwg.mxu0
    %v2502 = vadd.f32 %v2332, %v2496
    %v2503 = vadd.f32 %v2333, %v2499
    %v2504 = vsel %vm40, %v2502, 0.0
    %2505 = vadd.xlane.f32.xlu0 %v2504
    %v2506 = vpop.xlane.xlu0 %2505
    %v2507 = vsel %vm40, %v2503, 0.0
    %2508 = vadd.xlane.f32.xlu0 %v2507
    %v2509 = vpop.xlane.xlu0 %2508
    %v2510 = vmul.f32 %v2506, %v47
    %v2511 = vmul.f32 %v2509, %v47
    %v2512 = vsub.f32 %v2502, %v2510
    %v2513 = vsub.f32 %v2503, %v2511
    %v2514 = vmul.f32 %v2512, %v2512
    %v2515 = vmul.f32 %v2513, %v2513
    %v2516 = vsel %vm40, %v2514, 0.0
    %2517 = vadd.xlane.f32.xlu0 %v2516
    %v2518 = vpop.xlane.xlu0 %2517
    %v2519 = vsel %vm40, %v2515, 0.0
    %2520 = vadd.xlane.f32.xlu0 %v2519
    %v2521 = vpop.xlane.xlu0 %2520
    %v2522 = vmul.f32 %v2518, %v47
    %v2523 = vmul.f32 %v2521, %v47
    %v2524 = vadd.f32 %v2522, 1e-12
    %v2525 = vadd.f32 %v2523, 1e-12
    %v2526 = vrsqrt.pop %v2524
    %v2527 = vrsqrt.pop %v2525
    %v2528 = vmul.f32 %v2512, %v2526
    %v2529 = vmul.f32 %v2513, %v2527
    %v2530 = vlaneseq
    %v2531 = vshrl.u32 %v2530, 7
    %v2532 = vsub.s32 4, %v2531
    %v2533 = vrot.slane %v114, %v2532
    %v2534 = vmul.f32 %v2528, %v2533
    %v2535 = vmul.f32 %v2529, %v2533
    %v2536 = vlaneseq
    %v2537 = vshrl.u32 %v2536, 7
    %v2538 = vsub.s32 5, %v2537
    %v2539 = vrot.slane %v114, %v2538
    %v2540 = vadd.f32 %v2534, %v2539
    %v2541 = vadd.f32 %v2535, %v2539
    %s2542 = scalar_lea.vmem %s6, 8
    %v2543 = vld [vmem:[%s2542] sm:$0x3f]
    %v2544 = vpack.c.bf16 %v2541, %v2540
    %s2545 = scalar_lea.vmem %s3, 16
    %v2546 = vld [vmem:[%s2545] sm:$0xf]
    %v2547 = vld [vmem:[%s2545 + $0x4] sm:$0xf]
    %v2548 = vld [vmem:[%s2545 + $0x8] sm:$0xf]
    %v2549 = vld [vmem:[%s2545 + $0xc] sm:$0xf]
    %s2550 = scalar_lea.vmem %s4, 1
    %v2551 = vld [vmem:[%s2550] sm:$0x1]
    %v2553 = vlaneseq
    %v2554 = vshrl.u32 %v2553, 7
    %v2555 = vsub.s32 0, %v2554
    %v2556 = vrot.slane %v2551, %v2555
    %v2562 = vunpack.c.l.b16 %v2546
    %v2563 = vunpack.c.l.b16 %v2547
    %v2564 = vunpack.c.l.b16 %v2548
    %v2565 = vunpack.c.l.b16 %v2549
    %v2566 = vpack.c.b16 %v2563, %v2562
    %v2567 = vpack.c.b16 %v2565, %v2564
    %v2571 = vsel %vm40, %v2544, 0
    %2573 = vmatprep.subr.bf16.mxu0 0
    %2574 = vmatpush1.bf16.msra.mxu0 %v2566
    %2575 = vmatprep.subr.bf16.mxu0 0
    %2576 = vmatpush1.bf16.msra.mxu0 %v2567
    %2577 = vmatprep.subr.bf16.mxu0 0
    %2578 = vmatpush1.bf16.msra.mxu0 0
    %2579 = vmatprep.subr.bf16.mxu0 0
    %2580 = vmatpush1.bf16.msra.mxu0 0
    %2581 = vmatprep.subr.bf16.mxu0 0
    %2582 = vmatpush1.bf16.msra.mxu0 0
    %2583 = vmatprep.subr.bf16.mxu0 0
    %2584 = vmatpush1.bf16.msra.mxu0 0
    %2585 = vmatprep.subr.bf16.mxu0 0
    %2586 = vmatpush1.bf16.msra.mxu0 0
    %2587 = vmatprep.subr.bf16.mxu0 0
    %2588 = vmatpush1.bf16.msra.mxu0 0
    %2589 = vmatprep.subr.bf16.mxu0 0
    %2590 = vmatpush1.bf16.msra.mxu0 0
    %2591 = vmatprep.subr.bf16.mxu0 0
    %2592 = vmatpush1.bf16.msra.mxu0 0
    %2593 = vmatprep.subr.bf16.mxu0 0
    %2594 = vmatpush1.bf16.msra.mxu0 0
    %2595 = vmatprep.subr.bf16.mxu0 0
    %2596 = vmatpush1.bf16.msra.mxu0 0
    %2597 = vmatprep.subr.bf16.mxu0 0
    %2598 = vmatpush1.bf16.msra.mxu0 0
    %2599 = vmatprep.subr.bf16.mxu0 0
    %2600 = vmatpush1.bf16.msra.mxu0 0
    %2601 = vmatprep.subr.bf16.mxu0 0
    %2602 = vmatpush1.bf16.msra.mxu0 0
    %2603 = vmatprep.subr.bf16.mxu0 0
    %2604 = vmatpush1.bf16.msra.mxu0 0
    %2605 = vmatprep.mubr.bf16.mxu0 0
    %2606 = vmatmul.mubr.bf16.gmra.mrb[0].mxu0 %v2571
    %v2607 = vpop.f32.mrb[0].mxu0
    %v2608 = vadd.f32 %v2556, %v2607
    %v2609 = vpop.f32.mrb[0].mxu0
    %v2610 = vpop.f32.mrb[0].mxu0
    %v2611 = vadd.f32 %v2556, %v2610
    %v2612 = vpop.f32.mrb[0].mxu0
    %2613 = vdwg.mxu0
    %2616 = vrot.lane.b32.xlu0 %v2608, 120
    %v2617 = vpop.permute.xlu0 %2616
    %2618 = vrot.lane.b32.xlu0 %v2611, 120
    %v2619 = vpop.permute.xlu0 %2618
    %2622 = vrot.lane.b32.xlu0 %v2608, 112
    %v2623 = vpop.permute.xlu0 %2622
    %2624 = vrot.lane.b32.xlu0 %v2611, 112
    %v2625 = vpop.permute.xlu0 %2624
    %2628 = vrot.lane.b32.xlu0 %v2608, 104
    %v2629 = vpop.permute.xlu0 %2628
    %2630 = vrot.lane.b32.xlu0 %v2611, 104
    %v2631 = vpop.permute.xlu0 %2630
    %v2634 = vcombine.low %v2608, %v2623
    %v2635 = vcombine.high %v2608, %v2623
    %v2637 = vunpack.c.l.s4 1983009808
    %v2638 = vunpack.c.0.s8 %v2637
    %v2639 = vlaneseq
    %v2640 = vshrl.u32 %v2639, 7
    %v2641 = vsub.s32 %v2638, %v2640
    %v2642 = vrot.slane %v2634, %v2641
    %v2644 = vunpack.c.l.s4 1983009808
    %v2645 = vunpack.c.0.s8 %v2644
    %v2646 = vlaneseq
    %v2647 = vshrl.u32 %v2646, 7
    %v2648 = vsub.s32 %v2645, %v2647
    %v2649 = vrot.slane %v2635, %v2648
    %v2650 = vcombine.low %v2617, %v2629
    %v2651 = vcombine.high %v2617, %v2629
    %v2653 = vunpack.c.l.s4 1983009808
    %v2654 = vunpack.c.0.s8 %v2653
    %v2655 = vlaneseq
    %v2656 = vshrl.u32 %v2655, 7
    %v2657 = vsub.s32 %v2654, %v2656
    %v2658 = vrot.slane %v2650, %v2657
    %v2660 = vunpack.c.l.s4 1983009808
    %v2661 = vunpack.c.0.s8 %v2660
    %v2662 = vlaneseq
    %v2663 = vshrl.u32 %v2662, 7
    %v2664 = vsub.s32 %v2661, %v2663
    %v2665 = vrot.slane %v2651, %v2664
    %v2666 = vcombine.low %v2642, %v2658
    %v2667 = vcombine.high %v2642, %v2658
    %v2669 = vunpack.c.l.s4 1934713408
    %v2670 = vunpack.c.0.s8 %v2669
    %v2671 = vlaneseq
    %v2672 = vshrl.u32 %v2671, 7
    %v2673 = vsub.s32 %v2670, %v2672
    %v2674 = vrot.slane %v2666, %v2673
    %v2676 = vunpack.c.l.s4 1934713408
    %v2677 = vunpack.c.0.s8 %v2676
    %v2678 = vlaneseq
    %v2679 = vshrl.u32 %v2678, 7
    %v2680 = vsub.s32 %v2677, %v2679
    %v2681 = vrot.slane %v2667, %v2680
    %v2682 = vcombine.low %v2649, %v2665
    %v2683 = vcombine.high %v2649, %v2665
    %v2685 = vunpack.c.l.s4 1934713408
    %v2686 = vunpack.c.0.s8 %v2685
    %v2687 = vlaneseq
    %v2688 = vshrl.u32 %v2687, 7
    %v2689 = vsub.s32 %v2686, %v2688
    %v2690 = vrot.slane %v2682, %v2689
    %v2692 = vunpack.c.l.s4 1934713408
    %v2693 = vunpack.c.0.s8 %v2692
    %v2694 = vlaneseq
    %v2695 = vshrl.u32 %v2694, 7
    %v2696 = vsub.s32 %v2693, %v2695
    %v2697 = vrot.slane %v2683, %v2696
    %v2698 = vcombine.high %v2674, 0.0
    %v2699 = vcombine.high %v2681, 0.0
    %v2700 = vcombine.high %v2690, 0.0
    %v2701 = vcombine.high %v2697, 0.0
    %v2702 = vcombine.low %v2611, %v2625
    %v2703 = vcombine.high %v2611, %v2625
    %v2705 = vunpack.c.l.s4 1983009808
    %v2706 = vunpack.c.0.s8 %v2705
    %v2707 = vlaneseq
    %v2708 = vshrl.u32 %v2707, 7
    %v2709 = vsub.s32 %v2706, %v2708
    %v2710 = vrot.slane %v2702, %v2709
    %v2712 = vunpack.c.l.s4 1983009808
    %v2713 = vunpack.c.0.s8 %v2712
    %v2714 = vlaneseq
    %v2715 = vshrl.u32 %v2714, 7
    %v2716 = vsub.s32 %v2713, %v2715
    %v2717 = vrot.slane %v2703, %v2716
    %v2718 = vcombine.low %v2619, %v2631
    %v2719 = vcombine.high %v2619, %v2631
    %v2721 = vunpack.c.l.s4 1983009808
    %v2722 = vunpack.c.0.s8 %v2721
    %v2723 = vlaneseq
    %v2724 = vshrl.u32 %v2723, 7
    %v2725 = vsub.s32 %v2722, %v2724
    %v2726 = vrot.slane %v2718, %v2725
    %v2728 = vunpack.c.l.s4 1983009808
    %v2729 = vunpack.c.0.s8 %v2728
    %v2730 = vlaneseq
    %v2731 = vshrl.u32 %v2730, 7
    %v2732 = vsub.s32 %v2729, %v2731
    %v2733 = vrot.slane %v2719, %v2732
    %v2734 = vcombine.low %v2710, %v2726
    %v2735 = vcombine.high %v2710, %v2726
    %v2737 = vunpack.c.l.s4 1934713408
    %v2738 = vunpack.c.0.s8 %v2737
    %v2739 = vlaneseq
    %v2740 = vshrl.u32 %v2739, 7
    %v2741 = vsub.s32 %v2738, %v2740
    %v2742 = vrot.slane %v2734, %v2741
    %v2744 = vunpack.c.l.s4 1934713408
    %v2745 = vunpack.c.0.s8 %v2744
    %v2746 = vlaneseq
    %v2747 = vshrl.u32 %v2746, 7
    %v2748 = vsub.s32 %v2745, %v2747
    %v2749 = vrot.slane %v2735, %v2748
    %v2750 = vcombine.low %v2717, %v2733
    %v2751 = vcombine.high %v2717, %v2733
    %v2753 = vunpack.c.l.s4 1934713408
    %v2754 = vunpack.c.0.s8 %v2753
    %v2755 = vlaneseq
    %v2756 = vshrl.u32 %v2755, 7
    %v2757 = vsub.s32 %v2754, %v2756
    %v2758 = vrot.slane %v2750, %v2757
    %v2760 = vunpack.c.l.s4 1934713408
    %v2761 = vunpack.c.0.s8 %v2760
    %v2762 = vlaneseq
    %v2763 = vshrl.u32 %v2762, 7
    %v2764 = vsub.s32 %v2761, %v2763
    %v2765 = vrot.slane %v2751, %v2764
    %v2766 = vcombine.high %v2742, 0.0
    %v2767 = vcombine.high %v2749, 0.0
    %v2768 = vcombine.high %v2758, 0.0
    %v2769 = vcombine.high %v2765, 0.0
    %2770 = vrot.lane.b32.xlu0 %v2608, 96
    %v2771 = vpop.permute.xlu0 %2770
    %2772 = vrot.lane.b32.xlu0 %v2611, 96
    %v2773 = vpop.permute.xlu0 %2772
    %2774 = vrot.lane.b32.xlu0 %v2617, 96
    %v2775 = vpop.permute.xlu0 %2774
    %2776 = vrot.lane.b32.xlu0 %v2619, 96
    %v2777 = vpop.permute.xlu0 %2776
    %2778 = vrot.lane.b32.xlu0 %v2623, 96
    %v2779 = vpop.permute.xlu0 %2778
    %2780 = vrot.lane.b32.xlu0 %v2625, 96
    %v2781 = vpop.permute.xlu0 %2780
    %2782 = vrot.lane.b32.xlu0 %v2629, 96
    %v2783 = vpop.permute.xlu0 %2782
    %2784 = vrot.lane.b32.xlu0 %v2631, 96
    %v2785 = vpop.permute.xlu0 %2784
    %v2794 = vcombine.low %v2771, %v2779
    %v2795 = vcombine.high %v2771, %v2779
    %v2797 = vunpack.c.l.s4 1983009808
    %v2798 = vunpack.c.0.s8 %v2797
    %v2799 = vlaneseq
    %v2800 = vshrl.u32 %v2799, 7
    %v2801 = vsub.s32 %v2798, %v2800
    %v2802 = vrot.slane %v2794, %v2801
    %v2804 = vunpack.c.l.s4 1983009808
    %v2805 = vunpack.c.0.s8 %v2804
    %v2806 = vlaneseq
    %v2807 = vshrl.u32 %v2806, 7
    %v2808 = vsub.s32 %v2805, %v2807
    %v2809 = vrot.slane %v2795, %v2808
    %v2810 = vcombine.low %v2775, %v2783
    %v2811 = vcombine.high %v2775, %v2783
    %v2813 = vunpack.c.l.s4 1983009808
    %v2814 = vunpack.c.0.s8 %v2813
    %v2815 = vlaneseq
    %v2816 = vshrl.u32 %v2815, 7
    %v2817 = vsub.s32 %v2814, %v2816
    %v2818 = vrot.slane %v2810, %v2817
    %v2820 = vunpack.c.l.s4 1983009808
    %v2821 = vunpack.c.0.s8 %v2820
    %v2822 = vlaneseq
    %v2823 = vshrl.u32 %v2822, 7
    %v2824 = vsub.s32 %v2821, %v2823
    %v2825 = vrot.slane %v2811, %v2824
    %v2826 = vcombine.low %v2802, %v2818
    %v2827 = vcombine.high %v2802, %v2818
    %v2829 = vunpack.c.l.s4 1934713408
    %v2830 = vunpack.c.0.s8 %v2829
    %v2831 = vlaneseq
    %v2832 = vshrl.u32 %v2831, 7
    %v2833 = vsub.s32 %v2830, %v2832
    %v2834 = vrot.slane %v2826, %v2833
    %v2836 = vunpack.c.l.s4 1934713408
    %v2837 = vunpack.c.0.s8 %v2836
    %v2838 = vlaneseq
    %v2839 = vshrl.u32 %v2838, 7
    %v2840 = vsub.s32 %v2837, %v2839
    %v2841 = vrot.slane %v2827, %v2840
    %v2842 = vcombine.low %v2809, %v2825
    %v2843 = vcombine.high %v2809, %v2825
    %v2845 = vunpack.c.l.s4 1934713408
    %v2846 = vunpack.c.0.s8 %v2845
    %v2847 = vlaneseq
    %v2848 = vshrl.u32 %v2847, 7
    %v2849 = vsub.s32 %v2846, %v2848
    %v2850 = vrot.slane %v2842, %v2849
    %v2852 = vunpack.c.l.s4 1934713408
    %v2853 = vunpack.c.0.s8 %v2852
    %v2854 = vlaneseq
    %v2855 = vshrl.u32 %v2854, 7
    %v2856 = vsub.s32 %v2853, %v2855
    %v2857 = vrot.slane %v2843, %v2856
    %v2858 = vcombine.high %v2834, 0.0
    %v2859 = vcombine.high %v2841, 0.0
    %v2860 = vcombine.high %v2850, 0.0
    %v2861 = vcombine.high %v2857, 0.0
    %v2862 = vcombine.low %v2773, %v2781
    %v2863 = vcombine.high %v2773, %v2781
    %v2865 = vunpack.c.l.s4 1983009808
    %v2866 = vunpack.c.0.s8 %v2865
    %v2867 = vlaneseq
    %v2868 = vshrl.u32 %v2867, 7
    %v2869 = vsub.s32 %v2866, %v2868
    %v2870 = vrot.slane %v2862, %v2869
    %v2872 = vunpack.c.l.s4 1983009808
    %v2873 = vunpack.c.0.s8 %v2872
    %v2874 = vlaneseq
    %v2875 = vshrl.u32 %v2874, 7
    %v2876 = vsub.s32 %v2873, %v2875
    %v2877 = vrot.slane %v2863, %v2876
    %v2878 = vcombine.low %v2777, %v2785
    %v2879 = vcombine.high %v2777, %v2785
    %v2881 = vunpack.c.l.s4 1983009808
    %v2882 = vunpack.c.0.s8 %v2881
    %v2883 = vlaneseq
    %v2884 = vshrl.u32 %v2883, 7
    %v2885 = vsub.s32 %v2882, %v2884
    %v2886 = vrot.slane %v2878, %v2885
    %v2888 = vunpack.c.l.s4 1983009808
    %v2889 = vunpack.c.0.s8 %v2888
    %v2890 = vlaneseq
    %v2891 = vshrl.u32 %v2890, 7
    %v2892 = vsub.s32 %v2889, %v2891
    %v2893 = vrot.slane %v2879, %v2892
    %v2894 = vcombine.low %v2870, %v2886
    %v2895 = vcombine.high %v2870, %v2886
    %v2897 = vunpack.c.l.s4 1934713408
    %v2898 = vunpack.c.0.s8 %v2897
    %v2899 = vlaneseq
    %v2900 = vshrl.u32 %v2899, 7
    %v2901 = vsub.s32 %v2898, %v2900
    %v2902 = vrot.slane %v2894, %v2901
    %v2904 = vunpack.c.l.s4 1934713408
    %v2905 = vunpack.c.0.s8 %v2904
    %v2906 = vlaneseq
    %v2907 = vshrl.u32 %v2906, 7
    %v2908 = vsub.s32 %v2905, %v2907
    %v2909 = vrot.slane %v2895, %v2908
    %v2910 = vcombine.low %v2877, %v2893
    %v2911 = vcombine.high %v2877, %v2893
    %v2913 = vunpack.c.l.s4 1934713408
    %v2914 = vunpack.c.0.s8 %v2913
    %v2915 = vlaneseq
    %v2916 = vshrl.u32 %v2915, 7
    %v2917 = vsub.s32 %v2914, %v2916
    %v2918 = vrot.slane %v2910, %v2917
    %v2920 = vunpack.c.l.s4 1934713408
    %v2921 = vunpack.c.0.s8 %v2920
    %v2922 = vlaneseq
    %v2923 = vshrl.u32 %v2922, 7
    %v2924 = vsub.s32 %v2921, %v2923
    %v2925 = vrot.slane %v2911, %v2924
    %v2926 = vcombine.high %v2902, 0.0
    %v2927 = vcombine.high %v2909, 0.0
    %v2928 = vcombine.high %v2918, 0.0
    %v2929 = vcombine.high %v2925, 0.0
    %2930 = vrot.lane.b32.xlu0 %v2608, 64
    %v2931 = vpop.permute.xlu0 %2930
    %2932 = vrot.lane.b32.xlu0 %v2611, 64
    %v2933 = vpop.permute.xlu0 %2932
    %2934 = vrot.lane.b32.xlu0 %v2617, 64
    %v2935 = vpop.permute.xlu0 %2934
    %2936 = vrot.lane.b32.xlu0 %v2619, 64
    %v2937 = vpop.permute.xlu0 %2936
    %2938 = vrot.lane.b32.xlu0 %v2623, 64
    %v2939 = vpop.permute.xlu0 %2938
    %2940 = vrot.lane.b32.xlu0 %v2625, 64
    %v2941 = vpop.permute.xlu0 %2940
    %2942 = vrot.lane.b32.xlu0 %v2629, 64
    %v2943 = vpop.permute.xlu0 %2942
    %2944 = vrot.lane.b32.xlu0 %v2631, 64
    %v2945 = vpop.permute.xlu0 %2944
    %v2954 = vcombine.low %v2931, %v2939
    %v2955 = vcombine.high %v2931, %v2939
    %v2957 = vunpack.c.l.s4 1983009808
    %v2958 = vunpack.c.0.s8 %v2957
    %v2959 = vlaneseq
    %v2960 = vshrl.u32 %v2959, 7
    %v2961 = vsub.s32 %v2958, %v2960
    %v2962 = vrot.slane %v2954, %v2961
    %v2964 = vunpack.c.l.s4 1983009808
    %v2965 = vunpack.c.0.s8 %v2964
    %v2966 = vlaneseq
    %v2967 = vshrl.u32 %v2966, 7
    %v2968 = vsub.s32 %v2965, %v2967
    %v2969 = vrot.slane %v2955, %v2968
    %v2970 = vcombine.low %v2935, %v2943
    %v2971 = vcombine.high %v2935, %v2943
    %v2973 = vunpack.c.l.s4 1983009808
    %v2974 = vunpack.c.0.s8 %v2973
    %v2975 = vlaneseq
    %v2976 = vshrl.u32 %v2975, 7
    %v2977 = vsub.s32 %v2974, %v2976
    %v2978 = vrot.slane %v2970, %v2977
    %v2980 = vunpack.c.l.s4 1983009808
    %v2981 = vunpack.c.0.s8 %v2980
    %v2982 = vlaneseq
    %v2983 = vshrl.u32 %v2982, 7
    %v2984 = vsub.s32 %v2981, %v2983
    %v2985 = vrot.slane %v2971, %v2984
    %v2986 = vcombine.low %v2962, %v2978
    %v2987 = vcombine.high %v2962, %v2978
    %v2989 = vunpack.c.l.s4 1934713408
    %v2990 = vunpack.c.0.s8 %v2989
    %v2991 = vlaneseq
    %v2992 = vshrl.u32 %v2991, 7
    %v2993 = vsub.s32 %v2990, %v2992
    %v2994 = vrot.slane %v2986, %v2993
    %v2996 = vunpack.c.l.s4 1934713408
    %v2997 = vunpack.c.0.s8 %v2996
    %v2998 = vlaneseq
    %v2999 = vshrl.u32 %v2998, 7
    %v3000 = vsub.s32 %v2997, %v2999
    %v3001 = vrot.slane %v2987, %v3000
    %v3002 = vcombine.low %v2969, %v2985
    %v3003 = vcombine.high %v2969, %v2985
    %v3005 = vunpack.c.l.s4 1934713408
    %v3006 = vunpack.c.0.s8 %v3005
    %v3007 = vlaneseq
    %v3008 = vshrl.u32 %v3007, 7
    %v3009 = vsub.s32 %v3006, %v3008
    %v3010 = vrot.slane %v3002, %v3009
    %v3012 = vunpack.c.l.s4 1934713408
    %v3013 = vunpack.c.0.s8 %v3012
    %v3014 = vlaneseq
    %v3015 = vshrl.u32 %v3014, 7
    %v3016 = vsub.s32 %v3013, %v3015
    %v3017 = vrot.slane %v3003, %v3016
    %v3018 = vcombine.high %v2994, 0.0
    %v3019 = vcombine.high %v3001, 0.0
    %v3020 = vcombine.high %v3010, 0.0
    %v3021 = vcombine.high %v3017, 0.0
    %v3022 = vcombine.low %v2933, %v2941
    %v3023 = vcombine.high %v2933, %v2941
    %v3025 = vunpack.c.l.s4 1983009808
    %v3026 = vunpack.c.0.s8 %v3025
    %v3027 = vlaneseq
    %v3028 = vshrl.u32 %v3027, 7
    %v3029 = vsub.s32 %v3026, %v3028
    %v3030 = vrot.slane %v3022, %v3029
    %v3032 = vunpack.c.l.s4 1983009808
    %v3033 = vunpack.c.0.s8 %v3032
    %v3034 = vlaneseq
    %v3035 = vshrl.u32 %v3034, 7
    %v3036 = vsub.s32 %v3033, %v3035
    %v3037 = vrot.slane %v3023, %v3036
    %v3038 = vcombine.low %v2937, %v2945
    %v3039 = vcombine.high %v2937, %v2945
    %v3041 = vunpack.c.l.s4 1983009808
    %v3042 = vunpack.c.0.s8 %v3041
    %v3043 = vlaneseq
    %v3044 = vshrl.u32 %v3043, 7
    %v3045 = vsub.s32 %v3042, %v3044
    %v3046 = vrot.slane %v3038, %v3045
    %v3048 = vunpack.c.l.s4 1983009808
    %v3049 = vunpack.c.0.s8 %v3048
    %v3050 = vlaneseq
    %v3051 = vshrl.u32 %v3050, 7
    %v3052 = vsub.s32 %v3049, %v3051
    %v3053 = vrot.slane %v3039, %v3052
    %v3054 = vcombine.low %v3030, %v3046
    %v3055 = vcombine.high %v3030, %v3046
    %v3057 = vunpack.c.l.s4 1934713408
    %v3058 = vunpack.c.0.s8 %v3057
    %v3059 = vlaneseq
    %v3060 = vshrl.u32 %v3059, 7
    %v3061 = vsub.s32 %v3058, %v3060
    %v3062 = vrot.slane %v3054, %v3061
    %v3064 = vunpack.c.l.s4 1934713408
    %v3065 = vunpack.c.0.s8 %v3064
    %v3066 = vlaneseq
    %v3067 = vshrl.u32 %v3066, 7
    %v3068 = vsub.s32 %v3065, %v3067
    %v3069 = vrot.slane %v3055, %v3068
    %v3070 = vcombine.low %v3037, %v3053
    %v3071 = vcombine.high %v3037, %v3053
    %v3073 = vunpack.c.l.s4 1934713408
    %v3074 = vunpack.c.0.s8 %v3073
    %v3075 = vlaneseq
    %v3076 = vshrl.u32 %v3075, 7
    %v3077 = vsub.s32 %v3074, %v3076
    %v3078 = vrot.slane %v3070, %v3077
    %v3080 = vunpack.c.l.s4 1934713408
    %v3081 = vunpack.c.0.s8 %v3080
    %v3082 = vlaneseq
    %v3083 = vshrl.u32 %v3082, 7
    %v3084 = vsub.s32 %v3081, %v3083
    %v3085 = vrot.slane %v3071, %v3084
    %v3086 = vcombine.high %v3062, 0.0
    %v3087 = vcombine.high %v3069, 0.0
    %v3088 = vcombine.high %v3078, 0.0
    %v3089 = vcombine.high %v3085, 0.0
    %v3090 = vcombine.low %v2674, %v2681
    %v3092 = vunpack.c.l.s4 1983009808
    %v3093 = vunpack.c.0.s8 %v3092
    %v3094 = vlaneseq
    %v3095 = vshrl.u32 %v3094, 7
    %v3096 = vsub.s32 %v3093, %v3095
    %v3097 = vrot.slane %v3090, %v3096
    %v3098 = vcombine.low %v2698, %v2699
    %v3100 = vunpack.c.l.s4 1983009808
    %v3101 = vunpack.c.0.s8 %v3100
    %v3102 = vlaneseq
    %v3103 = vshrl.u32 %v3102, 7
    %v3104 = vsub.s32 %v3101, %v3103
    %v3105 = vrot.slane %v3098, %v3104
    %v3106 = vcombine.low %v2690, %v2697
    %v3108 = vunpack.c.l.s4 1983009808
    %v3109 = vunpack.c.0.s8 %v3108
    %v3110 = vlaneseq
    %v3111 = vshrl.u32 %v3110, 7
    %v3112 = vsub.s32 %v3109, %v3111
    %v3113 = vrot.slane %v3106, %v3112
    %v3114 = vcombine.low %v2700, %v2701
    %v3116 = vunpack.c.l.s4 1983009808
    %v3117 = vunpack.c.0.s8 %v3116
    %v3118 = vlaneseq
    %v3119 = vshrl.u32 %v3118, 7
    %v3120 = vsub.s32 %v3117, %v3119
    %v3121 = vrot.slane %v3114, %v3120
    %v3122 = vcombine.low %v3097, %v3105
    %v3123 = vcombine.high %v3097, %v3105
    %v3125 = vunpack.c.l.s4 1934713408
    %v3126 = vunpack.c.0.s8 %v3125
    %v3127 = vlaneseq
    %v3128 = vshrl.u32 %v3127, 7
    %v3129 = vsub.s32 %v3126, %v3128
    %v3130 = vrot.slane %v3122, %v3129
    %v3132 = vunpack.c.l.s4 1934713408
    %v3133 = vunpack.c.0.s8 %v3132
    %v3134 = vlaneseq
    %v3135 = vshrl.u32 %v3134, 7
    %v3136 = vsub.s32 %v3133, %v3135
    %v3137 = vrot.slane %v3123, %v3136
    %v3138 = vcombine.low %v3113, %v3121
    %v3139 = vcombine.high %v3113, %v3121
    %v3141 = vunpack.c.l.s4 1934713408
    %v3142 = vunpack.c.0.s8 %v3141
    %v3143 = vlaneseq
    %v3144 = vshrl.u32 %v3143, 7
    %v3145 = vsub.s32 %v3142, %v3144
    %v3146 = vrot.slane %v3138, %v3145
    %v3148 = vunpack.c.l.s4 1934713408
    %v3149 = vunpack.c.0.s8 %v3148
    %v3150 = vlaneseq
    %v3151 = vshrl.u32 %v3150, 7
    %v3152 = vsub.s32 %v3149, %v3151
    %v3153 = vrot.slane %v3139, %v3152
    %v3154 = vcombine.low %v3130, %v3146
    %v3155 = vcombine.high %v3130, %v3146
    %v3156 = vcombine.low %v3137, %v3153
    %v3157 = vcombine.high %v3137, %v3153
    %v3158 = vcombine.low %v2742, %v2749
    %v3160 = vunpack.c.l.s4 1983009808
    %v3161 = vunpack.c.0.s8 %v3160
    %v3162 = vlaneseq
    %v3163 = vshrl.u32 %v3162, 7
    %v3164 = vsub.s32 %v3161, %v3163
    %v3165 = vrot.slane %v3158, %v3164
    %v3166 = vcombine.low %v2766, %v2767
    %v3168 = vunpack.c.l.s4 1983009808
    %v3169 = vunpack.c.0.s8 %v3168
    %v3170 = vlaneseq
    %v3171 = vshrl.u32 %v3170, 7
    %v3172 = vsub.s32 %v3169, %v3171
    %v3173 = vrot.slane %v3166, %v3172
    %v3174 = vcombine.low %v2758, %v2765
    %v3176 = vunpack.c.l.s4 1983009808
    %v3177 = vunpack.c.0.s8 %v3176
    %v3178 = vlaneseq
    %v3179 = vshrl.u32 %v3178, 7
    %v3180 = vsub.s32 %v3177, %v3179
    %v3181 = vrot.slane %v3174, %v3180
    %v3182 = vcombine.low %v2768, %v2769
    %v3184 = vunpack.c.l.s4 1983009808
    %v3185 = vunpack.c.0.s8 %v3184
    %v3186 = vlaneseq
    %v3187 = vshrl.u32 %v3186, 7
    %v3188 = vsub.s32 %v3185, %v3187
    %v3189 = vrot.slane %v3182, %v3188
    %v3190 = vcombine.low %v3165, %v3173
    %v3191 = vcombine.high %v3165, %v3173
    %v3193 = vunpack.c.l.s4 1934713408
    %v3194 = vunpack.c.0.s8 %v3193
    %v3195 = vlaneseq
    %v3196 = vshrl.u32 %v3195, 7
    %v3197 = vsub.s32 %v3194, %v3196
    %v3198 = vrot.slane %v3190, %v3197
    %v3200 = vunpack.c.l.s4 1934713408
    %v3201 = vunpack.c.0.s8 %v3200
    %v3202 = vlaneseq
    %v3203 = vshrl.u32 %v3202, 7
    %v3204 = vsub.s32 %v3201, %v3203
    %v3205 = vrot.slane %v3191, %v3204
    %v3206 = vcombine.low %v3181, %v3189
    %v3207 = vcombine.high %v3181, %v3189
    %v3209 = vunpack.c.l.s4 1934713408
    %v3210 = vunpack.c.0.s8 %v3209
    %v3211 = vlaneseq
    %v3212 = vshrl.u32 %v3211, 7
    %v3213 = vsub.s32 %v3210, %v3212
    %v3214 = vrot.slane %v3206, %v3213
    %v3216 = vunpack.c.l.s4 1934713408
    %v3217 = vunpack.c.0.s8 %v3216
    %v3218 = vlaneseq
    %v3219 = vshrl.u32 %v3218, 7
    %v3220 = vsub.s32 %v3217, %v3219
    %v3221 = vrot.slane %v3207, %v3220
    %v3222 = vcombine.low %v3198, %v3214
    %v3223 = vcombine.high %v3198, %v3214
    %v3224 = vcombine.low %v3205, %v3221
    %v3225 = vcombine.high %v3205, %v3221
    %v3226 = vpack.c.bf16 %v3154, %v3154
    %v3227 = vpack.c.bf16 %v3155, %v3155
    %v3228 = vpack.c.bf16 %v3156, %v3156
    %v3229 = vpack.c.bf16 %v3157, %v3157
    %v3230 = vpack.c.bf16 %v3222, %v3222
    %v3231 = vpack.c.bf16 %v3223, %v3223
    %v3232 = vpack.c.bf16 %v3224, %v3224
    %v3233 = vpack.c.bf16 %v3225, %v3225
    %v3234 = vcombine.low %v2834, %v2841
    %v3236 = vunpack.c.l.s4 1983009808
    %v3237 = vunpack.c.0.s8 %v3236
    %v3238 = vlaneseq
    %v3239 = vshrl.u32 %v3238, 7
    %v3240 = vsub.s32 %v3237, %v3239
    %v3241 = vrot.slane %v3234, %v3240
    %v3242 = vcombine.low %v2858, %v2859
    %v3244 = vunpack.c.l.s4 1983009808
    %v3245 = vunpack.c.0.s8 %v3244
    %v3246 = vlaneseq
    %v3247 = vshrl.u32 %v3246, 7
    %v3248 = vsub.s32 %v3245, %v3247
    %v3249 = vrot.slane %v3242, %v3248
    %v3250 = vcombine.low %v2850, %v2857
    %v3252 = vunpack.c.l.s4 1983009808
    %v3253 = vunpack.c.0.s8 %v3252
    %v3254 = vlaneseq
    %v3255 = vshrl.u32 %v3254, 7
    %v3256 = vsub.s32 %v3253, %v3255
    %v3257 = vrot.slane %v3250, %v3256
    %v3258 = vcombine.low %v2860, %v2861
    %v3260 = vunpack.c.l.s4 1983009808
    %v3261 = vunpack.c.0.s8 %v3260
    %v3262 = vlaneseq
    %v3263 = vshrl.u32 %v3262, 7
    %v3264 = vsub.s32 %v3261, %v3263
    %v3265 = vrot.slane %v3258, %v3264
    %v3266 = vcombine.low %v3241, %v3249
    %v3267 = vcombine.high %v3241, %v3249
    %v3269 = vunpack.c.l.s4 1934713408
    %v3270 = vunpack.c.0.s8 %v3269
    %v3271 = vlaneseq
    %v3272 = vshrl.u32 %v3271, 7
    %v3273 = vsub.s32 %v3270, %v3272
    %v3274 = vrot.slane %v3266, %v3273
    %v3276 = vunpack.c.l.s4 1934713408
    %v3277 = vunpack.c.0.s8 %v3276
    %v3278 = vlaneseq
    %v3279 = vshrl.u32 %v3278, 7
    %v3280 = vsub.s32 %v3277, %v3279
    %v3281 = vrot.slane %v3267, %v3280
    %v3282 = vcombine.low %v3257, %v3265
    %v3283 = vcombine.high %v3257, %v3265
    %v3285 = vunpack.c.l.s4 1934713408
    %v3286 = vunpack.c.0.s8 %v3285
    %v3287 = vlaneseq
    %v3288 = vshrl.u32 %v3287, 7
    %v3289 = vsub.s32 %v3286, %v3288
    %v3290 = vrot.slane %v3282, %v3289
    %v3292 = vunpack.c.l.s4 1934713408
    %v3293 = vunpack.c.0.s8 %v3292
    %v3294 = vlaneseq
    %v3295 = vshrl.u32 %v3294, 7
    %v3296 = vsub.s32 %v3293, %v3295
    %v3297 = vrot.slane %v3283, %v3296
    %v3298 = vcombine.low %v3274, %v3290
    %v3299 = vcombine.high %v3274, %v3290
    %v3300 = vcombine.low %v3281, %v3297
    %v3301 = vcombine.high %v3281, %v3297
    %v3302 = vcombine.low %v2902, %v2909
    %v3304 = vunpack.c.l.s4 1983009808
    %v3305 = vunpack.c.0.s8 %v3304
    %v3306 = vlaneseq
    %v3307 = vshrl.u32 %v3306, 7
    %v3308 = vsub.s32 %v3305, %v3307
    %v3309 = vrot.slane %v3302, %v3308
    %v3310 = vcombine.low %v2926, %v2927
    %v3312 = vunpack.c.l.s4 1983009808
    %v3313 = vunpack.c.0.s8 %v3312
    %v3314 = vlaneseq
    %v3315 = vshrl.u32 %v3314, 7
    %v3316 = vsub.s32 %v3313, %v3315
    %v3317 = vrot.slane %v3310, %v3316
    %v3318 = vcombine.low %v2918, %v2925
    %v3320 = vunpack.c.l.s4 1983009808
    %v3321 = vunpack.c.0.s8 %v3320
    %v3322 = vlaneseq
    %v3323 = vshrl.u32 %v3322, 7
    %v3324 = vsub.s32 %v3321, %v3323
    %v3325 = vrot.slane %v3318, %v3324
    %v3326 = vcombine.low %v2928, %v2929
    %v3328 = vunpack.c.l.s4 1983009808
    %v3329 = vunpack.c.0.s8 %v3328
    %v3330 = vlaneseq
    %v3331 = vshrl.u32 %v3330, 7
    %v3332 = vsub.s32 %v3329, %v3331
    %v3333 = vrot.slane %v3326, %v3332
    %v3334 = vcombine.low %v3309, %v3317
    %v3335 = vcombine.high %v3309, %v3317
    %v3337 = vunpack.c.l.s4 1934713408
    %v3338 = vunpack.c.0.s8 %v3337
    %v3339 = vlaneseq
    %v3340 = vshrl.u32 %v3339, 7
    %v3341 = vsub.s32 %v3338, %v3340
    %v3342 = vrot.slane %v3334, %v3341
    %v3344 = vunpack.c.l.s4 1934713408
    %v3345 = vunpack.c.0.s8 %v3344
    %v3346 = vlaneseq
    %v3347 = vshrl.u32 %v3346, 7
    %v3348 = vsub.s32 %v3345, %v3347
    %v3349 = vrot.slane %v3335, %v3348
    %v3350 = vcombine.low %v3325, %v3333
    %v3351 = vcombine.high %v3325, %v3333
    %v3353 = vunpack.c.l.s4 1934713408
    %v3354 = vunpack.c.0.s8 %v3353
    %v3355 = vlaneseq
    %v3356 = vshrl.u32 %v3355, 7
    %v3357 = vsub.s32 %v3354, %v3356
    %v3358 = vrot.slane %v3350, %v3357
    %v3360 = vunpack.c.l.s4 1934713408
    %v3361 = vunpack.c.0.s8 %v3360
    %v3362 = vlaneseq
    %v3363 = vshrl.u32 %v3362, 7
    %v3364 = vsub.s32 %v3361, %v3363
    %v3365 = vrot.slane %v3351, %v3364
    %v3366 = vcombine.low %v3342, %v3358
    %v3367 = vcombine.high %v3342, %v3358
    %v3368 = vcombine.low %v3349, %v3365
    %v3369 = vcombine.high %v3349, %v3365
    %v3370 = vpack.c.bf16 %v3298, %v3298
    %v3371 = vpack.c.bf16 %v3299, %v3299
    %v3372 = vpack.c.bf16 %v3300, %v3300
    %v3373 = vpack.c.bf16 %v3301, %v3301
    %v3374 = vpack.c.bf16 %v3366, %v3366
    %v3375 = vpack.c.bf16 %v3367, %v3367
    %v3376 = vpack.c.bf16 %v3368, %v3368
    %v3377 = vpack.c.bf16 %v3369, %v3369
    %v3378 = vcombine.low %v2994, %v3001
    %v3380 = vunpack.c.l.s4 1983009808
    %v3381 = vunpack.c.0.s8 %v3380
    %v3382 = vlaneseq
    %v3383 = vshrl.u32 %v3382, 7
    %v3384 = vsub.s32 %v3381, %v3383
    %v3385 = vrot.slane %v3378, %v3384
    %v3386 = vcombine.low %v3018, %v3019
    %v3388 = vunpack.c.l.s4 1983009808
    %v3389 = vunpack.c.0.s8 %v3388
    %v3390 = vlaneseq
    %v3391 = vshrl.u32 %v3390, 7
    %v3392 = vsub.s32 %v3389, %v3391
    %v3393 = vrot.slane %v3386, %v3392
    %v3394 = vcombine.low %v3010, %v3017
    %v3396 = vunpack.c.l.s4 1983009808
    %v3397 = vunpack.c.0.s8 %v3396
    %v3398 = vlaneseq
    %v3399 = vshrl.u32 %v3398, 7
    %v3400 = vsub.s32 %v3397, %v3399
    %v3401 = vrot.slane %v3394, %v3400
    %v3402 = vcombine.low %v3020, %v3021
    %v3404 = vunpack.c.l.s4 1983009808
    %v3405 = vunpack.c.0.s8 %v3404
    %v3406 = vlaneseq
    %v3407 = vshrl.u32 %v3406, 7
    %v3408 = vsub.s32 %v3405, %v3407
    %v3409 = vrot.slane %v3402, %v3408
    %v3410 = vcombine.low %v3385, %v3393
    %v3411 = vcombine.high %v3385, %v3393
    %v3413 = vunpack.c.l.s4 1934713408
    %v3414 = vunpack.c.0.s8 %v3413
    %v3415 = vlaneseq
    %v3416 = vshrl.u32 %v3415, 7
    %v3417 = vsub.s32 %v3414, %v3416
    %v3418 = vrot.slane %v3410, %v3417
    %v3420 = vunpack.c.l.s4 1934713408
    %v3421 = vunpack.c.0.s8 %v3420
    %v3422 = vlaneseq
    %v3423 = vshrl.u32 %v3422, 7
    %v3424 = vsub.s32 %v3421, %v3423
    %v3425 = vrot.slane %v3411, %v3424
    %v3426 = vcombine.low %v3401, %v3409
    %v3427 = vcombine.high %v3401, %v3409
    %v3429 = vunpack.c.l.s4 1934713408
    %v3430 = vunpack.c.0.s8 %v3429
    %v3431 = vlaneseq
    %v3432 = vshrl.u32 %v3431, 7
    %v3433 = vsub.s32 %v3430, %v3432
    %v3434 = vrot.slane %v3426, %v3433
    %v3436 = vunpack.c.l.s4 1934713408
    %v3437 = vunpack.c.0.s8 %v3436
    %v3438 = vlaneseq
    %v3439 = vshrl.u32 %v3438, 7
    %v3440 = vsub.s32 %v3437, %v3439
    %v3441 = vrot.slane %v3427, %v3440
    %v3442 = vcombine.low %v3418, %v3434
    %v3443 = vcombine.high %v3418, %v3434
    %v3444 = vcombine.low %v3425, %v3441
    %v3445 = vcombine.high %v3425, %v3441
    %v3446 = vcombine.low %v3062, %v3069
    %v3448 = vunpack.c.l.s4 1983009808
    %v3449 = vunpack.c.0.s8 %v3448
    %v3450 = vlaneseq
    %v3451 = vshrl.u32 %v3450, 7
    %v3452 = vsub.s32 %v3449, %v3451
    %v3453 = vrot.slane %v3446, %v3452
    %v3454 = vcombine.low %v3086, %v3087
    %v3456 = vunpack.c.l.s4 1983009808
    %v3457 = vunpack.c.0.s8 %v3456
    %v3458 = vlaneseq
    %v3459 = vshrl.u32 %v3458, 7
    %v3460 = vsub.s32 %v3457, %v3459
    %v3461 = vrot.slane %v3454, %v3460
    %v3462 = vcombine.low %v3078, %v3085
    %v3464 = vunpack.c.l.s4 1983009808
    %v3465 = vunpack.c.0.s8 %v3464
    %v3466 = vlaneseq
    %v3467 = vshrl.u32 %v3466, 7
    %v3468 = vsub.s32 %v3465, %v3467
    %v3469 = vrot.slane %v3462, %v3468
    %v3470 = vcombine.low %v3088, %v3089
    %v3472 = vunpack.c.l.s4 1983009808
    %v3473 = vunpack.c.0.s8 %v3472
    %v3474 = vlaneseq
    %v3475 = vshrl.u32 %v3474, 7
    %v3476 = vsub.s32 %v3473, %v3475
    %v3477 = vrot.slane %v3470, %v3476
    %v3478 = vcombine.low %v3453, %v3461
    %v3479 = vcombine.high %v3453, %v3461
    %v3481 = vunpack.c.l.s4 1934713408
    %v3482 = vunpack.c.0.s8 %v3481
    %v3483 = vlaneseq
    %v3484 = vshrl.u32 %v3483, 7
    %v3485 = vsub.s32 %v3482, %v3484
    %v3486 = vrot.slane %v3478, %v3485
    %v3488 = vunpack.c.l.s4 1934713408
    %v3489 = vunpack.c.0.s8 %v3488
    %v3490 = vlaneseq
    %v3491 = vshrl.u32 %v3490, 7
    %v3492 = vsub.s32 %v3489, %v3491
    %v3493 = vrot.slane %v3479, %v3492
    %v3494 = vcombine.low %v3469, %v3477
    %v3495 = vcombine.high %v3469, %v3477
    %v3497 = vunpack.c.l.s4 1934713408
    %v3498 = vunpack.c.0.s8 %v3497
    %v3499 = vlaneseq
    %v3500 = vshrl.u32 %v3499, 7
    %v3501 = vsub.s32 %v3498, %v3500
    %v3502 = vrot.slane %v3494, %v3501
    %v3504 = vunpack.c.l.s4 1934713408
    %v3505 = vunpack.c.0.s8 %v3504
    %v3506 = vlaneseq
    %v3507 = vshrl.u32 %v3506, 7
    %v3508 = vsub.s32 %v3505, %v3507
    %v3509 = vrot.slane %v3495, %v3508
    %v3510 = vcombine.low %v3486, %v3502
    %v3511 = vcombine.high %v3486, %v3502
    %v3512 = vcombine.low %v3493, %v3509
    %v3513 = vcombine.high %v3493, %v3509
    %v3514 = vpack.c.bf16 %v3442, %v3442
    %v3515 = vpack.c.bf16 %v3443, %v3443
    %v3516 = vpack.c.bf16 %v3444, %v3444
    %v3517 = vpack.c.bf16 %v3445, %v3445
    %v3518 = vpack.c.bf16 %v3510, %v3510
    %v3519 = vpack.c.bf16 %v3511, %v3511
    %v3520 = vpack.c.bf16 %v3512, %v3512
    %v3521 = vpack.c.bf16 %v3513, %v3513
    %v3523 = vsel %vm1091, %v3226, 0
    %v3526 = vsel %vm1091, %v3370, 0
    %3528 = vmatprep.subr.bf16.mxu0 0
    %3529 = vmatpush1.bf16.xpose.msra.mxu0 %v3526
    %3530 = vmatprep.subr.bf16.mxu0 0
    %3531 = vmatpush1.bf16.xpose.msra.mxu0 0
    %3532 = vmatprep.subr.bf16.mxu0 0
    %3533 = vmatpush1.bf16.xpose.msra.mxu0 0
    %3534 = vmatprep.subr.bf16.mxu0 0
    %3535 = vmatpush1.bf16.xpose.msra.mxu0 0
    %3536 = vmatprep.subr.bf16.mxu0 0
    %3537 = vmatpush1.bf16.xpose.msra.mxu0 0
    %3538 = vmatprep.subr.bf16.mxu0 0
    %3539 = vmatpush1.bf16.xpose.msra.mxu0 0
    %3540 = vmatprep.subr.bf16.mxu0 0
    %3541 = vmatpush1.bf16.xpose.msra.mxu0 0
    %3542 = vmatprep.subr.bf16.mxu0 0
    %3543 = vmatpush1.bf16.xpose.msra.mxu0 0
    %3544 = vmatprep.subr.bf16.mxu0 0
    %3545 = vmatpush1.bf16.xpose.msra.mxu0 0
    %3546 = vmatprep.subr.bf16.mxu0 0
    %3547 = vmatpush1.bf16.xpose.msra.mxu0 0
    %3548 = vmatprep.subr.bf16.mxu0 0
    %3549 = vmatpush1.bf16.xpose.msra.mxu0 0
    %3550 = vmatprep.subr.bf16.mxu0 0
    %3551 = vmatpush1.bf16.xpose.msra.mxu0 0
    %3552 = vmatprep.subr.bf16.mxu0 0
    %3553 = vmatpush1.bf16.xpose.msra.mxu0 0
    %3554 = vmatprep.subr.bf16.mxu0 0
    %3555 = vmatpush1.bf16.xpose.msra.mxu0 0
    %3556 = vmatprep.subr.bf16.mxu0 0
    %3557 = vmatpush1.bf16.xpose.msra.mxu0 0
    %3558 = vmatprep.subr.bf16.mxu0 0
    %3559 = vmatpush1.bf16.xpose.msra.mxu0 0
    %3560 = vmatprep.mubr.bf16.mxu0 0
    %3561 = vmatmul.mubr.bf16.gmra.mrb[0].mxu0 %v3523
    %v3562 = vpop.f32.mrb[0].mxu0
    %v3563 = vadd.f32 %v107, %v3562
    %v3564 = vpop.f32.mrb[0].mxu0
    %v3565 = vpop.f32.mrb[0].mxu0
    %v3566 = vpop.f32.mrb[0].mxu0
    %3567 = vdwg.mxu0
    %v3569 = vsel %vm1091, %v3227, 0
    %v3572 = vsel %vm1091, %v3371, 0
    %3574 = vmatprep.subr.bf16.mxu0 0
    %3575 = vmatpush1.bf16.xpose.msra.mxu0 %v3572
    %3576 = vmatprep.subr.bf16.mxu0 0
    %3577 = vmatpush1.bf16.xpose.msra.mxu0 0
    %3578 = vmatprep.subr.bf16.mxu0 0
    %3579 = vmatpush1.bf16.xpose.msra.mxu0 0
    %3580 = vmatprep.subr.bf16.mxu0 0
    %3581 = vmatpush1.bf16.xpose.msra.mxu0 0
    %3582 = vmatprep.subr.bf16.mxu0 0
    %3583 = vmatpush1.bf16.xpose.msra.mxu0 0
    %3584 = vmatprep.subr.bf16.mxu0 0
    %3585 = vmatpush1.bf16.xpose.msra.mxu0 0
    %3586 = vmatprep.subr.bf16.mxu0 0
    %3587 = vmatpush1.bf16.xpose.msra.mxu0 0
    %3588 = vmatprep.subr.bf16.mxu0 0
    %3589 = vmatpush1.bf16.xpose.msra.mxu0 0
    %3590 = vmatprep.subr.bf16.mxu0 0
    %3591 = vmatpush1.bf16.xpose.msra.mxu0 0
    %3592 = vmatprep.subr.bf16.mxu0 0
    %3593 = vmatpush1.bf16.xpose.msra.mxu0 0
    %3594 = vmatprep.subr.bf16.mxu0 0
    %3595 = vmatpush1.bf16.xpose.msra.mxu0 0
    %3596 = vmatprep.subr.bf16.mxu0 0
    %3597 = vmatpush1.bf16.xpose.msra.mxu0 0
    %3598 = vmatprep.subr.bf16.mxu0 0
    %3599 = vmatpush1.bf16.xpose.msra.mxu0 0
    %3600 = vmatprep.subr.bf16.mxu0 0
    %3601 = vmatpush1.bf16.xpose.msra.mxu0 0
    %3602 = vmatprep.subr.bf16.mxu0 0
    %3603 = vmatpush1.bf16.xpose.msra.mxu0 0
    %3604 = vmatprep.subr.bf16.mxu0 0
    %3605 = vmatpush1.bf16.xpose.msra.mxu0 0
    %3606 = vmatprep.mubr.bf16.mxu0 0
    %3607 = vmatmul.mubr.bf16.gmra.mrb[0].mxu0 %v3569
    %v3608 = vpop.f32.mrb[0].mxu0
    %v3609 = vadd.f32 %v107, %v3608
    %v3610 = vpop.f32.mrb[0].mxu0
    %v3611 = vpop.f32.mrb[0].mxu0
    %v3612 = vpop.f32.mrb[0].mxu0
    %3613 = vdwg.mxu0
    %v3615 = vsel %vm1091, %v3228, 0
    %v3618 = vsel %vm1091, %v3372, 0
    %3620 = vmatprep.subr.bf16.mxu0 0
    %3621 = vmatpush1.bf16.xpose.msra.mxu0 %v3618
    %3622 = vmatprep.subr.bf16.mxu0 0
    %3623 = vmatpush1.bf16.xpose.msra.mxu0 0
    %3624 = vmatprep.subr.bf16.mxu0 0
    %3625 = vmatpush1.bf16.xpose.msra.mxu0 0
    %3626 = vmatprep.subr.bf16.mxu0 0
    %3627 = vmatpush1.bf16.xpose.msra.mxu0 0
    %3628 = vmatprep.subr.bf16.mxu0 0
    %3629 = vmatpush1.bf16.xpose.msra.mxu0 0
    %3630 = vmatprep.subr.bf16.mxu0 0
    %3631 = vmatpush1.bf16.xpose.msra.mxu0 0
    %3632 = vmatprep.subr.bf16.mxu0 0
    %3633 = vmatpush1.bf16.xpose.msra.mxu0 0
    %3634 = vmatprep.subr.bf16.mxu0 0
    %3635 = vmatpush1.bf16.xpose.msra.mxu0 0
    %3636 = vmatprep.subr.bf16.mxu0 0
    %3637 = vmatpush1.bf16.xpose.msra.mxu0 0
    %3638 = vmatprep.subr.bf16.mxu0 0
    %3639 = vmatpush1.bf16.xpose.msra.mxu0 0
    %3640 = vmatprep.subr.bf16.mxu0 0
    %3641 = vmatpush1.bf16.xpose.msra.mxu0 0
    %3642 = vmatprep.subr.bf16.mxu0 0
    %3643 = vmatpush1.bf16.xpose.msra.mxu0 0
    %3644 = vmatprep.subr.bf16.mxu0 0
    %3645 = vmatpush1.bf16.xpose.msra.mxu0 0
    %3646 = vmatprep.subr.bf16.mxu0 0
    %3647 = vmatpush1.bf16.xpose.msra.mxu0 0
    %3648 = vmatprep.subr.bf16.mxu0 0
    %3649 = vmatpush1.bf16.xpose.msra.mxu0 0
    %3650 = vmatprep.subr.bf16.mxu0 0
    %3651 = vmatpush1.bf16.xpose.msra.mxu0 0
    %3652 = vmatprep.mubr.bf16.mxu0 0
    %3653 = vmatmul.mubr.bf16.gmra.mrb[0].mxu0 %v3615
    %v3654 = vpop.f32.mrb[0].mxu0
    %v3655 = vadd.f32 %v107, %v3654
    %v3656 = vpop.f32.mrb[0].mxu0
    %v3657 = vpop.f32.mrb[0].mxu0
    %v3658 = vpop.f32.mrb[0].mxu0
    %3659 = vdwg.mxu0
    %v3661 = vsel %vm1091, %v3229, 0
    %v3664 = vsel %vm1091, %v3373, 0
    %3666 = vmatprep.subr.bf16.mxu0 0
    %3667 = vmatpush1.bf16.xpose.msra.mxu0 %v3664
    %3668 = vmatprep.subr.bf16.mxu0 0
    %3669 = vmatpush1.bf16.xpose.msra.mxu0 0
    %3670 = vmatprep.subr.bf16.mxu0 0
    %3671 = vmatpush1.bf16.xpose.msra.mxu0 0
    %3672 = vmatprep.subr.bf16.mxu0 0
    %3673 = vmatpush1.bf16.xpose.msra.mxu0 0
    %3674 = vmatprep.subr.bf16.mxu0 0
    %3675 = vmatpush1.bf16.xpose.msra.mxu0 0
    %3676 = vmatprep.subr.bf16.mxu0 0
    %3677 = vmatpush1.bf16.xpose.msra.mxu0 0
    %3678 = vmatprep.subr.bf16.mxu0 0
    %3679 = vmatpush1.bf16.xpose.msra.mxu0 0
    %3680 = vmatprep.subr.bf16.mxu0 0
    %3681 = vmatpush1.bf16.xpose.msra.mxu0 0
    %3682 = vmatprep.subr.bf16.mxu0 0
    %3683 = vmatpush1.bf16.xpose.msra.mxu0 0
    %3684 = vmatprep.subr.bf16.mxu0 0
    %3685 = vmatpush1.bf16.xpose.msra.mxu0 0
    %3686 = vmatprep.subr.bf16.mxu0 0
    %3687 = vmatpush1.bf16.xpose.msra.mxu0 0
    %3688 = vmatprep.subr.bf16.mxu0 0
    %3689 = vmatpush1.bf16.xpose.msra.mxu0 0
    %3690 = vmatprep.subr.bf16.mxu0 0
    %3691 = vmatpush1.bf16.xpose.msra.mxu0 0
    %3692 = vmatprep.subr.bf16.mxu0 0
    %3693 = vmatpush1.bf16.xpose.msra.mxu0 0
    %3694 = vmatprep.subr.bf16.mxu0 0
    %3695 = vmatpush1.bf16.xpose.msra.mxu0 0
    %3696 = vmatprep.subr.bf16.mxu0 0
    %3697 = vmatpush1.bf16.xpose.msra.mxu0 0
    %3698 = vmatprep.mubr.bf16.mxu0 0
    %3699 = vmatmul.mubr.bf16.gmra.mrb[0].mxu0 %v3661
    %v3700 = vpop.f32.mrb[0].mxu0
    %v3701 = vadd.f32 %v107, %v3700
    %v3702 = vpop.f32.mrb[0].mxu0
    %v3703 = vpop.f32.mrb[0].mxu0
    %v3704 = vpop.f32.mrb[0].mxu0
    %3705 = vdwg.mxu0
    %v3707 = vsel %vm1091, %v3230, 0
    %v3710 = vsel %vm1091, %v3374, 0
    %3712 = vmatprep.subr.bf16.mxu0 0
    %3713 = vmatpush1.bf16.xpose.msra.mxu0 %v3710
    %3714 = vmatprep.subr.bf16.mxu0 0
    %3715 = vmatpush1.bf16.xpose.msra.mxu0 0
    %3716 = vmatprep.subr.bf16.mxu0 0
    %3717 = vmatpush1.bf16.xpose.msra.mxu0 0
    %3718 = vmatprep.subr.bf16.mxu0 0
    %3719 = vmatpush1.bf16.xpose.msra.mxu0 0
    %3720 = vmatprep.subr.bf16.mxu0 0
    %3721 = vmatpush1.bf16.xpose.msra.mxu0 0
    %3722 = vmatprep.subr.bf16.mxu0 0
    %3723 = vmatpush1.bf16.xpose.msra.mxu0 0
    %3724 = vmatprep.subr.bf16.mxu0 0
    %3725 = vmatpush1.bf16.xpose.msra.mxu0 0
    %3726 = vmatprep.subr.bf16.mxu0 0
    %3727 = vmatpush1.bf16.xpose.msra.mxu0 0
    %3728 = vmatprep.subr.bf16.mxu0 0
    %3729 = vmatpush1.bf16.xpose.msra.mxu0 0
    %3730 = vmatprep.subr.bf16.mxu0 0
    %3731 = vmatpush1.bf16.xpose.msra.mxu0 0
    %3732 = vmatprep.subr.bf16.mxu0 0
    %3733 = vmatpush1.bf16.xpose.msra.mxu0 0
    %3734 = vmatprep.subr.bf16.mxu0 0
    %3735 = vmatpush1.bf16.xpose.msra.mxu0 0
    %3736 = vmatprep.subr.bf16.mxu0 0
    %3737 = vmatpush1.bf16.xpose.msra.mxu0 0
    %3738 = vmatprep.subr.bf16.mxu0 0
    %3739 = vmatpush1.bf16.xpose.msra.mxu0 0
    %3740 = vmatprep.subr.bf16.mxu0 0
    %3741 = vmatpush1.bf16.xpose.msra.mxu0 0
    %3742 = vmatprep.subr.bf16.mxu0 0
    %3743 = vmatpush1.bf16.xpose.msra.mxu0 0
    %3744 = vmatprep.mubr.bf16.mxu0 0
    %3745 = vmatmul.mubr.bf16.gmra.mrb[0].mxu0 %v3707
    %v3746 = vpop.f32.mrb[0].mxu0
    %v3747 = vadd.f32 %v111, %v3746
    %v3748 = vpop.f32.mrb[0].mxu0
    %v3749 = vpop.f32.mrb[0].mxu0
    %v3750 = vpop.f32.mrb[0].mxu0
    %3751 = vdwg.mxu0
    %v3753 = vsel %vm1091, %v3231, 0
    %v3756 = vsel %vm1091, %v3375, 0
    %3758 = vmatprep.subr.bf16.mxu0 0
    %3759 = vmatpush1.bf16.xpose.msra.mxu0 %v3756
    %3760 = vmatprep.subr.bf16.mxu0 0
    %3761 = vmatpush1.bf16.xpose.msra.mxu0 0
    %3762 = vmatprep.subr.bf16.mxu0 0
    %3763 = vmatpush1.bf16.xpose.msra.mxu0 0
    %3764 = vmatprep.subr.bf16.mxu0 0
    %3765 = vmatpush1.bf16.xpose.msra.mxu0 0
    %3766 = vmatprep.subr.bf16.mxu0 0
    %3767 = vmatpush1.bf16.xpose.msra.mxu0 0
    %3768 = vmatprep.subr.bf16.mxu0 0
    %3769 = vmatpush1.bf16.xpose.msra.mxu0 0
    %3770 = vmatprep.subr.bf16.mxu0 0
    %3771 = vmatpush1.bf16.xpose.msra.mxu0 0
    %3772 = vmatprep.subr.bf16.mxu0 0
    %3773 = vmatpush1.bf16.xpose.msra.mxu0 0
    %3774 = vmatprep.subr.bf16.mxu0 0
    %3775 = vmatpush1.bf16.xpose.msra.mxu0 0
    %3776 = vmatprep.subr.bf16.mxu0 0
    %3777 = vmatpush1.bf16.xpose.msra.mxu0 0
    %3778 = vmatprep.subr.bf16.mxu0 0
    %3779 = vmatpush1.bf16.xpose.msra.mxu0 0
    %3780 = vmatprep.subr.bf16.mxu0 0
    %3781 = vmatpush1.bf16.xpose.msra.mxu0 0
    %3782 = vmatprep.subr.bf16.mxu0 0
    %3783 = vmatpush1.bf16.xpose.msra.mxu0 0
    %3784 = vmatprep.subr.bf16.mxu0 0
    %3785 = vmatpush1.bf16.xpose.msra.mxu0 0
    %3786 = vmatprep.subr.bf16.mxu0 0
    %3787 = vmatpush1.bf16.xpose.msra.mxu0 0
    %3788 = vmatprep.subr.bf16.mxu0 0
    %3789 = vmatpush1.bf16.xpose.msra.mxu0 0
    %3790 = vmatprep.mubr.bf16.mxu0 0
    %3791 = vmatmul.mubr.bf16.gmra.mrb[0].mxu0 %v3753
    %v3792 = vpop.f32.mrb[0].mxu0
    %v3793 = vadd.f32 %v111, %v3792
    %v3794 = vpop.f32.mrb[0].mxu0
    %v3795 = vpop.f32.mrb[0].mxu0
    %v3796 = vpop.f32.mrb[0].mxu0
    %3797 = vdwg.mxu0
    %v3799 = vsel %vm1091, %v3232, 0
    %v3802 = vsel %vm1091, %v3376, 0
    %3804 = vmatprep.subr.bf16.mxu0 0
    %3805 = vmatpush1.bf16.xpose.msra.mxu0 %v3802
    %3806 = vmatprep.subr.bf16.mxu0 0
    %3807 = vmatpush1.bf16.xpose.msra.mxu0 0
    %3808 = vmatprep.subr.bf16.mxu0 0
    %3809 = vmatpush1.bf16.xpose.msra.mxu0 0
    %3810 = vmatprep.subr.bf16.mxu0 0
    %3811 = vmatpush1.bf16.xpose.msra.mxu0 0
    %3812 = vmatprep.subr.bf16.mxu0 0
    %3813 = vmatpush1.bf16.xpose.msra.mxu0 0
    %3814 = vmatprep.subr.bf16.mxu0 0
    %3815 = vmatpush1.bf16.xpose.msra.mxu0 0
    %3816 = vmatprep.subr.bf16.mxu0 0
    %3817 = vmatpush1.bf16.xpose.msra.mxu0 0
    %3818 = vmatprep.subr.bf16.mxu0 0
    %3819 = vmatpush1.bf16.xpose.msra.mxu0 0
    %3820 = vmatprep.subr.bf16.mxu0 0
    %3821 = vmatpush1.bf16.xpose.msra.mxu0 0
    %3822 = vmatprep.subr.bf16.mxu0 0
    %3823 = vmatpush1.bf16.xpose.msra.mxu0 0
    %3824 = vmatprep.subr.bf16.mxu0 0
    %3825 = vmatpush1.bf16.xpose.msra.mxu0 0
    %3826 = vmatprep.subr.bf16.mxu0 0
    %3827 = vmatpush1.bf16.xpose.msra.mxu0 0
    %3828 = vmatprep.subr.bf16.mxu0 0
    %3829 = vmatpush1.bf16.xpose.msra.mxu0 0
    %3830 = vmatprep.subr.bf16.mxu0 0
    %3831 = vmatpush1.bf16.xpose.msra.mxu0 0
    %3832 = vmatprep.subr.bf16.mxu0 0
    %3833 = vmatpush1.bf16.xpose.msra.mxu0 0
    %3834 = vmatprep.subr.bf16.mxu0 0
    %3835 = vmatpush1.bf16.xpose.msra.mxu0 0
    %3836 = vmatprep.mubr.bf16.mxu0 0
    %3837 = vmatmul.mubr.bf16.gmra.mrb[0].mxu0 %v3799
    %v3838 = vpop.f32.mrb[0].mxu0
    %v3839 = vadd.f32 %v111, %v3838
    %v3840 = vpop.f32.mrb[0].mxu0
    %v3841 = vpop.f32.mrb[0].mxu0
    %v3842 = vpop.f32.mrb[0].mxu0
    %3843 = vdwg.mxu0
    %v3845 = vsel %vm1091, %v3233, 0
    %v3848 = vsel %vm1091, %v3377, 0
    %3850 = vmatprep.subr.bf16.mxu0 0
    %3851 = vmatpush1.bf16.xpose.msra.mxu0 %v3848
    %3852 = vmatprep.subr.bf16.mxu0 0
    %3853 = vmatpush1.bf16.xpose.msra.mxu0 0
    %3854 = vmatprep.subr.bf16.mxu0 0
    %3855 = vmatpush1.bf16.xpose.msra.mxu0 0
    %3856 = vmatprep.subr.bf16.mxu0 0
    %3857 = vmatpush1.bf16.xpose.msra.mxu0 0
    %3858 = vmatprep.subr.bf16.mxu0 0
    %3859 = vmatpush1.bf16.xpose.msra.mxu0 0
    %3860 = vmatprep.subr.bf16.mxu0 0
    %3861 = vmatpush1.bf16.xpose.msra.mxu0 0
    %3862 = vmatprep.subr.bf16.mxu0 0
    %3863 = vmatpush1.bf16.xpose.msra.mxu0 0
    %3864 = vmatprep.subr.bf16.mxu0 0
    %3865 = vmatpush1.bf16.xpose.msra.mxu0 0
    %3866 = vmatprep.subr.bf16.mxu0 0
    %3867 = vmatpush1.bf16.xpose.msra.mxu0 0
    %3868 = vmatprep.subr.bf16.mxu0 0
    %3869 = vmatpush1.bf16.xpose.msra.mxu0 0
    %3870 = vmatprep.subr.bf16.mxu0 0
    %3871 = vmatpush1.bf16.xpose.msra.mxu0 0
    %3872 = vmatprep.subr.bf16.mxu0 0
    %3873 = vmatpush1.bf16.xpose.msra.mxu0 0
    %3874 = vmatprep.subr.bf16.mxu0 0
    %3875 = vmatpush1.bf16.xpose.msra.mxu0 0
    %3876 = vmatprep.subr.bf16.mxu0 0
    %3877 = vmatpush1.bf16.xpose.msra.mxu0 0
    %3878 = vmatprep.subr.bf16.mxu0 0
    %3879 = vmatpush1.bf16.xpose.msra.mxu0 0
    %3880 = vmatprep.subr.bf16.mxu0 0
    %3881 = vmatpush1.bf16.xpose.msra.mxu0 0
    %3882 = vmatprep.mubr.bf16.mxu0 0
    %3883 = vmatmul.mubr.bf16.gmra.mrb[0].mxu0 %v3845
    %v3884 = vpop.f32.mrb[0].mxu0
    %v3885 = vadd.f32 %v111, %v3884
    %v3886 = vpop.f32.mrb[0].mxu0
    %v3887 = vpop.f32.mrb[0].mxu0
    %v3888 = vpop.f32.mrb[0].mxu0
    %3889 = vdwg.mxu0
    %v3890 = vsel %vm1091, %v3563, -inf
    %3891 = vmax.xlane.f32.xlu0 %v3890
    %v3892 = vpop.xlane.xlu0 %3891
    %v3893 = vsel %vm1091, %v3609, -inf
    %3894 = vmax.xlane.f32.xlu0 %v3893
    %v3895 = vpop.xlane.xlu0 %3894
    %v3896 = vsel %vm1091, %v3655, -inf
    %3897 = vmax.xlane.f32.xlu0 %v3896
    %v3898 = vpop.xlane.xlu0 %3897
    %v3899 = vsel %vm1091, %v3701, -inf
    %3900 = vmax.xlane.f32.xlu0 %v3899
    %v3901 = vpop.xlane.xlu0 %3900
    %v3902 = vsel %vm1091, %v3747, -inf
    %3903 = vmax.xlane.f32.xlu0 %v3902
    %v3904 = vpop.xlane.xlu0 %3903
    %v3905 = vsel %vm1091, %v3793, -inf
    %3906 = vmax.xlane.f32.xlu0 %v3905
    %v3907 = vpop.xlane.xlu0 %3906
    %v3908 = vsel %vm1091, %v3839, -inf
    %3909 = vmax.xlane.f32.xlu0 %v3908
    %v3910 = vpop.xlane.xlu0 %3909
    %v3911 = vsel %vm1091, %v3885, -inf
    %3912 = vmax.xlane.f32.xlu0 %v3911
    %v3913 = vpop.xlane.xlu0 %3912
    %v3914 = vsub.f32 %v3563, %v3892
    %v3915 = vsub.f32 %v3609, %v3895
    %v3916 = vsub.f32 %v3655, %v3898
    %v3917 = vsub.f32 %v3701, %v3901
    %v3918 = vsub.f32 %v3747, %v3904
    %v3919 = vsub.f32 %v3793, %v3907
    %v3920 = vsub.f32 %v3839, %v3910
    %v3921 = vsub.f32 %v3885, %v3913
    %v3922 = vmul.f32 %v3914, 1.442695
    %v3923 = vpow.pop %v3922
    %v3924 = vmul.f32 %v3915, 1.442695
    %v3925 = vpow.pop %v3924
    %v3926 = vmul.f32 %v3916, 1.442695
    %v3927 = vpow.pop %v3926
    %v3928 = vmul.f32 %v3917, 1.442695
    %v3929 = vpow.pop %v3928
    %v3930 = vmul.f32 %v3918, 1.442695
    %v3931 = vpow.pop %v3930
    %v3932 = vmul.f32 %v3919, 1.442695
    %v3933 = vpow.pop %v3932
    %v3934 = vmul.f32 %v3920, 1.442695
    %v3935 = vpow.pop %v3934
    %v3936 = vmul.f32 %v3921, 1.442695
    %v3937 = vpow.pop %v3936
    %v3938 = vsel %vm1091, %v3923, 0.0
    %3939 = vadd.xlane.f32.xlu0 %v3938
    %v3940 = vpop.xlane.xlu0 %3939
    %v3941 = vsel %vm1091, %v3925, 0.0
    %3942 = vadd.xlane.f32.xlu0 %v3941
    %v3943 = vpop.xlane.xlu0 %3942
    %v3944 = vsel %vm1091, %v3927, 0.0
    %3945 = vadd.xlane.f32.xlu0 %v3944
    %v3946 = vpop.xlane.xlu0 %3945
    %v3947 = vsel %vm1091, %v3929, 0.0
    %3948 = vadd.xlane.f32.xlu0 %v3947
    %v3949 = vpop.xlane.xlu0 %3948
    %v3950 = vsel %vm1091, %v3931, 0.0
    %3951 = vadd.xlane.f32.xlu0 %v3950
    %v3952 = vpop.xlane.xlu0 %3951
    %v3953 = vsel %vm1091, %v3933, 0.0
    %3954 = vadd.xlane.f32.xlu0 %v3953
    %v3955 = vpop.xlane.xlu0 %3954
    %v3956 = vsel %vm1091, %v3935, 0.0
    %3957 = vadd.xlane.f32.xlu0 %v3956
    %v3958 = vpop.xlane.xlu0 %3957
    %v3959 = vsel %vm1091, %v3937, 0.0
    %3960 = vadd.xlane.f32.xlu0 %v3959
    %v3961 = vpop.xlane.xlu0 %3960
    %v3962 = vrcp.pop %v3940
    %v3963 = vrcp.pop %v3943
    %v3964 = vrcp.pop %v3946
    %v3965 = vrcp.pop %v3949
    %v3966 = vrcp.pop %v3952
    %v3967 = vrcp.pop %v3955
    %v3968 = vrcp.pop %v3958
    %v3969 = vrcp.pop %v3961
    %v3970 = vmul.f32 %v3923, %v3962
    %v3971 = vmul.f32 %v3925, %v3963
    %v3972 = vmul.f32 %v3927, %v3964
    %v3973 = vmul.f32 %v3929, %v3965
    %v3974 = vmul.f32 %v3931, %v3966
    %v3975 = vmul.f32 %v3933, %v3967
    %v3976 = vmul.f32 %v3935, %v3968
    %v3977 = vmul.f32 %v3937, %v3969
    %v3978 = vpack.c.bf16 %v3970, %v3970
    %v3979 = vpack.c.bf16 %v3971, %v3971
    %v3980 = vpack.c.bf16 %v3972, %v3972
    %v3981 = vpack.c.bf16 %v3973, %v3973
    %v3982 = vpack.c.bf16 %v3974, %v3974
    %v3983 = vpack.c.bf16 %v3975, %v3975
    %v3984 = vpack.c.bf16 %v3976, %v3976
    %v3985 = vpack.c.bf16 %v3977, %v3977
    %v3987 = vsel %vm1091, %v3978, 0
    %v3990 = vsel %vm1559, %v3514, 0
    %3992 = vmatprep.subr.bf16.mxu0 0
    %3993 = vmatpush1.bf16.msra.mxu0 %v3990
    %3994 = vmatprep.subr.bf16.mxu0 0
    %3995 = vmatpush1.bf16.msra.mxu0 0
    %3996 = vmatprep.subr.bf16.mxu0 0
    %3997 = vmatpush1.bf16.msra.mxu0 0
    %3998 = vmatprep.subr.bf16.mxu0 0
    %3999 = vmatpush1.bf16.msra.mxu0 0
    %4000 = vmatprep.subr.bf16.mxu0 0
    %4001 = vmatpush1.bf16.msra.mxu0 0
    %4002 = vmatprep.subr.bf16.mxu0 0
    %4003 = vmatpush1.bf16.msra.mxu0 0
    %4004 = vmatprep.subr.bf16.mxu0 0
    %4005 = vmatpush1.bf16.msra.mxu0 0
    %4006 = vmatprep.subr.bf16.mxu0 0
    %4007 = vmatpush1.bf16.msra.mxu0 0
    %4008 = vmatprep.subr.bf16.mxu0 0
    %4009 = vmatpush1.bf16.msra.mxu0 0
    %4010 = vmatprep.subr.bf16.mxu0 0
    %4011 = vmatpush1.bf16.msra.mxu0 0
    %4012 = vmatprep.subr.bf16.mxu0 0
    %4013 = vmatpush1.bf16.msra.mxu0 0
    %4014 = vmatprep.subr.bf16.mxu0 0
    %4015 = vmatpush1.bf16.msra.mxu0 0
    %4016 = vmatprep.subr.bf16.mxu0 0
    %4017 = vmatpush1.bf16.msra.mxu0 0
    %4018 = vmatprep.subr.bf16.mxu0 0
    %4019 = vmatpush1.bf16.msra.mxu0 0
    %4020 = vmatprep.subr.bf16.mxu0 0
    %4021 = vmatpush1.bf16.msra.mxu0 0
    %4022 = vmatprep.subr.bf16.mxu0 0
    %4023 = vmatpush1.bf16.msra.mxu0 0
    %4024 = vmatprep.mubr.bf16.mxu0 0
    %4025 = vmatmul.mubr.bf16.gmra.mrb[0].mxu0 %v3987
    %v4026 = vpop.f32.mrb[0].mxu0
    %v4027 = vadd.f32 0.0, %v4026
    %v4028 = vpop.f32.mrb[0].mxu0
    %v4029 = vpop.f32.mrb[0].mxu0
    %v4030 = vpop.f32.mrb[0].mxu0
    %4031 = vdwg.mxu0
    %v4033 = vsel %vm1091, %v3979, 0
    %v4036 = vsel %vm1559, %v3515, 0
    %4038 = vmatprep.subr.bf16.mxu0 0
    %4039 = vmatpush1.bf16.msra.mxu0 %v4036
    %4040 = vmatprep.subr.bf16.mxu0 0
    %4041 = vmatpush1.bf16.msra.mxu0 0
    %4042 = vmatprep.subr.bf16.mxu0 0
    %4043 = vmatpush1.bf16.msra.mxu0 0
    %4044 = vmatprep.subr.bf16.mxu0 0
    %4045 = vmatpush1.bf16.msra.mxu0 0
    %4046 = vmatprep.subr.bf16.mxu0 0
    %4047 = vmatpush1.bf16.msra.mxu0 0
    %4048 = vmatprep.subr.bf16.mxu0 0
    %4049 = vmatpush1.bf16.msra.mxu0 0
    %4050 = vmatprep.subr.bf16.mxu0 0
    %4051 = vmatpush1.bf16.msra.mxu0 0
    %4052 = vmatprep.subr.bf16.mxu0 0
    %4053 = vmatpush1.bf16.msra.mxu0 0
    %4054 = vmatprep.subr.bf16.mxu0 0
    %4055 = vmatpush1.bf16.msra.mxu0 0
    %4056 = vmatprep.subr.bf16.mxu0 0
    %4057 = vmatpush1.bf16.msra.mxu0 0
    %4058 = vmatprep.subr.bf16.mxu0 0
    %4059 = vmatpush1.bf16.msra.mxu0 0
    %4060 = vmatprep.subr.bf16.mxu0 0
    %4061 = vmatpush1.bf16.msra.mxu0 0
    %4062 = vmatprep.subr.bf16.mxu0 0
    %4063 = vmatpush1.bf16.msra.mxu0 0
    %4064 = vmatprep.subr.bf16.mxu0 0
    %4065 = vmatpush1.bf16.msra.mxu0 0
    %4066 = vmatprep.subr.bf16.mxu0 0
    %4067 = vmatpush1.bf16.msra.mxu0 0
    %4068 = vmatprep.subr.bf16.mxu0 0
    %4069 = vmatpush1.bf16.msra.mxu0 0
    %4070 = vmatprep.mubr.bf16.mxu0 0
    %4071 = vmatmul.mubr.bf16.gmra.mrb[0].mxu0 %v4033
    %v4072 = vpop.f32.mrb[0].mxu0
    %v4073 = vadd.f32 0.0, %v4072
    %v4074 = vpop.f32.mrb[0].mxu0
    %v4075 = vpop.f32.mrb[0].mxu0
    %v4076 = vpop.f32.mrb[0].mxu0
    %4077 = vdwg.mxu0
    %v4079 = vsel %vm1091, %v3980, 0
    %v4082 = vsel %vm1559, %v3516, 0
    %4084 = vmatprep.subr.bf16.mxu0 0
    %4085 = vmatpush1.bf16.msra.mxu0 %v4082
    %4086 = vmatprep.subr.bf16.mxu0 0
    %4087 = vmatpush1.bf16.msra.mxu0 0
    %4088 = vmatprep.subr.bf16.mxu0 0
    %4089 = vmatpush1.bf16.msra.mxu0 0
    %4090 = vmatprep.subr.bf16.mxu0 0
    %4091 = vmatpush1.bf16.msra.mxu0 0
    %4092 = vmatprep.subr.bf16.mxu0 0
    %4093 = vmatpush1.bf16.msra.mxu0 0
    %4094 = vmatprep.subr.bf16.mxu0 0
    %4095 = vmatpush1.bf16.msra.mxu0 0
    %4096 = vmatprep.subr.bf16.mxu0 0
    %4097 = vmatpush1.bf16.msra.mxu0 0
    %4098 = vmatprep.subr.bf16.mxu0 0
    %4099 = vmatpush1.bf16.msra.mxu0 0
    %4100 = vmatprep.subr.bf16.mxu0 0
    %4101 = vmatpush1.bf16.msra.mxu0 0
    %4102 = vmatprep.subr.bf16.mxu0 0
    %4103 = vmatpush1.bf16.msra.mxu0 0
    %4104 = vmatprep.subr.bf16.mxu0 0
    %4105 = vmatpush1.bf16.msra.mxu0 0
    %4106 = vmatprep.subr.bf16.mxu0 0
    %4107 = vmatpush1.bf16.msra.mxu0 0
    %4108 = vmatprep.subr.bf16.mxu0 0
    %4109 = vmatpush1.bf16.msra.mxu0 0
    %4110 = vmatprep.subr.bf16.mxu0 0
    %4111 = vmatpush1.bf16.msra.mxu0 0
    %4112 = vmatprep.subr.bf16.mxu0 0
    %4113 = vmatpush1.bf16.msra.mxu0 0
    %4114 = vmatprep.subr.bf16.mxu0 0
    %4115 = vmatpush1.bf16.msra.mxu0 0
    %4116 = vmatprep.mubr.bf16.mxu0 0
    %4117 = vmatmul.mubr.bf16.gmra.mrb[0].mxu0 %v4079
    %v4118 = vpop.f32.mrb[0].mxu0
    %v4119 = vadd.f32 0.0, %v4118
    %v4120 = vpop.f32.mrb[0].mxu0
    %v4121 = vpop.f32.mrb[0].mxu0
    %v4122 = vpop.f32.mrb[0].mxu0
    %4123 = vdwg.mxu0
    %v4125 = vsel %vm1091, %v3981, 0
    %v4128 = vsel %vm1559, %v3517, 0
    %4130 = vmatprep.subr.bf16.mxu0 0
    %4131 = vmatpush1.bf16.msra.mxu0 %v4128
    %4132 = vmatprep.subr.bf16.mxu0 0
    %4133 = vmatpush1.bf16.msra.mxu0 0
    %4134 = vmatprep.subr.bf16.mxu0 0
    %4135 = vmatpush1.bf16.msra.mxu0 0
    %4136 = vmatprep.subr.bf16.mxu0 0
    %4137 = vmatpush1.bf16.msra.mxu0 0
    %4138 = vmatprep.subr.bf16.mxu0 0
    %4139 = vmatpush1.bf16.msra.mxu0 0
    %4140 = vmatprep.subr.bf16.mxu0 0
    %4141 = vmatpush1.bf16.msra.mxu0 0
    %4142 = vmatprep.subr.bf16.mxu0 0
    %4143 = vmatpush1.bf16.msra.mxu0 0
    %4144 = vmatprep.subr.bf16.mxu0 0
    %4145 = vmatpush1.bf16.msra.mxu0 0
    %4146 = vmatprep.subr.bf16.mxu0 0
    %4147 = vmatpush1.bf16.msra.mxu0 0
    %4148 = vmatprep.subr.bf16.mxu0 0
    %4149 = vmatpush1.bf16.msra.mxu0 0
    %4150 = vmatprep.subr.bf16.mxu0 0
    %4151 = vmatpush1.bf16.msra.mxu0 0
    %4152 = vmatprep.subr.bf16.mxu0 0
    %4153 = vmatpush1.bf16.msra.mxu0 0
    %4154 = vmatprep.subr.bf16.mxu0 0
    %4155 = vmatpush1.bf16.msra.mxu0 0
    %4156 = vmatprep.subr.bf16.mxu0 0
    %4157 = vmatpush1.bf16.msra.mxu0 0
    %4158 = vmatprep.subr.bf16.mxu0 0
    %4159 = vmatpush1.bf16.msra.mxu0 0
    %4160 = vmatprep.subr.bf16.mxu0 0
    %4161 = vmatpush1.bf16.msra.mxu0 0
    %4162 = vmatprep.mubr.bf16.mxu0 0
    %4163 = vmatmul.mubr.bf16.gmra.mrb[0].mxu0 %v4125
    %v4164 = vpop.f32.mrb[0].mxu0
    %v4165 = vadd.f32 0.0, %v4164
    %v4166 = vpop.f32.mrb[0].mxu0
    %v4167 = vpop.f32.mrb[0].mxu0
    %v4168 = vpop.f32.mrb[0].mxu0
    %4169 = vdwg.mxu0
    %v4171 = vsel %vm1091, %v3982, 0
    %v4174 = vsel %vm1559, %v3518, 0
    %4176 = vmatprep.subr.bf16.mxu0 0
    %4177 = vmatpush1.bf16.msra.mxu0 %v4174
    %4178 = vmatprep.subr.bf16.mxu0 0
    %4179 = vmatpush1.bf16.msra.mxu0 0
    %4180 = vmatprep.subr.bf16.mxu0 0
    %4181 = vmatpush1.bf16.msra.mxu0 0
    %4182 = vmatprep.subr.bf16.mxu0 0
    %4183 = vmatpush1.bf16.msra.mxu0 0
    %4184 = vmatprep.subr.bf16.mxu0 0
    %4185 = vmatpush1.bf16.msra.mxu0 0
    %4186 = vmatprep.subr.bf16.mxu0 0
    %4187 = vmatpush1.bf16.msra.mxu0 0
    %4188 = vmatprep.subr.bf16.mxu0 0
    %4189 = vmatpush1.bf16.msra.mxu0 0
    %4190 = vmatprep.subr.bf16.mxu0 0
    %4191 = vmatpush1.bf16.msra.mxu0 0
    %4192 = vmatprep.subr.bf16.mxu0 0
    %4193 = vmatpush1.bf16.msra.mxu0 0
    %4194 = vmatprep.subr.bf16.mxu0 0
    %4195 = vmatpush1.bf16.msra.mxu0 0
    %4196 = vmatprep.subr.bf16.mxu0 0
    %4197 = vmatpush1.bf16.msra.mxu0 0
    %4198 = vmatprep.subr.bf16.mxu0 0
    %4199 = vmatpush1.bf16.msra.mxu0 0
    %4200 = vmatprep.subr.bf16.mxu0 0
    %4201 = vmatpush1.bf16.msra.mxu0 0
    %4202 = vmatprep.subr.bf16.mxu0 0
    %4203 = vmatpush1.bf16.msra.mxu0 0
    %4204 = vmatprep.subr.bf16.mxu0 0
    %4205 = vmatpush1.bf16.msra.mxu0 0
    %4206 = vmatprep.subr.bf16.mxu0 0
    %4207 = vmatpush1.bf16.msra.mxu0 0
    %4208 = vmatprep.mubr.bf16.mxu0 0
    %4209 = vmatmul.mubr.bf16.gmra.mrb[0].mxu0 %v4171
    %v4210 = vpop.f32.mrb[0].mxu0
    %v4211 = vadd.f32 0.0, %v4210
    %v4212 = vpop.f32.mrb[0].mxu0
    %v4213 = vpop.f32.mrb[0].mxu0
    %v4214 = vpop.f32.mrb[0].mxu0
    %4215 = vdwg.mxu0
    %v4217 = vsel %vm1091, %v3983, 0
    %v4220 = vsel %vm1559, %v3519, 0
    %4222 = vmatprep.subr.bf16.mxu0 0
    %4223 = vmatpush1.bf16.msra.mxu0 %v4220
    %4224 = vmatprep.subr.bf16.mxu0 0
    %4225 = vmatpush1.bf16.msra.mxu0 0
    %4226 = vmatprep.subr.bf16.mxu0 0
    %4227 = vmatpush1.bf16.msra.mxu0 0
    %4228 = vmatprep.subr.bf16.mxu0 0
    %4229 = vmatpush1.bf16.msra.mxu0 0
    %4230 = vmatprep.subr.bf16.mxu0 0
    %4231 = vmatpush1.bf16.msra.mxu0 0
    %4232 = vmatprep.subr.bf16.mxu0 0
    %4233 = vmatpush1.bf16.msra.mxu0 0
    %4234 = vmatprep.subr.bf16.mxu0 0
    %4235 = vmatpush1.bf16.msra.mxu0 0
    %4236 = vmatprep.subr.bf16.mxu0 0
    %4237 = vmatpush1.bf16.msra.mxu0 0
    %4238 = vmatprep.subr.bf16.mxu0 0
    %4239 = vmatpush1.bf16.msra.mxu0 0
    %4240 = vmatprep.subr.bf16.mxu0 0
    %4241 = vmatpush1.bf16.msra.mxu0 0
    %4242 = vmatprep.subr.bf16.mxu0 0
    %4243 = vmatpush1.bf16.msra.mxu0 0
    %4244 = vmatprep.subr.bf16.mxu0 0
    %4245 = vmatpush1.bf16.msra.mxu0 0
    %4246 = vmatprep.subr.bf16.mxu0 0
    %4247 = vmatpush1.bf16.msra.mxu0 0
    %4248 = vmatprep.subr.bf16.mxu0 0
    %4249 = vmatpush1.bf16.msra.mxu0 0
    %4250 = vmatprep.subr.bf16.mxu0 0
    %4251 = vmatpush1.bf16.msra.mxu0 0
    %4252 = vmatprep.subr.bf16.mxu0 0
    %4253 = vmatpush1.bf16.msra.mxu0 0
    %4254 = vmatprep.mubr.bf16.mxu0 0
    %4255 = vmatmul.mubr.bf16.gmra.mrb[0].mxu0 %v4217
    %v4256 = vpop.f32.mrb[0].mxu0
    %v4257 = vadd.f32 0.0, %v4256
    %v4258 = vpop.f32.mrb[0].mxu0
    %v4259 = vpop.f32.mrb[0].mxu0
    %v4260 = vpop.f32.mrb[0].mxu0
    %4261 = vdwg.mxu0
    %v4263 = vsel %vm1091, %v3984, 0
    %v4266 = vsel %vm1559, %v3520, 0
    %4268 = vmatprep.subr.bf16.mxu0 0
    %4269 = vmatpush1.bf16.msra.mxu0 %v4266
    %4270 = vmatprep.subr.bf16.mxu0 0
    %4271 = vmatpush1.bf16.msra.mxu0 0
    %4272 = vmatprep.subr.bf16.mxu0 0
    %4273 = vmatpush1.bf16.msra.mxu0 0
    %4274 = vmatprep.subr.bf16.mxu0 0
    %4275 = vmatpush1.bf16.msra.mxu0 0
    %4276 = vmatprep.subr.bf16.mxu0 0
    %4277 = vmatpush1.bf16.msra.mxu0 0
    %4278 = vmatprep.subr.bf16.mxu0 0
    %4279 = vmatpush1.bf16.msra.mxu0 0
    %4280 = vmatprep.subr.bf16.mxu0 0
    %4281 = vmatpush1.bf16.msra.mxu0 0
    %4282 = vmatprep.subr.bf16.mxu0 0
    %4283 = vmatpush1.bf16.msra.mxu0 0
    %4284 = vmatprep.subr.bf16.mxu0 0
    %4285 = vmatpush1.bf16.msra.mxu0 0
    %4286 = vmatprep.subr.bf16.mxu0 0
    %4287 = vmatpush1.bf16.msra.mxu0 0
    %4288 = vmatprep.subr.bf16.mxu0 0
    %4289 = vmatpush1.bf16.msra.mxu0 0
    %4290 = vmatprep.subr.bf16.mxu0 0
    %4291 = vmatpush1.bf16.msra.mxu0 0
    %4292 = vmatprep.subr.bf16.mxu0 0
    %4293 = vmatpush1.bf16.msra.mxu0 0
    %4294 = vmatprep.subr.bf16.mxu0 0
    %4295 = vmatpush1.bf16.msra.mxu0 0
    %4296 = vmatprep.subr.bf16.mxu0 0
    %4297 = vmatpush1.bf16.msra.mxu0 0
    %4298 = vmatprep.subr.bf16.mxu0 0
    %4299 = vmatpush1.bf16.msra.mxu0 0
    %4300 = vmatprep.mubr.bf16.mxu0 0
    %4301 = vmatmul.mubr.bf16.gmra.mrb[0].mxu0 %v4263
    %v4302 = vpop.f32.mrb[0].mxu0
    %v4303 = vadd.f32 0.0, %v4302
    %v4304 = vpop.f32.mrb[0].mxu0
    %v4305 = vpop.f32.mrb[0].mxu0
    %v4306 = vpop.f32.mrb[0].mxu0
    %4307 = vdwg.mxu0
    %v4309 = vsel %vm1091, %v3985, 0
    %v4312 = vsel %vm1559, %v3521, 0
    %4314 = vmatprep.subr.bf16.mxu0 0
    %4315 = vmatpush1.bf16.msra.mxu0 %v4312
    %4316 = vmatprep.subr.bf16.mxu0 0
    %4317 = vmatpush1.bf16.msra.mxu0 0
    %4318 = vmatprep.subr.bf16.mxu0 0
    %4319 = vmatpush1.bf16.msra.mxu0 0
    %4320 = vmatprep.subr.bf16.mxu0 0
    %4321 = vmatpush1.bf16.msra.mxu0 0
    %4322 = vmatprep.subr.bf16.mxu0 0
    %4323 = vmatpush1.bf16.msra.mxu0 0
    %4324 = vmatprep.subr.bf16.mxu0 0
    %4325 = vmatpush1.bf16.msra.mxu0 0
    %4326 = vmatprep.subr.bf16.mxu0 0
    %4327 = vmatpush1.bf16.msra.mxu0 0
    %4328 = vmatprep.subr.bf16.mxu0 0
    %4329 = vmatpush1.bf16.msra.mxu0 0
    %4330 = vmatprep.subr.bf16.mxu0 0
    %4331 = vmatpush1.bf16.msra.mxu0 0
    %4332 = vmatprep.subr.bf16.mxu0 0
    %4333 = vmatpush1.bf16.msra.mxu0 0
    %4334 = vmatprep.subr.bf16.mxu0 0
    %4335 = vmatpush1.bf16.msra.mxu0 0
    %4336 = vmatprep.subr.bf16.mxu0 0
    %4337 = vmatpush1.bf16.msra.mxu0 0
    %4338 = vmatprep.subr.bf16.mxu0 0
    %4339 = vmatpush1.bf16.msra.mxu0 0
    %4340 = vmatprep.subr.bf16.mxu0 0
    %4341 = vmatpush1.bf16.msra.mxu0 0
    %4342 = vmatprep.subr.bf16.mxu0 0
    %4343 = vmatpush1.bf16.msra.mxu0 0
    %4344 = vmatprep.subr.bf16.mxu0 0
    %4345 = vmatpush1.bf16.msra.mxu0 0
    %4346 = vmatprep.mubr.bf16.mxu0 0
    %4347 = vmatmul.mubr.bf16.gmra.mrb[0].mxu0 %v4309
    %v4348 = vpop.f32.mrb[0].mxu0
    %v4349 = vadd.f32 0.0, %v4348
    %v4350 = vpop.f32.mrb[0].mxu0
    %v4351 = vpop.f32.mrb[0].mxu0
    %v4352 = vpop.f32.mrb[0].mxu0
    %4353 = vdwg.mxu0
    %v4354 = vcombine.low %v4027, %v4119
    %v4355 = vcombine.high %v4027, %v4119
    %v4357 = vunpack.c.l.s4 1983009808
    %v4358 = vunpack.c.0.s8 %v4357
    %v4359 = vlaneseq
    %v4360 = vshrl.u32 %v4359, 7
    %v4361 = vsub.s32 %v4358, %v4360
    %v4362 = vrot.slane %v4354, %v4361
    %v4364 = vunpack.c.l.s4 1983009808
    %v4365 = vunpack.c.0.s8 %v4364
    %v4366 = vlaneseq
    %v4367 = vshrl.u32 %v4366, 7
    %v4368 = vsub.s32 %v4365, %v4367
    %v4369 = vrot.slane %v4355, %v4368
    %v4370 = vcombine.low %v4073, %v4165
    %v4371 = vcombine.high %v4073, %v4165
    %v4373 = vunpack.c.l.s4 1983009808
    %v4374 = vunpack.c.0.s8 %v4373
    %v4375 = vlaneseq
    %v4376 = vshrl.u32 %v4375, 7
    %v4377 = vsub.s32 %v4374, %v4376
    %v4378 = vrot.slane %v4370, %v4377
    %v4380 = vunpack.c.l.s4 1983009808
    %v4381 = vunpack.c.0.s8 %v4380
    %v4382 = vlaneseq
    %v4383 = vshrl.u32 %v4382, 7
    %v4384 = vsub.s32 %v4381, %v4383
    %v4385 = vrot.slane %v4371, %v4384
    %v4386 = vcombine.low %v4362, %v4378
    %v4387 = vcombine.high %v4362, %v4378
    %v4389 = vunpack.c.l.s4 1934713408
    %v4390 = vunpack.c.0.s8 %v4389
    %v4391 = vlaneseq
    %v4392 = vshrl.u32 %v4391, 7
    %v4393 = vsub.s32 %v4390, %v4392
    %v4394 = vrot.slane %v4386, %v4393
    %v4396 = vunpack.c.l.s4 1934713408
    %v4397 = vunpack.c.0.s8 %v4396
    %v4398 = vlaneseq
    %v4399 = vshrl.u32 %v4398, 7
    %v4400 = vsub.s32 %v4397, %v4399
    %v4401 = vrot.slane %v4387, %v4400
    %v4402 = vcombine.low %v4369, %v4385
    %v4403 = vcombine.high %v4369, %v4385
    %v4405 = vunpack.c.l.s4 1934713408
    %v4406 = vunpack.c.0.s8 %v4405
    %v4407 = vlaneseq
    %v4408 = vshrl.u32 %v4407, 7
    %v4409 = vsub.s32 %v4406, %v4408
    %v4410 = vrot.slane %v4402, %v4409
    %v4412 = vunpack.c.l.s4 1934713408
    %v4413 = vunpack.c.0.s8 %v4412
    %v4414 = vlaneseq
    %v4415 = vshrl.u32 %v4414, 7
    %v4416 = vsub.s32 %v4413, %v4415
    %v4417 = vrot.slane %v4403, %v4416
    %v4418 = vcombine.high %v4394, 0.0
    %v4419 = vcombine.high %v4401, 0.0
    %v4420 = vcombine.high %v4410, 0.0
    %v4421 = vcombine.high %v4417, 0.0
    %v4422 = vcombine.low %v4211, %v4303
    %v4423 = vcombine.high %v4211, %v4303
    %v4425 = vunpack.c.l.s4 1983009808
    %v4426 = vunpack.c.0.s8 %v4425
    %v4427 = vlaneseq
    %v4428 = vshrl.u32 %v4427, 7
    %v4429 = vsub.s32 %v4426, %v4428
    %v4430 = vrot.slane %v4422, %v4429
    %v4432 = vunpack.c.l.s4 1983009808
    %v4433 = vunpack.c.0.s8 %v4432
    %v4434 = vlaneseq
    %v4435 = vshrl.u32 %v4434, 7
    %v4436 = vsub.s32 %v4433, %v4435
    %v4437 = vrot.slane %v4423, %v4436
    %v4438 = vcombine.low %v4257, %v4349
    %v4439 = vcombine.high %v4257, %v4349
    %v4441 = vunpack.c.l.s4 1983009808
    %v4442 = vunpack.c.0.s8 %v4441
    %v4443 = vlaneseq
    %v4444 = vshrl.u32 %v4443, 7
    %v4445 = vsub.s32 %v4442, %v4444
    %v4446 = vrot.slane %v4438, %v4445
    %v4448 = vunpack.c.l.s4 1983009808
    %v4449 = vunpack.c.0.s8 %v4448
    %v4450 = vlaneseq
    %v4451 = vshrl.u32 %v4450, 7
    %v4452 = vsub.s32 %v4449, %v4451
    %v4453 = vrot.slane %v4439, %v4452
    %v4454 = vcombine.low %v4430, %v4446
    %v4455 = vcombine.high %v4430, %v4446
    %v4457 = vunpack.c.l.s4 1934713408
    %v4458 = vunpack.c.0.s8 %v4457
    %v4459 = vlaneseq
    %v4460 = vshrl.u32 %v4459, 7
    %v4461 = vsub.s32 %v4458, %v4460
    %v4462 = vrot.slane %v4454, %v4461
    %v4464 = vunpack.c.l.s4 1934713408
    %v4465 = vunpack.c.0.s8 %v4464
    %v4466 = vlaneseq
    %v4467 = vshrl.u32 %v4466, 7
    %v4468 = vsub.s32 %v4465, %v4467
    %v4469 = vrot.slane %v4455, %v4468
    %v4470 = vcombine.low %v4437, %v4453
    %v4471 = vcombine.high %v4437, %v4453
    %v4473 = vunpack.c.l.s4 1934713408
    %v4474 = vunpack.c.0.s8 %v4473
    %v4475 = vlaneseq
    %v4476 = vshrl.u32 %v4475, 7
    %v4477 = vsub.s32 %v4474, %v4476
    %v4478 = vrot.slane %v4470, %v4477
    %v4480 = vunpack.c.l.s4 1934713408
    %v4481 = vunpack.c.0.s8 %v4480
    %v4482 = vlaneseq
    %v4483 = vshrl.u32 %v4482, 7
    %v4484 = vsub.s32 %v4481, %v4483
    %v4485 = vrot.slane %v4471, %v4484
    %v4486 = vcombine.high %v4462, 0.0
    %v4487 = vcombine.high %v4469, 0.0
    %v4488 = vcombine.high %v4478, 0.0
    %v4489 = vcombine.high %v4485, 0.0
    %v4490 = vcombine.low %v4394, %v4401
    %v4492 = vunpack.c.l.s4 1983009808
    %v4493 = vunpack.c.0.s8 %v4492
    %v4494 = vlaneseq
    %v4495 = vshrl.u32 %v4494, 7
    %v4496 = vsub.s32 %v4493, %v4495
    %v4497 = vrot.slane %v4490, %v4496
    %v4498 = vcombine.low %v4418, %v4419
    %v4500 = vunpack.c.l.s4 1983009808
    %v4501 = vunpack.c.0.s8 %v4500
    %v4502 = vlaneseq
    %v4503 = vshrl.u32 %v4502, 7
    %v4504 = vsub.s32 %v4501, %v4503
    %v4505 = vrot.slane %v4498, %v4504
    %v4506 = vcombine.low %v4410, %v4417
    %v4508 = vunpack.c.l.s4 1983009808
    %v4509 = vunpack.c.0.s8 %v4508
    %v4510 = vlaneseq
    %v4511 = vshrl.u32 %v4510, 7
    %v4512 = vsub.s32 %v4509, %v4511
    %v4513 = vrot.slane %v4506, %v4512
    %v4514 = vcombine.low %v4420, %v4421
    %v4516 = vunpack.c.l.s4 1983009808
    %v4517 = vunpack.c.0.s8 %v4516
    %v4518 = vlaneseq
    %v4519 = vshrl.u32 %v4518, 7
    %v4520 = vsub.s32 %v4517, %v4519
    %v4521 = vrot.slane %v4514, %v4520
    %v4522 = vcombine.low %v4497, %v4505
    %v4523 = vcombine.high %v4497, %v4505
    %v4525 = vunpack.c.l.s4 1934713408
    %v4526 = vunpack.c.0.s8 %v4525
    %v4527 = vlaneseq
    %v4528 = vshrl.u32 %v4527, 7
    %v4529 = vsub.s32 %v4526, %v4528
    %v4530 = vrot.slane %v4522, %v4529
    %v4532 = vunpack.c.l.s4 1934713408
    %v4533 = vunpack.c.0.s8 %v4532
    %v4534 = vlaneseq
    %v4535 = vshrl.u32 %v4534, 7
    %v4536 = vsub.s32 %v4533, %v4535
    %v4537 = vrot.slane %v4523, %v4536
    %v4538 = vcombine.low %v4513, %v4521
    %v4539 = vcombine.high %v4513, %v4521
    %v4541 = vunpack.c.l.s4 1934713408
    %v4542 = vunpack.c.0.s8 %v4541
    %v4543 = vlaneseq
    %v4544 = vshrl.u32 %v4543, 7
    %v4545 = vsub.s32 %v4542, %v4544
    %v4546 = vrot.slane %v4538, %v4545
    %v4548 = vunpack.c.l.s4 1934713408
    %v4549 = vunpack.c.0.s8 %v4548
    %v4550 = vlaneseq
    %v4551 = vshrl.u32 %v4550, 7
    %v4552 = vsub.s32 %v4549, %v4551
    %v4553 = vrot.slane %v4539, %v4552
    %v4554 = vcombine.low %v4530, %v4546
    %v4555 = vcombine.high %v4530, %v4546
    %v4556 = vcombine.low %v4537, %v4553
    %v4557 = vcombine.high %v4537, %v4553
    %v4558 = vcombine.low %v4462, %v4469
    %v4560 = vunpack.c.l.s4 1983009808
    %v4561 = vunpack.c.0.s8 %v4560
    %v4562 = vlaneseq
    %v4563 = vshrl.u32 %v4562, 7
    %v4564 = vsub.s32 %v4561, %v4563
    %v4565 = vrot.slane %v4558, %v4564
    %v4566 = vcombine.low %v4486, %v4487
    %v4568 = vunpack.c.l.s4 1983009808
    %v4569 = vunpack.c.0.s8 %v4568
    %v4570 = vlaneseq
    %v4571 = vshrl.u32 %v4570, 7
    %v4572 = vsub.s32 %v4569, %v4571
    %v4573 = vrot.slane %v4566, %v4572
    %v4574 = vcombine.low %v4478, %v4485
    %v4576 = vunpack.c.l.s4 1983009808
    %v4577 = vunpack.c.0.s8 %v4576
    %v4578 = vlaneseq
    %v4579 = vshrl.u32 %v4578, 7
    %v4580 = vsub.s32 %v4577, %v4579
    %v4581 = vrot.slane %v4574, %v4580
    %v4582 = vcombine.low %v4488, %v4489
    %v4584 = vunpack.c.l.s4 1983009808
    %v4585 = vunpack.c.0.s8 %v4584
    %v4586 = vlaneseq
    %v4587 = vshrl.u32 %v4586, 7
    %v4588 = vsub.s32 %v4585, %v4587
    %v4589 = vrot.slane %v4582, %v4588
    %v4590 = vcombine.low %v4565, %v4573
    %v4591 = vcombine.high %v4565, %v4573
    %v4593 = vunpack.c.l.s4 1934713408
    %v4594 = vunpack.c.0.s8 %v4593
    %v4595 = vlaneseq
    %v4596 = vshrl.u32 %v4595, 7
    %v4597 = vsub.s32 %v4594, %v4596
    %v4598 = vrot.slane %v4590, %v4597
    %v4600 = vunpack.c.l.s4 1934713408
    %v4601 = vunpack.c.0.s8 %v4600
    %v4602 = vlaneseq
    %v4603 = vshrl.u32 %v4602, 7
    %v4604 = vsub.s32 %v4601, %v4603
    %v4605 = vrot.slane %v4591, %v4604
    %v4606 = vcombine.low %v4581, %v4589
    %v4607 = vcombine.high %v4581, %v4589
    %v4609 = vunpack.c.l.s4 1934713408
    %v4610 = vunpack.c.0.s8 %v4609
    %v4611 = vlaneseq
    %v4612 = vshrl.u32 %v4611, 7
    %v4613 = vsub.s32 %v4610, %v4612
    %v4614 = vrot.slane %v4606, %v4613
    %v4616 = vunpack.c.l.s4 1934713408
    %v4617 = vunpack.c.0.s8 %v4616
    %v4618 = vlaneseq
    %v4619 = vshrl.u32 %v4618, 7
    %v4620 = vsub.s32 %v4617, %v4619
    %v4621 = vrot.slane %v4607, %v4620
    %v4622 = vcombine.low %v4598, %v4614
    %v4623 = vcombine.high %v4598, %v4614
    %v4624 = vcombine.low %v4605, %v4621
    %v4625 = vcombine.high %v4605, %v4621
    %4628 = vrot.lane.b32.xlu0 %v4555, 8
    %v4629 = vpop.permute.xlu0 %4628
    %4630 = vrot.lane.b32.xlu0 %v4623, 8
    %v4631 = vpop.permute.xlu0 %4630
    %4636 = vrot.lane.b32.xlu0 %v4556, 16
    %v4637 = vpop.permute.xlu0 %4636
    %4638 = vrot.lane.b32.xlu0 %v4624, 16
    %v4639 = vpop.permute.xlu0 %4638
    %4644 = vrot.lane.b32.xlu0 %v4557, 24
    %v4645 = vpop.permute.xlu0 %4644
    %4646 = vrot.lane.b32.xlu0 %v4625, 24
    %v4647 = vpop.permute.xlu0 %4646
    %v4650 = vsel %vm1091, %v4554, %v4629
    %v4651 = vsel %vm1091, %v4622, %v4631
    %v4652 = vsel %vm2223, %v4650, %v4637
    %v4653 = vsel %vm2223, %v4651, %v4639
    %v4654 = vsel %vm2226, %v4652, %v4645
    %v4655 = vsel %vm2226, %v4653, %v4647
    %v4656 = vpack.c.bf16 %v4655, %v4654
    %s4657 = scalar_lea.vmem %s5, 16
    %v4658 = vld [vmem:[%s4657] sm:$0xf]
    %v4659 = vld [vmem:[%s4657 + $0x4] sm:$0xf]
    %v4660 = vld [vmem:[%s4657 + $0x8] sm:$0xf]
    %v4661 = vld [vmem:[%s4657 + $0xc] sm:$0xf]
    %v4662 = vlaneseq
    %v4663 = vshrl.u32 %v4662, 7
    %v4664 = vsub.s32 0, %v4663
    %v4665 = vrot.slane %v2543, %v4664
    %v4670 = vunpack.c.l.b16 %v4658
    %v4671 = vunpack.c.l.b16 %v4659
    %v4672 = vunpack.c.l.b16 %v4660
    %v4673 = vunpack.c.l.b16 %v4661
    %v4674 = vpack.c.b16 %v4671, %v4670
    %v4675 = vpack.c.b16 %v4673, %v4672
    %v4679 = vsel %vm40, %v4656, 0
    %4681 = vmatprep.subr.bf16.mxu0 0
    %4682 = vmatpush1.bf16.msra.mxu0 %v4674
    %4683 = vmatprep.subr.bf16.mxu0 0
    %4684 = vmatpush1.bf16.msra.mxu0 %v4675
    %4685 = vmatprep.subr.bf16.mxu0 0
    %4686 = vmatpush1.bf16.msra.mxu0 0
    %4687 = vmatprep.subr.bf16.mxu0 0
    %4688 = vmatpush1.bf16.msra.mxu0 0
    %4689 = vmatprep.subr.bf16.mxu0 0
    %4690 = vmatpush1.bf16.msra.mxu0 0
    %4691 = vmatprep.subr.bf16.mxu0 0
    %4692 = vmatpush1.bf16.msra.mxu0 0
    %4693 = vmatprep.subr.bf16.mxu0 0
    %4694 = vmatpush1.bf16.msra.mxu0 0
    %4695 = vmatprep.subr.bf16.mxu0 0
    %4696 = vmatpush1.bf16.msra.mxu0 0
    %4697 = vmatprep.subr.bf16.mxu0 0
    %4698 = vmatpush1.bf16.msra.mxu0 0
    %4699 = vmatprep.subr.bf16.mxu0 0
    %4700 = vmatpush1.bf16.msra.mxu0 0
    %4701 = vmatprep.subr.bf16.mxu0 0
    %4702 = vmatpush1.bf16.msra.mxu0 0
    %4703 = vmatprep.subr.bf16.mxu0 0
    %4704 = vmatpush1.bf16.msra.mxu0 0
    %4705 = vmatprep.subr.bf16.mxu0 0
    %4706 = vmatpush1.bf16.msra.mxu0 0
    %4707 = vmatprep.subr.bf16.mxu0 0
    %4708 = vmatpush1.bf16.msra.mxu0 0
    %4709 = vmatprep.subr.bf16.mxu0 0
    %4710 = vmatpush1.bf16.msra.mxu0 0
    %4711 = vmatprep.subr.bf16.mxu0 0
    %4712 = vmatpush1.bf16.msra.mxu0 0
    %4713 = vmatprep.mubr.bf16.mxu0 0
    %4714 = vmatmul.mubr.bf16.gmra.mrb[0].mxu0 %v4679
    %v4715 = vpop.f32.mrb[0].mxu0
    %v4716 = vadd.f32 %v4665, %v4715
    %v4717 = vpop.f32.mrb[0].mxu0
    %v4718 = vpop.f32.mrb[0].mxu0
    %v4719 = vadd.f32 %v4665, %v4718
    %v4720 = vpop.f32.mrb[0].mxu0
    %4721 = vdwg.mxu0
    %v4722 = vadd.f32 %v2540, %v4716
    %v4723 = vadd.f32 %v2541, %v4719
    %v4724 = vsel %vm40, %v4722, 0.0
    %4725 = vadd.xlane.f32.xlu0 %v4724
    %v4726 = vpop.xlane.xlu0 %4725
    %v4727 = vsel %vm40, %v4723, 0.0
    %4728 = vadd.xlane.f32.xlu0 %v4727
    %v4729 = vpop.xlane.xlu0 %4728
    %v4730 = vmul.f32 %v4726, %v47
    %v4731 = vmul.f32 %v4729, %v47
    %v4732 = vsub.f32 %v4722, %v4730
    %v4733 = vsub.f32 %v4723, %v4731
    %v4734 = vmul.f32 %v4732, %v4732
    %v4735 = vmul.f32 %v4733, %v4733
    %v4736 = vsel %vm40, %v4734, 0.0
    %4737 = vadd.xlane.f32.xlu0 %v4736
    %v4738 = vpop.xlane.xlu0 %4737
    %v4739 = vsel %vm40, %v4735, 0.0
    %4740 = vadd.xlane.f32.xlu0 %v4739
    %v4741 = vpop.xlane.xlu0 %4740
    %v4742 = vmul.f32 %v4738, %v47
    %v4743 = vmul.f32 %v4741, %v47
    %v4744 = vadd.f32 %v4742, 1e-12
    %v4745 = vadd.f32 %v4743, 1e-12
    %v4746 = vrsqrt.pop %v4744
    %v4747 = vrsqrt.pop %v4745
    %v4748 = vmul.f32 %v4732, %v4746
    %v4749 = vmul.f32 %v4733, %v4747
    %v4750 = vlaneseq
    %v4751 = vshrl.u32 %v4750, 7
    %v4752 = vsub.s32 1, %v4751
    %v4753 = vrot.slane %v2543, %v4752
    %v4754 = vmul.f32 %v4748, %v4753
    %v4755 = vmul.f32 %v4749, %v4753
    %v4756 = vlaneseq
    %v4757 = vshrl.u32 %v4756, 7
    %v4758 = vsub.s32 2, %v4757
    %v4759 = vrot.slane %v2543, %v4758
    %v4760 = vadd.f32 %v4754, %v4759
    %v4761 = vadd.f32 %v4755, %v4759
    %v4762 = vpack.c.bf16 %v4761, %v4760
    %s4763 = scalar_lea.vmem %s7, 16
    %v4764 = vld [vmem:[%s4763] sm:$0xf]
    %v4765 = vld [vmem:[%s4763 + $0x4] sm:$0xf]
    %v4766 = vld [vmem:[%s4763 + $0x8] sm:$0xf]
    %v4767 = vld [vmem:[%s4763 + $0xc] sm:$0xf]
    %s4768 = scalar_lea.vmem %s8, 1
    %v4769 = vld [vmem:[%s4768] sm:$0x1]
    %v4771 = vlaneseq
    %v4772 = vshrl.u32 %v4771, 7
    %v4773 = vsub.s32 0, %v4772
    %v4774 = vrot.slane %v4769, %v4773
    %v4780 = vunpack.c.l.b16 %v4764
    %v4781 = vunpack.c.l.b16 %v4765
    %v4782 = vunpack.c.l.b16 %v4766
    %v4783 = vunpack.c.l.b16 %v4767
    %v4784 = vpack.c.b16 %v4781, %v4780
    %v4785 = vpack.c.b16 %v4783, %v4782
    %v4789 = vsel %vm40, %v4762, 0
    %4791 = vmatprep.subr.bf16.mxu0 0
    %4792 = vmatpush1.bf16.msra.mxu0 %v4784
    %4793 = vmatprep.subr.bf16.mxu0 0
    %4794 = vmatpush1.bf16.msra.mxu0 %v4785
    %4795 = vmatprep.subr.bf16.mxu0 0
    %4796 = vmatpush1.bf16.msra.mxu0 0
    %4797 = vmatprep.subr.bf16.mxu0 0
    %4798 = vmatpush1.bf16.msra.mxu0 0
    %4799 = vmatprep.subr.bf16.mxu0 0
    %4800 = vmatpush1.bf16.msra.mxu0 0
    %4801 = vmatprep.subr.bf16.mxu0 0
    %4802 = vmatpush1.bf16.msra.mxu0 0
    %4803 = vmatprep.subr.bf16.mxu0 0
    %4804 = vmatpush1.bf16.msra.mxu0 0
    %4805 = vmatprep.subr.bf16.mxu0 0
    %4806 = vmatpush1.bf16.msra.mxu0 0
    %4807 = vmatprep.subr.bf16.mxu0 0
    %4808 = vmatpush1.bf16.msra.mxu0 0
    %4809 = vmatprep.subr.bf16.mxu0 0
    %4810 = vmatpush1.bf16.msra.mxu0 0
    %4811 = vmatprep.subr.bf16.mxu0 0
    %4812 = vmatpush1.bf16.msra.mxu0 0
    %4813 = vmatprep.subr.bf16.mxu0 0
    %4814 = vmatpush1.bf16.msra.mxu0 0
    %4815 = vmatprep.subr.bf16.mxu0 0
    %4816 = vmatpush1.bf16.msra.mxu0 0
    %4817 = vmatprep.subr.bf16.mxu0 0
    %4818 = vmatpush1.bf16.msra.mxu0 0
    %4819 = vmatprep.subr.bf16.mxu0 0
    %4820 = vmatpush1.bf16.msra.mxu0 0
    %4821 = vmatprep.subr.bf16.mxu0 0
    %4822 = vmatpush1.bf16.msra.mxu0 0
    %4823 = vmatprep.mubr.bf16.mxu0 0
    %4824 = vmatmul.mubr.bf16.gmra.mrb[0].mxu0 %v4789
    %v4825 = vpop.f32.mrb[0].mxu0
    %v4826 = vadd.f32 %v4774, %v4825
    %v4827 = vpop.f32.mrb[0].mxu0
    %v4828 = vpop.f32.mrb[0].mxu0
    %v4829 = vadd.f32 %v4774, %v4828
    %v4830 = vpop.f32.mrb[0].mxu0
    %4831 = vdwg.mxu0
    %v4832 = vmul.f32 %v4826, %v4826
    %v4833 = vmul.f32 %v4829, %v4829
    %v4834 = vmul.f32 %v4826, %v4832
    %v4835 = vmul.f32 %v4829, %v4833
    %v4836 = vmul.f32 %v4834, 0.044715
    %v4837 = vmul.f32 %v4835, 0.044715
    %v4838 = vadd.f32 %v4826, %v4836
    %v4839 = vadd.f32 %v4829, %v4837
    %v4840 = vmul.f32 %v4838, 0.7978846
    %v4841 = vmul.f32 %v4839, 0.7978846
    %v4842 = vtanh.pop %v4840
    %v4843 = vtanh.pop %v4841
    %v4844 = vadd.f32 %v4842, 1.0
    %v4845 = vadd.f32 %v4843, 1.0
    %v4846 = vmul.f32 %v4844, 0.5
    %v4847 = vmul.f32 %v4845, 0.5
    %v4848 = vmul.f32 %v4826, %v4846
    %v4849 = vmul.f32 %v4829, %v4847
    %v4850 = vpack.c.bf16 %v4849, %v4848
    %s4851 = scalar_lea.vmem %s9, 32
    %v4852 = vld [vmem:[%s4851] sm:$0xf]
    %v4853 = vld [vmem:[%s4851 + $0x4] sm:$0xf]
    %v4854 = vld [vmem:[%s4851 + $0x8] sm:$0xf]
    %v4855 = vld [vmem:[%s4851 + $0xc] sm:$0xf]
    %v4856 = vld [vmem:[%s4851 + $0x10] sm:$0xf]
    %v4857 = vld [vmem:[%s4851 + $0x14] sm:$0xf]
    %v4858 = vld [vmem:[%s4851 + $0x18] sm:$0xf]
    %v4859 = vld [vmem:[%s4851 + $0x1c] sm:$0xf]
    %v4860 = vlaneseq
    %v4861 = vshrl.u32 %v4860, 7
    %v4862 = vsub.s32 3, %v4861
    %v4863 = vrot.slane %v2543, %v4862
    %v4872 = vunpack.c.l.b16 %v4852
    %v4873 = vunpack.c.l.b16 %v4853
    %v4874 = vunpack.c.l.b16 %v4854
    %v4875 = vunpack.c.l.b16 %v4855
    %v4876 = vunpack.c.l.b16 %v4856
    %v4877 = vunpack.c.l.b16 %v4857
    %v4878 = vunpack.c.l.b16 %v4858
    %v4879 = vunpack.c.l.b16 %v4859
    %v4880 = vpack.c.b16 %v4873, %v4872
    %v4881 = vpack.c.b16 %v4875, %v4874
    %v4882 = vpack.c.b16 %v4877, %v4876
    %v4883 = vpack.c.b16 %v4879, %v4878
    %v4889 = vsel %vm2457, %v4850, 0
    %4891 = vmatprep.subr.bf16.mxu0 0
    %4892 = vmatpush1.bf16.msra.mxu0 %v4880
    %4893 = vmatprep.subr.bf16.mxu0 0
    %4894 = vmatpush1.bf16.msra.mxu0 %v4881
    %4895 = vmatprep.subr.bf16.mxu0 0
    %4896 = vmatpush1.bf16.msra.mxu0 %v4882
    %4897 = vmatprep.subr.bf16.mxu0 0
    %4898 = vmatpush1.bf16.msra.mxu0 %v4883
    %4899 = vmatprep.subr.bf16.mxu0 0
    %4900 = vmatpush1.bf16.msra.mxu0 0
    %4901 = vmatprep.subr.bf16.mxu0 0
    %4902 = vmatpush1.bf16.msra.mxu0 0
    %4903 = vmatprep.subr.bf16.mxu0 0
    %4904 = vmatpush1.bf16.msra.mxu0 0
    %4905 = vmatprep.subr.bf16.mxu0 0
    %4906 = vmatpush1.bf16.msra.mxu0 0
    %4907 = vmatprep.subr.bf16.mxu0 0
    %4908 = vmatpush1.bf16.msra.mxu0 0
    %4909 = vmatprep.subr.bf16.mxu0 0
    %4910 = vmatpush1.bf16.msra.mxu0 0
    %4911 = vmatprep.subr.bf16.mxu0 0
    %4912 = vmatpush1.bf16.msra.mxu0 0
    %4913 = vmatprep.subr.bf16.mxu0 0
    %4914 = vmatpush1.bf16.msra.mxu0 0
    %4915 = vmatprep.subr.bf16.mxu0 0
    %4916 = vmatpush1.bf16.msra.mxu0 0
    %4917 = vmatprep.subr.bf16.mxu0 0
    %4918 = vmatpush1.bf16.msra.mxu0 0
    %4919 = vmatprep.subr.bf16.mxu0 0
    %4920 = vmatpush1.bf16.msra.mxu0 0
    %4921 = vmatprep.subr.bf16.mxu0 0
    %4922 = vmatpush1.bf16.msra.mxu0 0
    %4923 = vmatprep.mubr.bf16.mxu0 0
    %4924 = vmatmul.mubr.bf16.gmra.mrb[0].mxu0 %v4889
    %v4925 = vpop.f32.mrb[0].mxu0
    %v4926 = vadd.f32 %v4863, %v4925
    %v4927 = vpop.f32.mrb[0].mxu0
    %v4928 = vpop.f32.mrb[0].mxu0
    %v4929 = vadd.f32 %v4863, %v4928
    %v4930 = vpop.f32.mrb[0].mxu0
    %4931 = vdwg.mxu0
    %v4932 = vadd.f32 %v4760, %v4926
    %v4933 = vadd.f32 %v4761, %v4929
    %v4934 = vsel %vm40, %v4932, 0.0
    %4935 = vadd.xlane.f32.xlu0 %v4934
    %v4936 = vpop.xlane.xlu0 %4935
    %v4937 = vsel %vm40, %v4933, 0.0
    %4938 = vadd.xlane.f32.xlu0 %v4937
    %v4939 = vpop.xlane.xlu0 %4938
    %v4940 = vmul.f32 %v4936, %v47
    %v4941 = vmul.f32 %v4939, %v47
    %v4942 = vsub.f32 %v4932, %v4940
    %v4943 = vsub.f32 %v4933, %v4941
    %v4944 = vmul.f32 %v4942, %v4942
    %v4945 = vmul.f32 %v4943, %v4943
    %v4946 = vsel %vm40, %v4944, 0.0
    %4947 = vadd.xlane.f32.xlu0 %v4946
    %v4948 = vpop.xlane.xlu0 %4947
    %v4949 = vsel %vm40, %v4945, 0.0
    %4950 = vadd.xlane.f32.xlu0 %v4949
    %v4951 = vpop.xlane.xlu0 %4950
    %v4952 = vmul.f32 %v4948, %v47
    %v4953 = vmul.f32 %v4951, %v47
    %v4954 = vadd.f32 %v4952, 1e-12
    %v4955 = vadd.f32 %v4953, 1e-12
    %v4956 = vrsqrt.pop %v4954
    %v4957 = vrsqrt.pop %v4955
    %v4958 = vmul.f32 %v4942, %v4956
    %v4959 = vmul.f32 %v4943, %v4957
    %v4960 = vlaneseq
    %v4961 = vshrl.u32 %v4960, 7
    %v4962 = vsub.s32 4, %v4961
    %v4963 = vrot.slane %v2543, %v4962
    %v4964 = vmul.f32 %v4958, %v4963
    %v4965 = vmul.f32 %v4959, %v4963
    %v4966 = vlaneseq
    %v4967 = vshrl.u32 %v4966, 7
    %v4968 = vsub.s32 5, %v4967
    %v4969 = vrot.slane %v2543, %v4968
    %v4970 = vadd.f32 %v4964, %v4969
    %v4971 = vadd.f32 %v4965, %v4969
    %v4980 = vrot.slane %v3971, 7
    %vm4981 = vcmask 1041409
    %v4982 = vsel %vm4981, %v4980, %v3970
    %v4983 = vrot.slane %v3972, 6
    %vm4984 = vcmask 1042434
    %v4985 = vsel %vm4984, %v4983, %v4982
    %v4986 = vrot.slane %v3973, 5
    %vm4987 = vcmask 1043459
    %v4988 = vsel %vm4987, %v4986, %v4985
    %v4989 = vrot.slane %v3975, 7
    %v4990 = vsel %vm4981, %v4989, %v3974
    %v4991 = vrot.slane %v3976, 6
    %v4992 = vsel %vm4984, %v4991, %v4990
    %v4993 = vrot.slane %v3977, 5
    %v4994 = vsel %vm4987, %v4993, %v4992
    %vm4997 = vcmask 60416
    %v4998 = vsel %vm4997, %v4988, 0.0
    %v4999 = vrot.slane %v4998, 4
    %v5000 = vadd.f32 %v4998, %v4999
    %v5001 = vrot.slane %v5000, 2
    %v5002 = vadd.f32 %v5000, %v5001
    %v5003 = vrot.slane %v5002, 1
    %v5004 = vadd.f32 %v5002, %v5003
    %v5005 = vsel %vm4997, %v4994, 0.0
    %v5006 = vrot.slane %v5005, 4
    %v5007 = vadd.f32 %v5005, %v5006
    %v5008 = vrot.slane %v5007, 2
    %v5009 = vadd.f32 %v5007, %v5008
    %v5010 = vrot.slane %v5009, 1
    %v5011 = vadd.f32 %v5009, %v5010
    %v5012 = vrcp.pop 4.0
    %v5013 = vmul.f32 %v5004, %v5012
    %v5014 = vmul.f32 %v5011, %v5012
    %v5017 = vrot.slane %v4971, 7
    %v5018 = vsel %vm4981, %v5017, %v4970
    %vm5020 = vcmask 254976
    %5021 = vst.msk [vmem:[#allocation2] sm:$0x3] %vm5020, %v5018
    %v5024 = vrot.slane %v5014, 7
    %v5025 = vsel %vm4981, %v5024, %v5013
    %5026 = vrot.lane.b32.xlu0 %v5025, 32
    %v5027 = vpop.permute.xlu0 %5026
    %vm5029 = vcmask 320768
    %5030 = vst.msk [vmem:[#allocation2] sm:$0x3] %vm5029, %v5027
    // Predicated region
    $region42: #{bert_encoder_forward.1} parent=1 // pred_check
      _
    $region43: #{bert_encoder_forward.1} parent=1 // pred_check_branch
      %5032 = sbr.rel (0) target = $region45
    $region44: #{bert_encoder_forward.1} parent=1 // pred_region
      %s5034 = ssub.s32 32, 32
      %5035 = vsyncadd [#allocation3], %s5034
      %s5037 = sshll.u32 [#allocation2], 4
      %s5038 = int_to_ptr.vmem [resolvable:$true] %s5037
      %5040 = dma.vmem_to_hbm [thread:$0]  %s5038, 32, %s10, [#allocation3]
    $region45: #{bert_encoder_forward.1} parent=1 // pred_fallthru
      _
    // Predicated region
    $region46: #{bert_encoder_forward.1} parent=1 // pred_check
      _
    $region47: #{bert_encoder_forward.1} parent=1 // pred_check_branch
      %5042 = sbr.rel (0) target = $region49
    $region48: #{bert_encoder_forward.1} parent=1 // pred_region
      %5043 = dma.done [#allocation3], 32
    $region49: #{bert_encoder_forward.1} parent=1 // pred_fallthru
      _
    %5044 = vsyncpa [#allocation3], 1

</llo_original>
